<compile_context>
chip_gen: v5e
topology: v5e:2x2
jax: 0.10.0
libtpu: 0.0.40
codegen_flags: <defaults>
</compile_context>

<pallas_src>
import functools
import math

import jax
import jax.numpy as jnp
from jax.experimental import pallas as pl
from jax.experimental.pallas import tpu as pltpu

_BN_EPS = 1e-5


# ---------------------------------------------------------------------------
# Fused STNKd kernel
# ---------------------------------------------------------------------------
def _stn_kernel(TN, kk,
                x_ref,
                w1_ref, b1_ref, w2_ref, b2_ref, w3_ref, b3_ref,
                f1w_ref, f1b_ref, f2w_ref, f2b_ref, f3w_ref, f3b_ref,
                o_ref, m_acc):
    n = pl.program_id(1)
    n_last = pl.num_programs(1) - 1

    @pl.when(n == 0)
    def _init():
        m_acc[...] = jnp.full_like(m_acc, -jnp.inf)

    def lin(h, w_ref, b_ref, relu=True):
        # bf16 MXU matmul, f32 accumulation; bias/BN already folded into
        # (w_ref, b_ref) at trace time.
        y = jnp.dot(h.astype(jnp.bfloat16), w_ref[...],
                    preferred_element_type=jnp.float32) + b_ref[...]
        return jnp.maximum(y, 0.0) if relu else y

    # Per-point MLP (Conv1d(k=1) + folded BN + ReLU); all intermediates stay
    # in VMEM/vregs, nothing goes back to HBM.
    h = x_ref[0]                          # [TN, k]   f32
    h = lin(h, w1_ref, b1_ref)            # [TN, 64]
    h = lin(h, w2_ref, b2_ref)            # [TN, 128]
    h = lin(h, w3_ref, b3_ref)            # [TN, 1024]

    # Running max over points: keep per-sublane partial maxima (pure VPU
    # elementwise maxes), defer the cross-sublane (XLU) reduce to the end.
    C = h.shape[-1]
    if TN % 8 == 0:
        part = jnp.max(h.reshape(TN // 8, 8, C), axis=0)          # [8, C]
        m_acc[...] = jnp.maximum(m_acc[...], part)
    else:  # odd/small-N fallback: reduce directly into sublane 0
        part = jnp.max(h, axis=0, keepdims=True)                  # [1, C]
        m_acc[0:1, :] = jnp.maximum(m_acc[0:1, :], part)

    @pl.when(n == n_last)
    def _finalize():
        feat = jnp.max(m_acc[...], axis=0, keepdims=True)         # [1, 1024]
        g = lin(feat, f1w_ref, f1b_ref)                           # [1, 512]
        g = lin(g, f2w_ref, f2b_ref)                              # [1, 256]
        g = lin(g, f3w_ref, f3b_ref, relu=False)                  # [1, k*k] (+identity in bias)
        o_ref[...] = g.reshape(1, 1, kk)


def _pick_point_tile(n):
    # Largest tile (fewest per-step overheads) that divides N and keeps the
    # [TN, 1024] f32 activation comfortably inside VMEM.
    for tn in (1024, 512, 256, 128, 64, 32, 16, 8):
        if n % tn == 0:
            return tn
    return n  # fallback: single full block (handles odd / tiny N)


def stnkd_forward(x_bkn, kparams):
    """STNKd.forward: x [B, k, N] (torch layout) -> [B, k, k]."""
    k = kparams["k"]
    kk = k * k
    B, k_in, N = x_bkn.shape
    assert k_in == k, (k_in, k)

    # Channels-last view; kernel-size-1 conv == per-point linear.
    x = jnp.transpose(x_bkn, (0, 2, 1)).astype(jnp.float32)       # [B, N, k]

    TN = _pick_point_tile(N)
    n_tiles = N // TN

    (w1, b1), (w2, b2), (w3, b3) = kparams["conv"]
    (f1w, f1b), (f2w, f2b), (f3w, f3b) = kparams["fc"]
    flat_params = [w1, b1, w2, b2, w3, b3, f1w, f1b, f2w, f2b, f3w, f3b]

    in_specs = [pl.BlockSpec((1, TN, k), lambda b, n: (b, n, 0))]
    for p in flat_params:
        in_specs.append(pl.BlockSpec(p.shape, lambda b, n: (0, 0)))

    # Advisory cost estimate (helps XLA scheduling around the custom call).
    conv_macs = N * (k * 64 + 64 * 128 + 128 * 1024)
    fc_macs = 1024 * 512 + 512 * 256 + 256 * kk
    flops = int(2 * B * (conv_macs + fc_macs))
    bytes_accessed = int(x.size * 4 + sum(int(p.size) * p.dtype.itemsize
                                          for p in flat_params) + B * kk * 4)
    cost = pl.CostEstimate(flops=flops, transcendentals=0,
                           bytes_accessed=bytes_accessed)

    kernel = functools.partial(_stn_kernel, TN, kk)

    out = pl.pallas_call(
        kernel,
        out_shape=jax.ShapeDtypeStruct((B, 1, kk), jnp.float32),
        grid=(B, n_tiles),
        in_specs=in_specs,
        out_specs=pl.BlockSpec((1, 1, kk), lambda b, n: (b, 0, 0)),
        scratch_shapes=[pltpu.VMEM((8, w3.shape[1]), jnp.float32)],
        compiler_params=pltpu.CompilerParams(
            dimension_semantics=("parallel", "arbitrary"),
            vmem_limit_bytes=32 * 1024 * 1024,
        ),
        cost_estimate=cost,
    )(x, *flat_params)

    return out[:, 0, :].reshape(B, k, k)


# ---------------------------------------------------------------------------
# Parameter construction (PyTorch default-style init) and folding
# ---------------------------------------------------------------------------
def _raw_layer(key, cin, cout, bn=True):
    kw, kb = jax.random.split(key)
    bound = 1.0 / math.sqrt(cin)
    layer = dict(
        W=jax.random.uniform(kw, (cin, cout), jnp.float32, -bound, bound),
        b=jax.random.uniform(kb, (cout,), jnp.float32, -bound, bound),
        bn=bn,
    )
    if bn:
        layer.update(
            gamma=jnp.ones((cout,), jnp.float32),
            beta=jnp.zeros((cout,), jnp.float32),
            rmean=jnp.zeros((cout,), jnp.float32),
            rvar=jnp.ones((cout,), jnp.float32),
        )
    return layer


def init_stnkd_raw(key, k):
    keys = jax.random.split(key, 6)
    conv = [
        _raw_layer(keys[0], k, 64),
        _raw_layer(keys[1], 64, 128),
        _raw_layer(keys[2], 128, 1024),
    ]
    fc = [
        _raw_layer(keys[3], 1024, 512),
        _raw_layer(keys[4], 512, 256),
        _raw_layer(keys[5], 256, k * k, bn=False),
    ]
    return dict(k=k, conv=conv, fc=fc)


def prepare_kernel_params(raw):
    """Fold BN (eval-mode) + bias into W/b, fold the identity into the last fc
    bias, cast matmul weights to bf16 (f32 accumulation inside the kernel)."""
    k = raw["k"]

    def fold(layer):
        W, b = layer["W"], layer["b"]
        if layer["bn"]:
            scale = layer["gamma"] / jnp.sqrt(layer["rvar"] + _BN_EPS)
            shift = layer["beta"] - layer["rmean"] * scale
            W = W * scale[None, :]
            b = b * scale + shift
        return W.astype(jnp.bfloat16), b.reshape(1, -1).astype(jnp.float32)

    conv = [fold(l) for l in raw["conv"]]
    fc = [fold(l) for l in raw["fc"]]
    Wl, bl = fc[-1]
    fc[-1] = (Wl, bl + jnp.eye(k, dtype=jnp.float32).reshape(1, k * k))
    return dict(k=k, conv=conv, fc=fc)


# ---------------------------------------------------------------------------
# Pure-JAX reference (matches the PyTorch module, eval mode)
# ---------------------------------------------------------------------------
def stnkd_reference(x_bkn, raw):
    k = raw["k"]
    B = x_bkn.shape[0]
    h = jnp.transpose(x_bkn, (0, 2, 1)).astype(jnp.float32)       # [B, N, k]

    def conv_bn_relu(h, layer):
        h = h @ layer["W"] + layer["b"]
        scale = layer["gamma"] / jnp.sqrt(layer["rvar"] + _BN_EPS)
        shift = layer["beta"] - layer["rmean"] * scale
        return jnp.maximum(h * scale + shift, 0.0)

    for l in raw["conv"]:
        h = conv_bn_relu(h, l)
    h = jnp.max(h, axis=1)                                        # [B, 1024]
    for l in raw["fc"][:2]:
        h = conv_bn_relu(h, l)
    last = raw["fc"][2]
    h = h @ last["W"] + last["b"]
    h = h + jnp.eye(k, dtype=jnp.float32).reshape(1, k * k)
    return h.reshape(B, k, k)


# ---------------------------------------------------------------------------
if __name__ == "__main__":
    key = jax.random.PRNGKey(0)
    k_param, k_data = jax.random.split(key)

    B, k, N = 2, 3, 16
    raw = init_stnkd_raw(k_param, k)
    kparams = prepare_kernel_params(raw)

    x = jax.random.normal(k_data, (B, k, N), dtype=jnp.float32)   # [B, k, N], torch layout

    out = stnkd_forward(x, kparams)
    out = jax.block_until_ready(out)

    assert out.shape == (B, k, k), out.shape
    assert out.dtype == jnp.float32
    assert bool(jnp.all(jnp.isfinite(out)))

    ref = stnkd_reference(x, raw)
    max_err = float(jnp.max(jnp.abs(out - ref)))
    assert max_err < 5e-2, f"max abs err vs f32 reference: {max_err}"

    print("KERNEL_OK")
</pallas_src>

<mosaic_0001>
module attributes {stable_mosaic.version = 11 : i64} {
  func.func @_stn_kernel(%arg0: i32, %arg1: i32, %arg2: memref<1x16x3xf32, #tpu.memory_space<vmem>>, %arg3: memref<3x64xbf16, #tpu.memory_space<vmem>>, %arg4: memref<1x64xf32, #tpu.memory_space<vmem>>, %arg5: memref<64x128xbf16, #tpu.memory_space<vmem>>, %arg6: memref<1x128xf32, #tpu.memory_space<vmem>>, %arg7: memref<128x1024xbf16, #tpu.memory_space<vmem>>, %arg8: memref<1x1024xf32, #tpu.memory_space<vmem>>, %arg9: memref<1024x512xbf16, #tpu.memory_space<vmem>>, %arg10: memref<1x512xf32, #tpu.memory_space<vmem>>, %arg11: memref<512x256xbf16, #tpu.memory_space<vmem>>, %arg12: memref<1x256xf32, #tpu.memory_space<vmem>>, %arg13: memref<256x9xbf16, #tpu.memory_space<vmem>>, %arg14: memref<1x9xf32, #tpu.memory_space<vmem>>, %arg15: memref<1x1x9xf32, #tpu.memory_space<vmem>>, %arg16: memref<8x1024xf32, #tpu.memory_space<vmem>>) attributes {dimension_semantics = [#tpu.dimension_semantics<parallel>, #tpu.dimension_semantics<arbitrary>], iteration_bounds = array<i64: 2, 1>, scalar_prefetch = 0 : i64, scratch_operands = 1 : i64, tpu.core_type = #tpu.core_type<tc>, window_params = [{transform_indices = @transform_0, window_bounds = array<i64: 1, 16, 3>}, {pipeline_mode = #tpu.pipeline_mode<synchronous>, transform_indices = @transform_1, window_bounds = array<i64: 3, 64>}, {pipeline_mode = #tpu.pipeline_mode<synchronous>, transform_indices = @transform_2, window_bounds = array<i64: 1, 64>}, {pipeline_mode = #tpu.pipeline_mode<synchronous>, transform_indices = @transform_3, window_bounds = array<i64: 64, 128>}, {pipeline_mode = #tpu.pipeline_mode<synchronous>, transform_indices = @transform_4, window_bounds = array<i64: 1, 128>}, {pipeline_mode = #tpu.pipeline_mode<synchronous>, transform_indices = @transform_5, window_bounds = array<i64: 128, 1024>}, {pipeline_mode = #tpu.pipeline_mode<synchronous>, transform_indices = @transform_6, window_bounds = array<i64: 1, 1024>}, {pipeline_mode = #tpu.pipeline_mode<synchronous>, transform_indices = @transform_7, window_bounds = array<i64: 1024, 512>}, {pipeline_mode = #tpu.pipeline_mode<synchronous>, transform_indices = @transform_8, window_bounds = array<i64: 1, 512>}, {pipeline_mode = #tpu.pipeline_mode<synchronous>, transform_indices = @transform_9, window_bounds = array<i64: 512, 256>}, {pipeline_mode = #tpu.pipeline_mode<synchronous>, transform_indices = @transform_10, window_bounds = array<i64: 1, 256>}, {pipeline_mode = #tpu.pipeline_mode<synchronous>, transform_indices = @transform_11, window_bounds = array<i64: 256, 9>}, {pipeline_mode = #tpu.pipeline_mode<synchronous>, transform_indices = @transform_12, window_bounds = array<i64: 1, 9>}, {transform_indices = @transform_13, window_bounds = array<i64: 1, 1, 9>}]} {
    %c0_i32 = arith.constant 0 : i32
    %0 = arith.cmpi eq, %arg1, %c0_i32 : i32
    %1 = arith.extui %0 : i1 to i32
    %c0_i32_0 = arith.constant 0 : i32
    %2 = arith.cmpi ne, %1, %c0_i32_0 : i32
    scf.if %2 {
      %cst_27 = arith.constant 0xFF800000 : f32
      %37 = vector.broadcast %cst_27 : f32 to vector<8x1024xf32>
      %c0_28 = arith.constant 0 : index
      %c0_29 = arith.constant 0 : index
      %38 = vector.load %arg16[%c0_28, %c0_29] : memref<8x1024xf32, #tpu.memory_space<vmem>>, vector<8x1024xf32>
      tpu.vector_store %arg16[%c0_28, %c0_29], %37 {strides = array<i32>} : memref<8x1024xf32, #tpu.memory_space<vmem>>, vector<8x1024xf32>,
    } else {
    }
    %c0 = arith.constant 0 : index
    %c0_1 = arith.constant 0 : index
    %c0_2 = arith.constant 0 : index
    %3 = vector.load %arg2[%c0, %c0_1, %c0_2] : memref<1x16x3xf32, #tpu.memory_space<vmem>>, vector<1x16x3xf32>
    %4 = vector.shape_cast %3 : vector<1x16x3xf32> to vector<16x3xf32>
    %5 = arith.truncf %4 : vector<16x3xf32> to vector<16x3xbf16>
    %c0_3 = arith.constant 0 : index
    %c0_4 = arith.constant 0 : index
    %6 = vector.load %arg3[%c0_3, %c0_4] : memref<3x64xbf16, #tpu.memory_space<vmem>>, vector<3x64xbf16>
    %cst = arith.constant dense<0.000000e+00> : vector<16x64xf32>
    %7 = tpu.matmul %5, %6, %cst {dimension_numbers = #tpu.dot_dimension_numbers<[1], [0], [0], [1], [0, 0, 1, 1], [], []>} : vector<16x3xbf16>, vector<3x64xbf16>, vector<16x64xf32> -> vector<16x64xf32>
    %c0_5 = arith.constant 0 : index
    %c0_6 = arith.constant 0 : index
    %8 = vector.load %arg4[%c0_5, %c0_6] : memref<1x64xf32, #tpu.memory_space<vmem>>, vector<1x64xf32>
    %9 = vector.broadcast %8 : vector<1x64xf32> to vector<16x64xf32>
    %10 = arith.addf %7, %9 : vector<16x64xf32>
    %cst_7 = arith.constant 0.000000e+00 : f32
    %11 = vector.broadcast %cst_7 : f32 to vector<16x64xf32>
    %12 = arith.maximumf %10, %11 : vector<16x64xf32>
    %13 = arith.truncf %12 : vector<16x64xf32> to vector<16x64xbf16>
    %c0_8 = arith.constant 0 : index
    %c0_9 = arith.constant 0 : index
    %14 = vector.load %arg5[%c0_8, %c0_9] : memref<64x128xbf16, #tpu.memory_space<vmem>>, vector<64x128xbf16>
    %cst_10 = arith.constant dense<0.000000e+00> : vector<16x128xf32>
    %15 = tpu.matmul %13, %14, %cst_10 {dimension_numbers = #tpu.dot_dimension_numbers<[1], [0], [0], [1], [0, 0, 1, 1], [], []>} : vector<16x64xbf16>, vector<64x128xbf16>, vector<16x128xf32> -> vector<16x128xf32>
    %c0_11 = arith.constant 0 : index
    %c0_12 = arith.constant 0 : index
    %16 = vector.load %arg6[%c0_11, %c0_12] : memref<1x128xf32, #tpu.memory_space<vmem>>, vector<1x128xf32>
    %17 = vector.broadcast %16 : vector<1x128xf32> to vector<16x128xf32>
    %18 = arith.addf %15, %17 : vector<16x128xf32>
    %cst_13 = arith.constant 0.000000e+00 : f32
    %19 = vector.broadcast %cst_13 : f32 to vector<16x128xf32>
    %20 = arith.maximumf %18, %19 : vector<16x128xf32>
    %21 = arith.truncf %20 : vector<16x128xf32> to vector<16x128xbf16>
    %c0_14 = arith.constant 0 : index
    %c0_15 = arith.constant 0 : index
    %22 = vector.load %arg7[%c0_14, %c0_15] : memref<128x1024xbf16, #tpu.memory_space<vmem>>, vector<128x1024xbf16>
    %cst_16 = arith.constant dense<0.000000e+00> : vector<16x1024xf32>
    %23 = tpu.matmul %21, %22, %cst_16 {dimension_numbers = #tpu.dot_dimension_numbers<[1], [0], [0], [1], [0, 0, 1, 1], [], []>} : vector<16x128xbf16>, vector<128x1024xbf16>, vector<16x1024xf32> -> vector<16x1024xf32>
    %c0_17 = arith.constant 0 : index
    %c0_18 = arith.constant 0 : index
    %24 = vector.load %arg8[%c0_17, %c0_18] : memref<1x1024xf32, #tpu.memory_space<vmem>>, vector<1x1024xf32>
    %25 = vector.broadcast %24 : vector<1x1024xf32> to vector<16x1024xf32>
    %26 = arith.addf %23, %25 : vector<16x1024xf32>
    %cst_19 = arith.constant 0.000000e+00 : f32
    %27 = vector.broadcast %cst_19 : f32 to vector<16x1024xf32>
    %28 = arith.maximumf %26, %27 : vector<16x1024xf32>
    %29 = vector.shape_cast %28 : vector<16x1024xf32> to vector<2x8x1024xf32>
    %cst_20 = arith.constant dense<0xFF800000> : vector<8x1024xf32>
    %30 = vector.multi_reduction <maximumf>, %29, %cst_20 [0] : vector<2x8x1024xf32> to vector<8x1024xf32>
    %c0_21 = arith.constant 0 : index
    %c0_22 = arith.constant 0 : index
    %31 = vector.load %arg16[%c0_21, %c0_22] : memref<8x1024xf32, #tpu.memory_space<vmem>>, vector<8x1024xf32>
    %32 = arith.maximumf %31, %30 : vector<8x1024xf32>
    %c0_23 = arith.constant 0 : index
    %c0_24 = arith.constant 0 : index
    %33 = vector.load %arg16[%c0_23, %c0_24] : memref<8x1024xf32, #tpu.memory_space<vmem>>, vector<8x1024xf32>
    tpu.vector_store %arg16[%c0_23, %c0_24], %32 {strides = array<i32>} : memref<8x1024xf32, #tpu.memory_space<vmem>>, vector<8x1024xf32>,
    %c0_i32_25 = arith.constant 0 : i32
    %34 = arith.cmpi eq, %arg1, %c0_i32_25 : i32
    %35 = arith.extui %34 : i1 to i32
    %c0_i32_26 = arith.constant 0 : i32
    %36 = arith.cmpi ne, %35, %c0_i32_26 : i32
    scf.if %36 {
      %c0_27 = arith.constant 0 : index
      %c0_28 = arith.constant 0 : index
      %37 = vector.load %arg16[%c0_27, %c0_28] : memref<8x1024xf32, #tpu.memory_space<vmem>>, vector<8x1024xf32>
      %cst_29 = arith.constant dense<0xFF800000> : vector<1024xf32>
      %38 = vector.multi_reduction <maximumf>, %37, %cst_29 [0] : vector<8x1024xf32> to vector<1024xf32>
      %39 = vector.shape_cast %38 : vector<1024xf32> to vector<1x1024xf32>
      %40 = arith.truncf %39 : vector<1x1024xf32> to vector<1x1024xbf16>
      %c0_30 = arith.constant 0 : index
      %c0_31 = arith.constant 0 : index
      %41 = vector.load %arg9[%c0_30, %c0_31] : memref<1024x512xbf16, #tpu.memory_space<vmem>>, vector<1024x512xbf16>
      %cst_32 = arith.constant dense<0.000000e+00> : vector<1x512xf32>
      %42 = tpu.matmul %40, %41, %cst_32 {dimension_numbers = #tpu.dot_dimension_numbers<[1], [0], [0], [1], [0, 0, 1, 1], [], []>} : vector<1x1024xbf16>, vector<1024x512xbf16>, vector<1x512xf32> -> vector<1x512xf32>
      %c0_33 = arith.constant 0 : index
      %c0_34 = arith.constant 0 : index
      %43 = vector.load %arg10[%c0_33, %c0_34] : memref<1x512xf32, #tpu.memory_space<vmem>>, vector<1x512xf32>
      %44 = arith.addf %42, %43 : vector<1x512xf32>
      %cst_35 = arith.constant 0.000000e+00 : f32
      %45 = vector.broadcast %cst_35 : f32 to vector<1x512xf32>
      %46 = arith.maximumf %44, %45 : vector<1x512xf32>
      %47 = arith.truncf %46 : vector<1x512xf32> to vector<1x512xbf16>
      %c0_36 = arith.constant 0 : index
      %c0_37 = arith.constant 0 : index
      %48 = vector.load %arg11[%c0_36, %c0_37] : memref<512x256xbf16, #tpu.memory_space<vmem>>, vector<512x256xbf16>
      %cst_38 = arith.constant dense<0.000000e+00> : vector<1x256xf32>
      %49 = tpu.matmul %47, %48, %cst_38 {dimension_numbers = #tpu.dot_dimension_numbers<[1], [0], [0], [1], [0, 0, 1, 1], [], []>} : vector<1x512xbf16>, vector<512x256xbf16>, vector<1x256xf32> -> vector<1x256xf32>
      %c0_39 = arith.constant 0 : index
      %c0_40 = arith.constant 0 : index
      %50 = vector.load %arg12[%c0_39, %c0_40] : memref<1x256xf32, #tpu.memory_space<vmem>>, vector<1x256xf32>
      %51 = arith.addf %49, %50 : vector<1x256xf32>
      %cst_41 = arith.constant 0.000000e+00 : f32
      %52 = vector.broadcast %cst_41 : f32 to vector<1x256xf32>
      %53 = arith.maximumf %51, %52 : vector<1x256xf32>
      %54 = arith.truncf %53 : vector<1x256xf32> to vector<1x256xbf16>
      %c0_42 = arith.constant 0 : index
      %c0_43 = arith.constant 0 : index
      %55 = vector.load %arg13[%c0_42, %c0_43] : memref<256x9xbf16, #tpu.memory_space<vmem>>, vector<256x9xbf16>
      %cst_44 = arith.constant dense<0.000000e+00> : vector<1x9xf32>
      %56 = tpu.matmul %54, %55, %cst_44 {dimension_numbers = #tpu.dot_dimension_numbers<[1], [0], [0], [1], [0, 0, 1, 1], [], []>} : vector<1x256xbf16>, vector<256x9xbf16>, vector<1x9xf32> -> vector<1x9xf32>
      %c0_45 = arith.constant 0 : index
      %c0_46 = arith.constant 0 : index
      %57 = vector.load %arg14[%c0_45, %c0_46] : memref<1x9xf32, #tpu.memory_space<vmem>>, vector<1x9xf32>
      %58 = arith.addf %56, %57 : vector<1x9xf32>
      %59 = vector.shape_cast %58 : vector<1x9xf32> to vector<1x1x9xf32>
      %c0_47 = arith.constant 0 : index
      %c0_48 = arith.constant 0 : index
      %c0_49 = arith.constant 0 : index
      %60 = vector.load %arg15[%c0_47, %c0_48, %c0_49] : memref<1x1x9xf32, #tpu.memory_space<vmem>>, vector<1x1x9xf32>
      tpu.vector_store %arg15[%c0_47, %c0_48, %c0_49], %59 {strides = array<i32>} : memref<1x1x9xf32, #tpu.memory_space<vmem>>, vector<1x1x9xf32>,
    } else {
    }
    return
  }
  func.func @transform_0(%arg0: i32, %arg1: i32) -> (i32, i32, i32) {
    %c0_i32 = arith.constant 0 : i32
    %c0_i32_0 = arith.constant 0 : i32
    return %arg0, %arg1, %c0_i32 : i32, i32, i32
  }
  func.func @transform_1(%arg0: i32, %arg1: i32) -> (i32, i32) {
    %c0_i32 = arith.constant 0 : i32
    %c0_i32_0 = arith.constant 0 : i32
    %c0_i32_1 = arith.constant 0 : i32
    return %c0_i32, %c0_i32_0 : i32, i32
  }
  func.func @transform_2(%arg0: i32, %arg1: i32) -> (i32, i32) {
    %c0_i32 = arith.constant 0 : i32
    %c0_i32_0 = arith.constant 0 : i32
    %c0_i32_1 = arith.constant 0 : i32
    return %c0_i32, %c0_i32_0 : i32, i32
  }
  func.func @transform_3(%arg0: i32, %arg1: i32) -> (i32, i32) {
    %c0_i32 = arith.constant 0 : i32
    %c0_i32_0 = arith.constant 0 : i32
    %c0_i32_1 = arith.constant 0 : i32
    return %c0_i32, %c0_i32_0 : i32, i32
  }
  func.func @transform_4(%arg0: i32, %arg1: i32) -> (i32, i32) {
    %c0_i32 = arith.constant 0 : i32
    %c0_i32_0 = arith.constant 0 : i32
    %c0_i32_1 = arith.constant 0 : i32
    return %c0_i32, %c0_i32_0 : i32, i32
  }
  func.func @transform_5(%arg0: i32, %arg1: i32) -> (i32, i32) {
    %c0_i32 = arith.constant 0 : i32
    %c0_i32_0 = arith.constant 0 : i32
    %c0_i32_1 = arith.constant 0 : i32
    return %c0_i32, %c0_i32_0 : i32, i32
  }
  func.func @transform_6(%arg0: i32, %arg1: i32) -> (i32, i32) {
    %c0_i32 = arith.constant 0 : i32
    %c0_i32_0 = arith.constant 0 : i32
    %c0_i32_1 = arith.constant 0 : i32
    return %c0_i32, %c0_i32_0 : i32, i32
  }
  func.func @transform_7(%arg0: i32, %arg1: i32) -> (i32, i32) {
    %c0_i32 = arith.constant 0 : i32
    %c0_i32_0 = arith.constant 0 : i32
    %c0_i32_1 = arith.constant 0 : i32
    return %c0_i32, %c0_i32_0 : i32, i32
  }
  func.func @transform_8(%arg0: i32, %arg1: i32) -> (i32, i32) {
    %c0_i32 = arith.constant 0 : i32
    %c0_i32_0 = arith.constant 0 : i32
    %c0_i32_1 = arith.constant 0 : i32
    return %c0_i32, %c0_i32_0 : i32, i32
  }
  func.func @transform_9(%arg0: i32, %arg1: i32) -> (i32, i32) {
    %c0_i32 = arith.constant 0 : i32
    %c0_i32_0 = arith.constant 0 : i32
    %c0_i32_1 = arith.constant 0 : i32
    return %c0_i32, %c0_i32_0 : i32, i32
  }
  func.func @transform_10(%arg0: i32, %arg1: i32) -> (i32, i32) {
    %c0_i32 = arith.constant 0 : i32
    %c0_i32_0 = arith.constant 0 : i32
    %c0_i32_1 = arith.constant 0 : i32
    return %c0_i32, %c0_i32_0 : i32, i32
  }
  func.func @transform_11(%arg0: i32, %arg1: i32) -> (i32, i32) {
    %c0_i32 = arith.constant 0 : i32
    %c0_i32_0 = arith.constant 0 : i32
    %c0_i32_1 = arith.constant 0 : i32
    return %c0_i32, %c0_i32_0 : i32, i32
  }
  func.func @transform_12(%arg0: i32, %arg1: i32) -> (i32, i32) {
    %c0_i32 = arith.constant 0 : i32
    %c0_i32_0 = arith.constant 0 : i32
    %c0_i32_1 = arith.constant 0 : i32
    return %c0_i32, %c0_i32_0 : i32, i32
  }
  func.func @transform_13(%arg0: i32, %arg1: i32) -> (i32, i32, i32) {
    %c0_i32 = arith.constant 0 : i32
    %c0_i32_0 = arith.constant 0 : i32
    %c0_i32_1 = arith.constant 0 : i32
    return %arg0, %c0_i32, %c0_i32_0 : i32, i32, i32
  }
}

</mosaic_0001>

<llo_original>
// kernel: tpu_custom_call.1
$region0: #{tpu_custom_call.1}
  #allocation0 [shape = 'u32[]', space=smem, size = 0x4, offset = 0x4, fixed_abs, tag = 'smem constant byte address 0x4 - core index']
  #allocation1 [shape = 'u32[72,128]{1,0:T(1,128)}', space=vmem, size = 0x9000, scoped, tag = 'internal scratch']
  #allocation2 [shape = 'f32[8,1024]{1,0:T(8,128)}', space=vmem, size = 0x8000, scoped, tag = 'scratch operand']
  %s0 = inlined_call_operand.vmem [shape: f32[2,16,3], index: 0, kind: input, shape index: {}]
  %s1 = inlined_call_operand.vmem [shape: bf16[3,64], index: 1, kind: input, shape index: {}]
  %s2 = inlined_call_operand.vmem [shape: f32[1,64], index: 2, kind: input, shape index: {}]
  %s3 = inlined_call_operand.vmem [shape: bf16[64,128], index: 3, kind: input, shape index: {}]
  %s4 = inlined_call_operand.vmem [shape: f32[1,128], index: 4, kind: input, shape index: {}]
  %s5 = inlined_call_operand.hbm [shape: bf16[128,1024], index: 5, kind: input, shape index: {}]
  %s6 = inlined_call_operand.vmem [shape: f32[1,1024], index: 6, kind: input, shape index: {}]
  %s7 = inlined_call_operand.hbm [shape: bf16[1024,512], index: 7, kind: input, shape index: {}]
  %s8 = inlined_call_operand.vmem [shape: f32[1,512], index: 8, kind: input, shape index: {}]
  %s9 = inlined_call_operand.hbm [shape: bf16[512,256], index: 9, kind: input, shape index: {}]
  %s10 = inlined_call_operand.vmem [shape: f32[1,256], index: 10, kind: input, shape index: {}]
  %s11 = inlined_call_operand.vmem [shape: bf16[256,9], index: 11, kind: input, shape index: {}]
  %s12 = inlined_call_operand.vmem [shape: f32[1,9], index: 12, kind: input, shape index: {}]
  %s13 = inlined_call_operand.hbm [shape: f32[2,1,9], index: 13, kind: output, shape index: {}]
  %s14 = sld [smem:[#allocation0]]
  $region105: #{tpu_custom_call.1} parent=0
    _
  %s16 = ssub.s32 1, %s14
  %s17 = scalar_select 0, %s16, %s14
  $region1: #{tpu_custom_call.1} parent=0
    #allocation3 [shape = 'u8[262144]{0}', space=vmem, size = 0x40000, scoped, tag = 'input window, operand 5, single buffered']
    #allocation4 [shape = 's32[2]{0}', space=sflag, size = 0x8, scoped, tag = 'scoped memory for tpu_custom_call.1']
    #allocation5 [shape = 's32[2]{0}', space=sflag, size = 0x8, scoped, tag = 'scoped memory for tpu_custom_call.1']
    #allocation6 [shape = 'u8[1048576]{0}', space=vmem, size = 0x100000, scoped, tag = 'input window, operand 7, single buffered']
    #allocation7 [shape = 's32[1]{0}', space=sflag, size = 0x4, scoped, tag = 'scoped memory for tpu_custom_call.1']
    #allocation8 [shape = 'u8[262144]{0}', space=vmem, size = 0x40000, scoped, tag = 'input window, operand 9, single buffered']
    #allocation9 [shape = 'u8[1024]{0}', space=vmem, size = 0x400, scoped, tag = 'output window, operand 0']
    %18 = vsyncpa [#allocation4], 0
    %19 = vsyncpa [#allocation7], 0
    %20 = vsyncpa [#allocation5], 0
    %s21 = scalar_lea.sflag [#allocation5], 1
    %22 = vsyncpa %s21, 0
    loop: start=0, step=1, limit=4
    $region2: #{tpu_custom_call.1} parent=1 // loop_pre_header
      _
    $region3: #{tpu_custom_call.1} parent=1 // loop_header
      %s24 = sphi 0, %s28
      %p25 = scmp.ge.s32.totalorder %s24, 4
      %s31 = sphi 0, %s43
      %s32 = sphi 0, %s39
      %s33 = sphi 0, %s31
      %s34 = sphi 0, %s32
      %s35 = sphi 0, %s33
      %s36 = sphi 0, %s34
      %s48 = sphi 0, %s50
      %s51 = sphi 0, %s48
      %s52 = sphi 0, %s51
      %s68 = sphi 0, %s52
      %s72 = sphi 0, %s72
      %s74 = sphi 0, %s72
      %s75 = sphi 0, %s74
      %s89 = sphi 0, %s75
      %s93 = sphi 0, %s93
      %s95 = sphi 0, %s93
      %s96 = sphi 0, %s95
      %s110 = sphi 0, %s96
      %s114 = sphi 0, %s114
      %s116 = sphi 0, %s114
      %s117 = sphi 0, %s116
      %s131 = sphi 0, %s117
      %s135 = sphi 0, %s135
      %s137 = sphi 0, %s135
      %s138 = sphi 0, %s137
      %s152 = sphi 0, %s138
      %s156 = sphi 0, %s156
      %s158 = sphi 0, %s156
      %s159 = sphi 0, %s158
      %s173 = sphi 0, %s159
      %s177 = sphi 0, %s177
      %s179 = sphi 0, %s177
      %s180 = sphi 0, %s179
      %s194 = sphi 0, %s180
      %s198 = sphi 0, %s198
      %s200 = sphi 0, %s198
      %s201 = sphi 0, %s200
      %s215 = sphi 0, %s201
      %s219 = sphi 0, %s219
      %s221 = sphi 0, %s219
      %s222 = sphi 0, %s221
      %s236 = sphi 0, %s222
      %s240 = sphi 0, %s240
      %s242 = sphi 0, %s240
      %s243 = sphi 0, %s242
      %s257 = sphi 0, %s243
      %s261 = sphi 0, %s261
      %s263 = sphi 0, %s261
      %s264 = sphi 0, %s263
      %s278 = sphi 0, %s264
      %s282 = sphi 0, %s282
      %s284 = sphi 0, %s282
      %s285 = sphi 0, %s284
      %s299 = sphi 0, %s285
      %s303 = sphi 0, %s303
      %s305 = sphi 0, %s303
      %s306 = sphi 0, %s305
      %s320 = sphi 0, %s306
      %s326 = sphi 0, %s328
      %s329 = sphi 0, %s326
      %s330 = sphi 0, %s329
      %s346 = sphi 0, %s330
    $region4: #{tpu_custom_call.1} parent=1 // loop_header_branch
      %27 = sbr.rel (%p25) target = $region8
    $region5: #{tpu_custom_call.1} parent=1 // loop_body
      %s29 = ssub.s32 %s24, 1
      %s30 = ssub.s32 %s24, 2
      %s37 = sadd.s32 1, %s32
      %p38 = scmp.ge.s32.totalorder %s37, 1
      %s39 = scalar_select %p38, 0, %s37
      %s40 = sadd.s32 1, %s31
      %s41 = scalar_select %p38, %s40, %s31
      %p42 = scmp.ge.s32.totalorder %s41, 2
      %s43 = scalar_select %p42, 0, %s41
      %s44 = ssub.s32 %s31, %s43
      %s45 = ssub.s32 %s32, %s39
      %s46 = sor.u32 %s44, %s45
      %p47 = scmp.eq.s32.totalorder %s46, 0
      %s49 = sadd.s32 %s48, 1
      %s50 = scalar_select %p47, %s48, %s49
      %p53 = pneg %p47
      %p54 = scmp.eq.s32.totalorder %s24, 1
      %p55 = por %p53, %p54
      %p56 = scmp.ne.s32.totalorder %s48, %s51
      %p57 = scmp.eq.s32.totalorder %s24, 0
      %p58 = por %p56, %p57
      %p59 = scmp.ne.s32.totalorder %s48, %s51
      %p60 = scmp.eq.s32.totalorder %s29, 1
      %p61 = por %p59, %p60
      %p62 = scmp.ne.s32.totalorder %s51, %s52
      %p63 = scmp.eq.s32.totalorder %s29, 0
      %p64 = por %p62, %p63
      %p65 = scmp.ne.s32.totalorder %s51, %s52
      %p66 = scmp.eq.s32.totalorder %s30, 1
      %p67 = por %p65, %p66
      %p69 = scmp.ne.s32.totalorder %s52, %s68
      %p70 = scmp.eq.s32.totalorder %s30, 0
      %p71 = por %p69, %p70
      %s73 = sadd.s32 %s72, 1
      %p76 = scmp.eq.s32.totalorder %s24, 1
      %p77 = scmp.ne.s32.totalorder %s72, %s74
      %p78 = scmp.eq.s32.totalorder %s24, 0
      %p79 = por %p77, %p78
      %p80 = scmp.ne.s32.totalorder %s72, %s74
      %p81 = scmp.eq.s32.totalorder %s29, 1
      %p82 = por %p80, %p81
      %p83 = scmp.ne.s32.totalorder %s74, %s75
      %p84 = scmp.eq.s32.totalorder %s29, 0
      %p85 = por %p83, %p84
      %p86 = scmp.ne.s32.totalorder %s74, %s75
      %p87 = scmp.eq.s32.totalorder %s30, 1
      %p88 = por %p86, %p87
      %p90 = scmp.ne.s32.totalorder %s75, %s89
      %p91 = scmp.eq.s32.totalorder %s30, 0
      %p92 = por %p90, %p91
      %s94 = sadd.s32 %s93, 1
      %p97 = scmp.eq.s32.totalorder %s24, 1
      %p98 = scmp.ne.s32.totalorder %s93, %s95
      %p99 = scmp.eq.s32.totalorder %s24, 0
      %p100 = por %p98, %p99
      %p101 = scmp.ne.s32.totalorder %s93, %s95
      %p102 = scmp.eq.s32.totalorder %s29, 1
      %p103 = por %p101, %p102
      %p104 = scmp.ne.s32.totalorder %s95, %s96
      %p105 = scmp.eq.s32.totalorder %s29, 0
      %p106 = por %p104, %p105
      %p107 = scmp.ne.s32.totalorder %s95, %s96
      %p108 = scmp.eq.s32.totalorder %s30, 1
      %p109 = por %p107, %p108
      %p111 = scmp.ne.s32.totalorder %s96, %s110
      %p112 = scmp.eq.s32.totalorder %s30, 0
      %p113 = por %p111, %p112
      %s115 = sadd.s32 %s114, 1
      %p118 = scmp.eq.s32.totalorder %s24, 1
      %p119 = scmp.ne.s32.totalorder %s114, %s116
      %p120 = scmp.eq.s32.totalorder %s24, 0
      %p121 = por %p119, %p120
      %p122 = scmp.ne.s32.totalorder %s114, %s116
      %p123 = scmp.eq.s32.totalorder %s29, 1
      %p124 = por %p122, %p123
      %p125 = scmp.ne.s32.totalorder %s116, %s117
      %p126 = scmp.eq.s32.totalorder %s29, 0
      %p127 = por %p125, %p126
      %p128 = scmp.ne.s32.totalorder %s116, %s117
      %p129 = scmp.eq.s32.totalorder %s30, 1
      %p130 = por %p128, %p129
      %p132 = scmp.ne.s32.totalorder %s117, %s131
      %p133 = scmp.eq.s32.totalorder %s30, 0
      %p134 = por %p132, %p133
      %s136 = sadd.s32 %s135, 1
      %p139 = scmp.eq.s32.totalorder %s24, 1
      %p140 = scmp.ne.s32.totalorder %s135, %s137
      %p141 = scmp.eq.s32.totalorder %s24, 0
      %p142 = por %p140, %p141
      %p143 = scmp.ne.s32.totalorder %s135, %s137
      %p144 = scmp.eq.s32.totalorder %s29, 1
      %p145 = por %p143, %p144
      %p146 = scmp.ne.s32.totalorder %s137, %s138
      %p147 = scmp.eq.s32.totalorder %s29, 0
      %p148 = por %p146, %p147
      %p149 = scmp.ne.s32.totalorder %s137, %s138
      %p150 = scmp.eq.s32.totalorder %s30, 1
      %p151 = por %p149, %p150
      %p153 = scmp.ne.s32.totalorder %s138, %s152
      %p154 = scmp.eq.s32.totalorder %s30, 0
      %p155 = por %p153, %p154
      %s157 = sadd.s32 %s156, 1
      %p160 = scmp.eq.s32.totalorder %s24, 1
      %p161 = scmp.ne.s32.totalorder %s156, %s158
      %p162 = scmp.eq.s32.totalorder %s24, 0
      %p163 = por %p161, %p162
      %p164 = scmp.ne.s32.totalorder %s156, %s158
      %p165 = scmp.eq.s32.totalorder %s29, 1
      %p166 = por %p164, %p165
      %p167 = scmp.ne.s32.totalorder %s158, %s159
      %p168 = scmp.eq.s32.totalorder %s29, 0
      %p169 = por %p167, %p168
      %p170 = scmp.ne.s32.totalorder %s158, %s159
      %p171 = scmp.eq.s32.totalorder %s30, 1
      %p172 = por %p170, %p171
      %p174 = scmp.ne.s32.totalorder %s159, %s173
      %p175 = scmp.eq.s32.totalorder %s30, 0
      %p176 = por %p174, %p175
      %s178 = sadd.s32 %s177, 1
      %p181 = scmp.eq.s32.totalorder %s24, 1
      %p182 = scmp.ne.s32.totalorder %s177, %s179
      %p183 = scmp.eq.s32.totalorder %s24, 0
      %p184 = por %p182, %p183
      %p185 = scmp.ne.s32.totalorder %s177, %s179
      %p186 = scmp.eq.s32.totalorder %s29, 1
      %p187 = por %p185, %p186
      %p188 = scmp.ne.s32.totalorder %s179, %s180
      %p189 = scmp.eq.s32.totalorder %s29, 0
      %p190 = por %p188, %p189
      %p191 = scmp.ne.s32.totalorder %s179, %s180
      %p192 = scmp.eq.s32.totalorder %s30, 1
      %p193 = por %p191, %p192
      %p195 = scmp.ne.s32.totalorder %s180, %s194
      %p196 = scmp.eq.s32.totalorder %s30, 0
      %p197 = por %p195, %p196
      %s199 = sadd.s32 %s198, 1
      %p202 = scmp.eq.s32.totalorder %s24, 1
      %p203 = scmp.ne.s32.totalorder %s198, %s200
      %p204 = scmp.eq.s32.totalorder %s24, 0
      %p205 = por %p203, %p204
      %p206 = scmp.ne.s32.totalorder %s198, %s200
      %p207 = scmp.eq.s32.totalorder %s29, 1
      %p208 = por %p206, %p207
      %p209 = scmp.ne.s32.totalorder %s200, %s201
      %p210 = scmp.eq.s32.totalorder %s29, 0
      %p211 = por %p209, %p210
      %p212 = scmp.ne.s32.totalorder %s200, %s201
      %p213 = scmp.eq.s32.totalorder %s30, 1
      %p214 = por %p212, %p213
      %p216 = scmp.ne.s32.totalorder %s201, %s215
      %p217 = scmp.eq.s32.totalorder %s30, 0
      %p218 = por %p216, %p217
      %s220 = sadd.s32 %s219, 1
      %p223 = scmp.eq.s32.totalorder %s24, 1
      %p224 = scmp.ne.s32.totalorder %s219, %s221
      %p225 = scmp.eq.s32.totalorder %s24, 0
      %p226 = por %p224, %p225
      %p227 = scmp.ne.s32.totalorder %s219, %s221
      %p228 = scmp.eq.s32.totalorder %s29, 1
      %p229 = por %p227, %p228
      %p230 = scmp.ne.s32.totalorder %s221, %s222
      %p231 = scmp.eq.s32.totalorder %s29, 0
      %p232 = por %p230, %p231
      %p233 = scmp.ne.s32.totalorder %s221, %s222
      %p234 = scmp.eq.s32.totalorder %s30, 1
      %p235 = por %p233, %p234
      %p237 = scmp.ne.s32.totalorder %s222, %s236
      %p238 = scmp.eq.s32.totalorder %s30, 0
      %p239 = por %p237, %p238
      %s241 = sadd.s32 %s240, 1
      %p244 = scmp.eq.s32.totalorder %s24, 1
      %p245 = scmp.ne.s32.totalorder %s240, %s242
      %p246 = scmp.eq.s32.totalorder %s24, 0
      %p247 = por %p245, %p246
      %p248 = scmp.ne.s32.totalorder %s240, %s242
      %p249 = scmp.eq.s32.totalorder %s29, 1
      %p250 = por %p248, %p249
      %p251 = scmp.ne.s32.totalorder %s242, %s243
      %p252 = scmp.eq.s32.totalorder %s29, 0
      %p253 = por %p251, %p252
      %p254 = scmp.ne.s32.totalorder %s242, %s243
      %p255 = scmp.eq.s32.totalorder %s30, 1
      %p256 = por %p254, %p255
      %p258 = scmp.ne.s32.totalorder %s243, %s257
      %p259 = scmp.eq.s32.totalorder %s30, 0
      %p260 = por %p258, %p259
      %s262 = sadd.s32 %s261, 1
      %p265 = scmp.eq.s32.totalorder %s24, 1
      %p266 = scmp.ne.s32.totalorder %s261, %s263
      %p267 = scmp.eq.s32.totalorder %s24, 0
      %p268 = por %p266, %p267
      %p269 = scmp.ne.s32.totalorder %s261, %s263
      %p270 = scmp.eq.s32.totalorder %s29, 1
      %p271 = por %p269, %p270
      %p272 = scmp.ne.s32.totalorder %s263, %s264
      %p273 = scmp.eq.s32.totalorder %s29, 0
      %p274 = por %p272, %p273
      %p275 = scmp.ne.s32.totalorder %s263, %s264
      %p276 = scmp.eq.s32.totalorder %s30, 1
      %p277 = por %p275, %p276
      %p279 = scmp.ne.s32.totalorder %s264, %s278
      %p280 = scmp.eq.s32.totalorder %s30, 0
      %p281 = por %p279, %p280
      %s283 = sadd.s32 %s282, 1
      %p286 = scmp.eq.s32.totalorder %s24, 1
      %p287 = scmp.ne.s32.totalorder %s282, %s284
      %p288 = scmp.eq.s32.totalorder %s24, 0
      %p289 = por %p287, %p288
      %p290 = scmp.ne.s32.totalorder %s282, %s284
      %p291 = scmp.eq.s32.totalorder %s29, 1
      %p292 = por %p290, %p291
      %p293 = scmp.ne.s32.totalorder %s284, %s285
      %p294 = scmp.eq.s32.totalorder %s29, 0
      %p295 = por %p293, %p294
      %p296 = scmp.ne.s32.totalorder %s284, %s285
      %p297 = scmp.eq.s32.totalorder %s30, 1
      %p298 = por %p296, %p297
      %p300 = scmp.ne.s32.totalorder %s285, %s299
      %p301 = scmp.eq.s32.totalorder %s30, 0
      %p302 = por %p300, %p301
      %s304 = sadd.s32 %s303, 1
      %p307 = scmp.eq.s32.totalorder %s24, 1
      %p308 = scmp.ne.s32.totalorder %s303, %s305
      %p309 = scmp.eq.s32.totalorder %s24, 0
      %p310 = por %p308, %p309
      %p311 = scmp.ne.s32.totalorder %s303, %s305
      %p312 = scmp.eq.s32.totalorder %s29, 1
      %p313 = por %p311, %p312
      %p314 = scmp.ne.s32.totalorder %s305, %s306
      %p315 = scmp.eq.s32.totalorder %s29, 0
      %p316 = por %p314, %p315
      %p317 = scmp.ne.s32.totalorder %s305, %s306
      %p318 = scmp.eq.s32.totalorder %s30, 1
      %p319 = por %p317, %p318
      %p321 = scmp.ne.s32.totalorder %s306, %s320
      %p322 = scmp.eq.s32.totalorder %s30, 0
      %p323 = por %p321, %p322
      %s324 = ssub.s32 %s31, %s43
      %p325 = scmp.eq.s32.totalorder %s324, 0
      %s327 = sadd.s32 %s326, 1
      %s328 = scalar_select %p325, %s326, %s327
      %p331 = pneg %p325
      %p332 = scmp.eq.s32.totalorder %s24, 1
      %p333 = por %p331, %p332
      %p334 = scmp.ne.s32.totalorder %s326, %s329
      %p335 = scmp.eq.s32.totalorder %s24, 0
      %p336 = por %p334, %p335
      %p337 = scmp.ne.s32.totalorder %s326, %s329
      %p338 = scmp.eq.s32.totalorder %s29, 1
      %p339 = por %p337, %p338
      %p340 = scmp.ne.s32.totalorder %s329, %s330
      %p341 = scmp.eq.s32.totalorder %s29, 0
      %p342 = por %p340, %p341
      %p343 = scmp.ne.s32.totalorder %s329, %s330
      %p344 = scmp.eq.s32.totalorder %s30, 1
      %p345 = por %p343, %p344
      %p347 = scmp.ne.s32.totalorder %s330, %s346
      %p348 = scmp.eq.s32.totalorder %s30, 0
      %p349 = por %p347, %p348
      %p350 = scmp.le.s32.totalorder 1, %s24
      %p351 = scmp.lt.s32.totalorder %s24, 3
      %p352 = pnand %p350, %p351
      %p353 = pneg %p352
      // Predicated region
      $region9: #{tpu_custom_call.1} parent=5 // pred_check
        _
      $region10: #{tpu_custom_call.1} parent=5 // pred_check_branch
        %355 = sbr.rel (%p352) target = $region12
      $region11: #{tpu_custom_call.1} parent=5 // pred_region
        %s356 = ssub.s32 %s24, 1
        // Predicated region
        $region13: #{tpu_custom_call.1} parent=11 // pred_check
          %p357 = pneg %p85
        $region14: #{tpu_custom_call.1} parent=11 // pred_check_branch
          %359 = sbr.rel (%p357) target = $region16
        $region15: #{tpu_custom_call.1} parent=11 // pred_region
          _
        $region16: #{tpu_custom_call.1} parent=11 // pred_fallthru
          _
        // Predicated region
        $region17: #{tpu_custom_call.1} parent=11 // pred_check
          %p360 = pneg %p106
        $region18: #{tpu_custom_call.1} parent=11 // pred_check_branch
          %362 = sbr.rel (%p360) target = $region20
        $region19: #{tpu_custom_call.1} parent=11 // pred_region
          _
        $region20: #{tpu_custom_call.1} parent=11 // pred_fallthru
          _
        // Predicated region
        $region21: #{tpu_custom_call.1} parent=11 // pred_check
          %p363 = pneg %p127
        $region22: #{tpu_custom_call.1} parent=11 // pred_check_branch
          %365 = sbr.rel (%p363) target = $region24
        $region23: #{tpu_custom_call.1} parent=11 // pred_region
          _
        $region24: #{tpu_custom_call.1} parent=11 // pred_fallthru
          _
        // Predicated region
        $region25: #{tpu_custom_call.1} parent=11 // pred_check
          %p366 = pneg %p148
        $region26: #{tpu_custom_call.1} parent=11 // pred_check_branch
          %368 = sbr.rel (%p366) target = $region28
        $region27: #{tpu_custom_call.1} parent=11 // pred_region
          _
        $region28: #{tpu_custom_call.1} parent=11 // pred_fallthru
          _
        // Predicated region
        $region29: #{tpu_custom_call.1} parent=11 // pred_check
          %p369 = pneg %p169
        $region30: #{tpu_custom_call.1} parent=11 // pred_check_branch
          %371 = sbr.rel (%p369) target = $region32
        $region31: #{tpu_custom_call.1} parent=11 // pred_region
          %373 = vsyncadd [#allocation4], 0
          %s374 = sshll.u32 %s5, 4
          %s375 = int_to_ptr.hbm [resolvable:$true] %s374
          %s376 = sshll.u32 [#allocation3], 4
          %s377 = int_to_ptr.vmem [resolvable:$true] %s376
          %382 = dma.hbm_to_vmem [thread:$0]  %s375, 8192, %s377, [#allocation4], 512, 512, 32
        $region32: #{tpu_custom_call.1} parent=11 // pred_fallthru
          _
        // Predicated region
        $region33: #{tpu_custom_call.1} parent=11 // pred_check
          %p383 = pneg %p190
        $region34: #{tpu_custom_call.1} parent=11 // pred_check_branch
          %385 = sbr.rel (%p383) target = $region36
        $region35: #{tpu_custom_call.1} parent=11 // pred_region
          _
        $region36: #{tpu_custom_call.1} parent=11 // pred_fallthru
          _
        // Predicated region
        $region37: #{tpu_custom_call.1} parent=11 // pred_check
          %p386 = pneg %p211
        $region38: #{tpu_custom_call.1} parent=11 // pred_check_branch
          %388 = sbr.rel (%p386) target = $region40
        $region39: #{tpu_custom_call.1} parent=11 // pred_region
          %390 = vsyncadd [#allocation7], 0
          %s391 = sshll.u32 %s7, 4
          %s392 = int_to_ptr.hbm [resolvable:$true] %s391
          %s393 = sshll.u32 [#allocation6], 4
          %s394 = int_to_ptr.vmem [resolvable:$true] %s393
          %399 = dma.hbm_to_vmem [thread:$0]  %s392, 32768, %s394, [#allocation7], 256, 256, 16
        $region40: #{tpu_custom_call.1} parent=11 // pred_fallthru
          _
        // Predicated region
        $region41: #{tpu_custom_call.1} parent=11 // pred_check
          %p400 = pneg %p232
        $region42: #{tpu_custom_call.1} parent=11 // pred_check_branch
          %402 = sbr.rel (%p400) target = $region44
        $region43: #{tpu_custom_call.1} parent=11 // pred_region
          _
        $region44: #{tpu_custom_call.1} parent=11 // pred_fallthru
          _
        // Predicated region
        $region45: #{tpu_custom_call.1} parent=11 // pred_check
          %p403 = pneg %p253
        $region46: #{tpu_custom_call.1} parent=11 // pred_check_branch
          %405 = sbr.rel (%p403) target = $region48
        $region47: #{tpu_custom_call.1} parent=11 // pred_region
          %407 = vsyncadd [#allocation7], 0
          %s408 = sshll.u32 %s9, 4
          %s409 = int_to_ptr.hbm [resolvable:$true] %s408
          %s410 = sshll.u32 [#allocation8], 4
          %s411 = int_to_ptr.vmem [resolvable:$true] %s410
          %416 = dma.hbm_to_vmem [thread:$0]  %s409, 8192, %s411, [#allocation7], 128, 128, 8
        $region48: #{tpu_custom_call.1} parent=11 // pred_fallthru
          _
        // Predicated region
        $region49: #{tpu_custom_call.1} parent=11 // pred_check
          %p417 = pneg %p274
        $region50: #{tpu_custom_call.1} parent=11 // pred_check_branch
          %419 = sbr.rel (%p417) target = $region52
        $region51: #{tpu_custom_call.1} parent=11 // pred_region
          _
        $region52: #{tpu_custom_call.1} parent=11 // pred_fallthru
          _
        // Predicated region
        $region53: #{tpu_custom_call.1} parent=11 // pred_check
          %p420 = pneg %p295
        $region54: #{tpu_custom_call.1} parent=11 // pred_check_branch
          %422 = sbr.rel (%p420) target = $region56
        $region55: #{tpu_custom_call.1} parent=11 // pred_region
          _
        $region56: #{tpu_custom_call.1} parent=11 // pred_fallthru
          _
        // Predicated region
        $region57: #{tpu_custom_call.1} parent=11 // pred_check
          %p423 = pneg %p316
        $region58: #{tpu_custom_call.1} parent=11 // pred_check_branch
          %425 = sbr.rel (%p423) target = $region60
        $region59: #{tpu_custom_call.1} parent=11 // pred_region
          _
        $region60: #{tpu_custom_call.1} parent=11 // pred_fallthru
          _
      $region12: #{tpu_custom_call.1} parent=5 // pred_fallthru
        _
      %p426 = scmp.lt.s32.totalorder %s24, 2
      // Predicated region
      $region61: #{tpu_custom_call.1} parent=5 // pred_check
        %p427 = pneg %p426
      $region62: #{tpu_custom_call.1} parent=5 // pred_check_branch
        %429 = sbr.rel (%p427) target = $region64
      $region63: #{tpu_custom_call.1} parent=5 // pred_region
        // Predicated region
        $region65: #{tpu_custom_call.1} parent=63 // pred_check
          %p430 = pneg %p58
        $region66: #{tpu_custom_call.1} parent=63 // pred_check_branch
          %432 = sbr.rel (%p430) target = $region68
        $region67: #{tpu_custom_call.1} parent=63 // pred_region
          %s433 = smul.u32 2, %s32
          %p434 = scmp.lt.s32.totalorder %s31, 1
          %s435 = scalar_select %p434, %s31, 1
          %p436 = scmp.lt.s32.totalorder %s433, 1
          %s437 = scalar_select %p436, %s433, 1
          %s438 = smul.addr %s435, 2
          %s439 = sadd.s32 %s437, %s438
          %s440 = smul.addr %s439, 8
          %s441 = scalar_lea.vmem %s0, %s440
          %s442 = smul.u32 2, %s32
        $region68: #{tpu_custom_call.1} parent=63 // pred_fallthru
          _
      $region64: #{tpu_custom_call.1} parent=5 // pred_fallthru
        _
      %p443 = scmp.le.s32.totalorder 1, %s24
      %p444 = scmp.lt.s32.totalorder %s24, 3
      %p445 = pnand %p443, %p444
      %p446 = pneg %p445
      // Predicated region
      $region69: #{tpu_custom_call.1} parent=5 // pred_check
        _
      $region70: #{tpu_custom_call.1} parent=5 // pred_check_branch
        %448 = sbr.rel (%p445) target = $region72
      $region71: #{tpu_custom_call.1} parent=5 // pred_region
        %s449 = ssub.s32 %s24, 1
        // Predicated region
        $region73: #{tpu_custom_call.1} parent=71 // pred_check
          %p450 = pneg %p169
        $region74: #{tpu_custom_call.1} parent=71 // pred_check_branch
          %452 = sbr.rel (%p450) target = $region76
        $region75: #{tpu_custom_call.1} parent=71 // pred_region
          %454 = dma.done [#allocation4], 8192
        $region76: #{tpu_custom_call.1} parent=71 // pred_fallthru
          _
        // Predicated region
        $region77: #{tpu_custom_call.1} parent=71 // pred_check
          %p455 = pneg %p211
        $region78: #{tpu_custom_call.1} parent=71 // pred_check_branch
          %457 = sbr.rel (%p455) target = $region80
        $region79: #{tpu_custom_call.1} parent=71 // pred_region
          %459 = dma.done [#allocation7], 32768
        $region80: #{tpu_custom_call.1} parent=71 // pred_fallthru
          _
        // Predicated region
        $region81: #{tpu_custom_call.1} parent=71 // pred_check
          %p460 = pneg %p253
        $region82: #{tpu_custom_call.1} parent=71 // pred_check_branch
          %462 = sbr.rel (%p460) target = $region84
        $region83: #{tpu_custom_call.1} parent=71 // pred_region
          %464 = dma.done [#allocation7], 8192
        $region84: #{tpu_custom_call.1} parent=71 // pred_fallthru
          _
        %s465 = smul.u32 2, %s34
        %p466 = scmp.lt.s32.totalorder %s33, 1
        %s467 = scalar_select %p466, %s33, 1
        %p468 = scmp.lt.s32.totalorder %s465, 1
        %s469 = scalar_select %p468, %s465, 1
        %s470 = smul.addr %s467, 2
        %s471 = sadd.s32 %s469, %s470
        %s472 = smul.addr %s471, 8
        %s473 = scalar_lea.vmem %s0, %s472
        %p474 = pneg %p64
        %p475 = pneg %p61
        %p476 = pneg %p85
        %p477 = pneg %p82
        %p478 = pneg %p106
        %p479 = pneg %p103
        %p480 = pneg %p127
        %p481 = pneg %p124
        %p482 = pneg %p148
        %p483 = pneg %p145
        %p484 = pneg %p169
        %p485 = pneg %p166
        %p486 = pneg %p190
        %p487 = pneg %p187
        %p488 = pneg %p211
        %p489 = pneg %p208
        %p490 = pneg %p232
        %p491 = pneg %p229
        %p492 = pneg %p253
        %p493 = pneg %p250
        %p494 = pneg %p274
        %p495 = pneg %p271
        %p496 = pneg %p295
        %p497 = pneg %p292
        %p498 = pneg %p316
        %p499 = pneg %p313
        %p500 = pneg %p342
        %p501 = pneg %p339
        %s502 = sand.u32 %s329, 1
        %s503 = scalar_lea.sflag [#allocation5], %s502
        %s504 = sand.u32 %s329, 1
        %s505 = scalar_lea.vmem [#allocation9], %s504
        %s506 = smul.u32 2, %s34
        %p507 = scmp.lt.s32.totalorder %s33, 1
        %s508 = scalar_select %p507, %s33, 1
        %p509 = scmp.lt.s32.totalorder %s506, 1
        %s510 = scalar_select %p509, %s506, 1
        %s511 = smul.addr %s508, 2
        %s512 = sadd.s32 %s510, %s511
        %s513 = smul.addr %s512, 8
        %s514 = scalar_lea.vmem %s0, %s513
        %s515 = smul.u32 2, %s34
        %p517 = scmp.eq.s32.totalorder %s34, 0
        // Predicated region
        $region85: #{tpu_custom_call.1} parent=71 // pred_check
          %p518 = pneg %p517
        $region86: #{tpu_custom_call.1} parent=71 // pred_check_branch
          %520 = sbr.rel (%p518) target = $region88
        $region87: #{tpu_custom_call.1} parent=71 // pred_region
          %521 = vst [vmem:[#allocation2] sm:$0xff] -inf
          %522 = vst [vmem:[#allocation2 + $0x8] sm:$0xff] -inf
          %523 = vst [vmem:[#allocation2 + $0x10] sm:$0xff] -inf
          %524 = vst [vmem:[#allocation2 + $0x18] sm:$0xff] -inf
          %525 = vst [vmem:[#allocation2 + $0x20] sm:$0xff] -inf
          %526 = vst [vmem:[#allocation2 + $0x28] sm:$0xff] -inf
          %527 = vst [vmem:[#allocation2 + $0x30] sm:$0xff] -inf
          %528 = vst [vmem:[#allocation2 + $0x38] sm:$0xff] -inf
        $region88: #{tpu_custom_call.1} parent=71 // pred_fallthru
          _
        %v529 = vld [vmem:[%s514] sm:$0xff]
        %v530 = vld [vmem:[%s514 + $0x8] sm:$0xff]
        %v531 = vpack.c.bf16 %v530, %v529
        %v532 = vld [vmem:[%s1] sm:$0x3]
        %v533 = vld [vmem:[%s2] sm:$0x1]
        %v535 = vperm.slane %v533, 0
        %vm537 = vcmask 23552
        %v539 = vsel %vm537, %v531, 0
        %vm541 = vcmask 1040384
        %vm542 = vcmask 1041408
        %v543 = vsel %vm541, 4294967295, 65535
        %v544 = vsel %vm542, %v543, 0
        %v546 = vand.u32 %v532, %v544
        %548 = vmatpush.bf16.msra.mxu0 0
        %549 = vmatpush.bf16.msra.mxu0 0
        %550 = vmatpush.bf16.msra.mxu0 0
        %551 = vmatpush.bf16.msra.mxu0 0
        %552 = vmatpush.bf16.msra.mxu0 0
        %553 = vmatpush.bf16.msra.mxu0 0
        %554 = vmatpush.bf16.msra.mxu0 0
        %555 = vmatpush.bf16.msra.mxu0 %v546
        %556 = vmatmul.bf16.gmra.mxu0 %v539
        %v557 = vpop.f32.mrf.mxu0
        %v558 = vadd.f32 %v535, %v557
        %v559 = vpop.f32.mrf.mxu0
        %v560 = vadd.f32 %v535, %v559
        %561 = vdwg.mxu0
        %v562 = vmax.f32 %v558, 0.0
        %v563 = vmax.f32 %v560, 0.0
        %v564 = vpack.c.bf16 %v563, %v562
        %v565 = vld [vmem:[%s3] sm:$0xf]
        %v566 = vld [vmem:[%s3 + $0x4] sm:$0xf]
        %v567 = vld [vmem:[%s3 + $0x8] sm:$0xf]
        %v568 = vld [vmem:[%s3 + $0xc] sm:$0xf]
        %v569 = vld [vmem:[%s3 + $0x10] sm:$0xf]
        %v570 = vld [vmem:[%s3 + $0x14] sm:$0xf]
        %v571 = vld [vmem:[%s3 + $0x18] sm:$0xf]
        %v572 = vld [vmem:[%s3 + $0x1c] sm:$0xf]
        %v573 = vld [vmem:[%s4] sm:$0x1]
        %v575 = vperm.slane %v573, 0
        %v585 = vunpack.c.l.b16 %v565
        %v586 = vunpack.c.l.b16 %v566
        %v587 = vunpack.c.l.b16 %v567
        %v588 = vunpack.c.l.b16 %v568
        %v589 = vunpack.c.l.b16 %v569
        %v590 = vunpack.c.l.b16 %v570
        %v591 = vunpack.c.l.b16 %v571
        %v592 = vunpack.c.l.b16 %v572
        %v593 = vpack.c.b16 %v586, %v585
        %v594 = vpack.c.b16 %v588, %v587
        %v595 = vpack.c.b16 %v590, %v589
        %v596 = vpack.c.b16 %v592, %v591
        %vm601 = vcmask 523264
        %v603 = vsel %vm601, %v564, 0
        %605 = vmatpush.bf16.msra.mxu0 0
        %606 = vmatpush.bf16.msra.mxu0 0
        %607 = vmatpush.bf16.msra.mxu0 0
        %608 = vmatpush.bf16.msra.mxu0 0
        %609 = vmatpush.bf16.msra.mxu0 %v596
        %610 = vmatpush.bf16.msra.mxu0 %v595
        %611 = vmatpush.bf16.msra.mxu0 %v594
        %612 = vmatpush.bf16.msra.mxu0 %v593
        %613 = vmatmul.bf16.gmra.mxu0 %v603
        %v614 = vpop.f32.mrf.mxu0
        %v615 = vadd.f32 %v575, %v614
        %v616 = vpop.f32.mrf.mxu0
        %v617 = vadd.f32 %v575, %v616
        %618 = vdwg.mxu0
        %v619 = vmax.f32 %v615, 0.0
        %v620 = vmax.f32 %v617, 0.0
        %v621 = vpack.c.bf16 %v620, %v619
        %v622 = vld [vmem:[#allocation3] sm:$0xff]
        %v623 = vld [vmem:[#allocation3 + $0x8] sm:$0xff]
        %v624 = vld [vmem:[#allocation3 + $0x10] sm:$0xff]
        %v625 = vld [vmem:[#allocation3 + $0x18] sm:$0xff]
        %v626 = vld [vmem:[#allocation3 + $0x20] sm:$0xff]
        %v627 = vld [vmem:[#allocation3 + $0x28] sm:$0xff]
        %v628 = vld [vmem:[#allocation3 + $0x30] sm:$0xff]
        %v629 = vld [vmem:[#allocation3 + $0x38] sm:$0xff]
        %v630 = vld [vmem:[#allocation3 + $0x40] sm:$0xff]
        %v631 = vld [vmem:[#allocation3 + $0x48] sm:$0xff]
        %v632 = vld [vmem:[#allocation3 + $0x50] sm:$0xff]
        %v633 = vld [vmem:[#allocation3 + $0x58] sm:$0xff]
        %v634 = vld [vmem:[#allocation3 + $0x60] sm:$0xff]
        %v635 = vld [vmem:[#allocation3 + $0x68] sm:$0xff]
        %v636 = vld [vmem:[#allocation3 + $0x70] sm:$0xff]
        %v637 = vld [vmem:[#allocation3 + $0x78] sm:$0xff]
        %v638 = vld [vmem:[#allocation3 + $0x80] sm:$0xff]
        %v639 = vld [vmem:[#allocation3 + $0x88] sm:$0xff]
        %v640 = vld [vmem:[#allocation3 + $0x90] sm:$0xff]
        %v641 = vld [vmem:[#allocation3 + $0x98] sm:$0xff]
        %v642 = vld [vmem:[#allocation3 + $0xa0] sm:$0xff]
        %v643 = vld [vmem:[#allocation3 + $0xa8] sm:$0xff]
        %v644 = vld [vmem:[#allocation3 + $0xb0] sm:$0xff]
        %v645 = vld [vmem:[#allocation3 + $0xb8] sm:$0xff]
        %v646 = vld [vmem:[#allocation3 + $0xc0] sm:$0xff]
        %v647 = vld [vmem:[#allocation3 + $0xc8] sm:$0xff]
        %v648 = vld [vmem:[#allocation3 + $0xd0] sm:$0xff]
        %v649 = vld [vmem:[#allocation3 + $0xd8] sm:$0xff]
        %v650 = vld [vmem:[#allocation3 + $0xe0] sm:$0xff]
        %v651 = vld [vmem:[#allocation3 + $0xe8] sm:$0xff]
        %v652 = vld [vmem:[#allocation3 + $0xf0] sm:$0xff]
        %v653 = vld [vmem:[#allocation3 + $0xf8] sm:$0xff]
        %v654 = vld [vmem:[#allocation3 + $0x100] sm:$0xff]
        %v655 = vld [vmem:[#allocation3 + $0x108] sm:$0xff]
        %v656 = vld [vmem:[#allocation3 + $0x110] sm:$0xff]
        %v657 = vld [vmem:[#allocation3 + $0x118] sm:$0xff]
        %v658 = vld [vmem:[#allocation3 + $0x120] sm:$0xff]
        %v659 = vld [vmem:[#allocation3 + $0x128] sm:$0xff]
        %v660 = vld [vmem:[#allocation3 + $0x130] sm:$0xff]
        %v661 = vld [vmem:[#allocation3 + $0x138] sm:$0xff]
        %v662 = vld [vmem:[#allocation3 + $0x140] sm:$0xff]
        %v663 = vld [vmem:[#allocation3 + $0x148] sm:$0xff]
        %v664 = vld [vmem:[#allocation3 + $0x150] sm:$0xff]
        %v665 = vld [vmem:[#allocation3 + $0x158] sm:$0xff]
        %v666 = vld [vmem:[#allocation3 + $0x160] sm:$0xff]
        %v667 = vld [vmem:[#allocation3 + $0x168] sm:$0xff]
        %v668 = vld [vmem:[#allocation3 + $0x170] sm:$0xff]
        %v669 = vld [vmem:[#allocation3 + $0x178] sm:$0xff]
        %v670 = vld [vmem:[#allocation3 + $0x180] sm:$0xff]
        %v671 = vld [vmem:[#allocation3 + $0x188] sm:$0xff]
        %v672 = vld [vmem:[#allocation3 + $0x190] sm:$0xff]
        %v673 = vld [vmem:[#allocation3 + $0x198] sm:$0xff]
        %v674 = vld [vmem:[#allocation3 + $0x1a0] sm:$0xff]
        %v675 = vld [vmem:[#allocation3 + $0x1a8] sm:$0xff]
        %v676 = vld [vmem:[#allocation3 + $0x1b0] sm:$0xff]
        %v677 = vld [vmem:[#allocation3 + $0x1b8] sm:$0xff]
        %v678 = vld [vmem:[#allocation3 + $0x1c0] sm:$0xff]
        %v679 = vld [vmem:[#allocation3 + $0x1c8] sm:$0xff]
        %v680 = vld [vmem:[#allocation3 + $0x1d0] sm:$0xff]
        %v681 = vld [vmem:[#allocation3 + $0x1d8] sm:$0xff]
        %v682 = vld [vmem:[#allocation3 + $0x1e0] sm:$0xff]
        %v683 = vld [vmem:[#allocation3 + $0x1e8] sm:$0xff]
        %v684 = vld [vmem:[#allocation3 + $0x1f0] sm:$0xff]
        %v685 = vld [vmem:[#allocation3 + $0x1f8] sm:$0xff]
        %v686 = vld [vmem:[%s6] sm:$0xff]
        %v688 = vperm.slane %v686, 0
        %v689 = vperm.slane %v686, 1
        %v690 = vperm.slane %v686, 2
        %v691 = vperm.slane %v686, 3
        %v692 = vperm.slane %v686, 4
        %v693 = vperm.slane %v686, 5
        %v694 = vperm.slane %v686, 6
        %v695 = vperm.slane %v686, 7
        %v768 = vunpack.c.l.b16 %v622
        %v769 = vunpack.c.h.b16 %v622
        %v770 = vunpack.c.l.b16 %v623
        %v771 = vunpack.c.h.b16 %v623
        %v772 = vunpack.c.l.b16 %v624
        %v773 = vunpack.c.h.b16 %v624
        %v774 = vunpack.c.l.b16 %v625
        %v775 = vunpack.c.h.b16 %v625
        %v776 = vunpack.c.l.b16 %v626
        %v777 = vunpack.c.h.b16 %v626
        %v778 = vunpack.c.l.b16 %v627
        %v779 = vunpack.c.h.b16 %v627
        %v780 = vunpack.c.l.b16 %v628
        %v781 = vunpack.c.h.b16 %v628
        %v782 = vunpack.c.l.b16 %v629
        %v783 = vunpack.c.h.b16 %v629
        %v784 = vunpack.c.l.b16 %v630
        %v785 = vunpack.c.h.b16 %v630
        %v786 = vunpack.c.l.b16 %v631
        %v787 = vunpack.c.h.b16 %v631
        %v788 = vunpack.c.l.b16 %v632
        %v789 = vunpack.c.h.b16 %v632
        %v790 = vunpack.c.l.b16 %v633
        %v791 = vunpack.c.h.b16 %v633
        %v792 = vunpack.c.l.b16 %v634
        %v793 = vunpack.c.h.b16 %v634
        %v794 = vunpack.c.l.b16 %v635
        %v795 = vunpack.c.h.b16 %v635
        %v796 = vunpack.c.l.b16 %v636
        %v797 = vunpack.c.h.b16 %v636
        %v798 = vunpack.c.l.b16 %v637
        %v799 = vunpack.c.h.b16 %v637
        %v800 = vunpack.c.l.b16 %v638
        %v801 = vunpack.c.h.b16 %v638
        %v802 = vunpack.c.l.b16 %v639
        %v803 = vunpack.c.h.b16 %v639
        %v804 = vunpack.c.l.b16 %v640
        %v805 = vunpack.c.h.b16 %v640
        %v806 = vunpack.c.l.b16 %v641
        %v807 = vunpack.c.h.b16 %v641
        %v808 = vunpack.c.l.b16 %v642
        %v809 = vunpack.c.h.b16 %v642
        %v810 = vunpack.c.l.b16 %v643
        %v811 = vunpack.c.h.b16 %v643
        %v812 = vunpack.c.l.b16 %v644
        %v813 = vunpack.c.h.b16 %v644
        %v814 = vunpack.c.l.b16 %v645
        %v815 = vunpack.c.h.b16 %v645
        %v816 = vunpack.c.l.b16 %v646
        %v817 = vunpack.c.h.b16 %v646
        %v818 = vunpack.c.l.b16 %v647
        %v819 = vunpack.c.h.b16 %v647
        %v820 = vunpack.c.l.b16 %v648
        %v821 = vunpack.c.h.b16 %v648
        %v822 = vunpack.c.l.b16 %v649
        %v823 = vunpack.c.h.b16 %v649
        %v824 = vunpack.c.l.b16 %v650
        %v825 = vunpack.c.h.b16 %v650
        %v826 = vunpack.c.l.b16 %v651
        %v827 = vunpack.c.h.b16 %v651
        %v828 = vunpack.c.l.b16 %v652
        %v829 = vunpack.c.h.b16 %v652
        %v830 = vunpack.c.l.b16 %v653
        %v831 = vunpack.c.h.b16 %v653
        %v832 = vunpack.c.l.b16 %v654
        %v833 = vunpack.c.h.b16 %v654
        %v834 = vunpack.c.l.b16 %v655
        %v835 = vunpack.c.h.b16 %v655
        %v836 = vunpack.c.l.b16 %v656
        %v837 = vunpack.c.h.b16 %v656
        %v838 = vunpack.c.l.b16 %v657
        %v839 = vunpack.c.h.b16 %v657
        %v840 = vunpack.c.l.b16 %v658
        %v841 = vunpack.c.h.b16 %v658
        %v842 = vunpack.c.l.b16 %v659
        %v843 = vunpack.c.h.b16 %v659
        %v844 = vunpack.c.l.b16 %v660
        %v845 = vunpack.c.h.b16 %v660
        %v846 = vunpack.c.l.b16 %v661
        %v847 = vunpack.c.h.b16 %v661
        %v848 = vunpack.c.l.b16 %v662
        %v849 = vunpack.c.h.b16 %v662
        %v850 = vunpack.c.l.b16 %v663
        %v851 = vunpack.c.h.b16 %v663
        %v852 = vunpack.c.l.b16 %v664
        %v853 = vunpack.c.h.b16 %v664
        %v854 = vunpack.c.l.b16 %v665
        %v855 = vunpack.c.h.b16 %v665
        %v856 = vunpack.c.l.b16 %v666
        %v857 = vunpack.c.h.b16 %v666
        %v858 = vunpack.c.l.b16 %v667
        %v859 = vunpack.c.h.b16 %v667
        %v860 = vunpack.c.l.b16 %v668
        %v861 = vunpack.c.h.b16 %v668
        %v862 = vunpack.c.l.b16 %v669
        %v863 = vunpack.c.h.b16 %v669
        %v864 = vunpack.c.l.b16 %v670
        %v865 = vunpack.c.h.b16 %v670
        %v866 = vunpack.c.l.b16 %v671
        %v867 = vunpack.c.h.b16 %v671
        %v868 = vunpack.c.l.b16 %v672
        %v869 = vunpack.c.h.b16 %v672
        %v870 = vunpack.c.l.b16 %v673
        %v871 = vunpack.c.h.b16 %v673
        %v872 = vunpack.c.l.b16 %v674
        %v873 = vunpack.c.h.b16 %v674
        %v874 = vunpack.c.l.b16 %v675
        %v875 = vunpack.c.h.b16 %v675
        %v876 = vunpack.c.l.b16 %v676
        %v877 = vunpack.c.h.b16 %v676
        %v878 = vunpack.c.l.b16 %v677
        %v879 = vunpack.c.h.b16 %v677
        %v880 = vunpack.c.l.b16 %v678
        %v881 = vunpack.c.h.b16 %v678
        %v882 = vunpack.c.l.b16 %v679
        %v883 = vunpack.c.h.b16 %v679
        %v884 = vunpack.c.l.b16 %v680
        %v885 = vunpack.c.h.b16 %v680
        %v886 = vunpack.c.l.b16 %v681
        %v887 = vunpack.c.h.b16 %v681
        %v888 = vunpack.c.l.b16 %v682
        %v889 = vunpack.c.h.b16 %v682
        %v890 = vunpack.c.l.b16 %v683
        %v891 = vunpack.c.h.b16 %v683
        %v892 = vunpack.c.l.b16 %v684
        %v893 = vunpack.c.h.b16 %v684
        %v894 = vunpack.c.l.b16 %v685
        %v895 = vunpack.c.h.b16 %v685
        %v896 = vpack.c.b16 %v776, %v768
        %v897 = vpack.c.b16 %v777, %v769
        %v898 = vpack.c.b16 %v778, %v770
        %v899 = vpack.c.b16 %v779, %v771
        %v900 = vpack.c.b16 %v780, %v772
        %v901 = vpack.c.b16 %v781, %v773
        %v902 = vpack.c.b16 %v782, %v774
        %v903 = vpack.c.b16 %v783, %v775
        %v904 = vpack.c.b16 %v792, %v784
        %v905 = vpack.c.b16 %v793, %v785
        %v906 = vpack.c.b16 %v794, %v786
        %v907 = vpack.c.b16 %v795, %v787
        %v908 = vpack.c.b16 %v796, %v788
        %v909 = vpack.c.b16 %v797, %v789
        %v910 = vpack.c.b16 %v798, %v790
        %v911 = vpack.c.b16 %v799, %v791
        %v912 = vpack.c.b16 %v808, %v800
        %v913 = vpack.c.b16 %v809, %v801
        %v914 = vpack.c.b16 %v810, %v802
        %v915 = vpack.c.b16 %v811, %v803
        %v916 = vpack.c.b16 %v812, %v804
        %v917 = vpack.c.b16 %v813, %v805
        %v918 = vpack.c.b16 %v814, %v806
        %v919 = vpack.c.b16 %v815, %v807
        %v920 = vpack.c.b16 %v824, %v816
        %v921 = vpack.c.b16 %v825, %v817
        %v922 = vpack.c.b16 %v826, %v818
        %v923 = vpack.c.b16 %v827, %v819
        %v924 = vpack.c.b16 %v828, %v820
        %v925 = vpack.c.b16 %v829, %v821
        %v926 = vpack.c.b16 %v830, %v822
        %v927 = vpack.c.b16 %v831, %v823
        %v928 = vpack.c.b16 %v840, %v832
        %v929 = vpack.c.b16 %v841, %v833
        %v930 = vpack.c.b16 %v842, %v834
        %v931 = vpack.c.b16 %v843, %v835
        %v932 = vpack.c.b16 %v844, %v836
        %v933 = vpack.c.b16 %v845, %v837
        %v934 = vpack.c.b16 %v846, %v838
        %v935 = vpack.c.b16 %v847, %v839
        %v936 = vpack.c.b16 %v856, %v848
        %v937 = vpack.c.b16 %v857, %v849
        %v938 = vpack.c.b16 %v858, %v850
        %v939 = vpack.c.b16 %v859, %v851
        %v940 = vpack.c.b16 %v860, %v852
        %v941 = vpack.c.b16 %v861, %v853
        %v942 = vpack.c.b16 %v862, %v854
        %v943 = vpack.c.b16 %v863, %v855
        %v944 = vpack.c.b16 %v872, %v864
        %v945 = vpack.c.b16 %v873, %v865
        %v946 = vpack.c.b16 %v874, %v866
        %v947 = vpack.c.b16 %v875, %v867
        %v948 = vpack.c.b16 %v876, %v868
        %v949 = vpack.c.b16 %v877, %v869
        %v950 = vpack.c.b16 %v878, %v870
        %v951 = vpack.c.b16 %v879, %v871
        %v952 = vpack.c.b16 %v888, %v880
        %v953 = vpack.c.b16 %v889, %v881
        %v954 = vpack.c.b16 %v890, %v882
        %v955 = vpack.c.b16 %v891, %v883
        %v956 = vpack.c.b16 %v892, %v884
        %v957 = vpack.c.b16 %v893, %v885
        %v958 = vpack.c.b16 %v894, %v886
        %v959 = vpack.c.b16 %v895, %v887
        %1024 = vmatpush.bf16.msra.mxu0 %v952
        %1025 = vmatpush.bf16.msra.mxu0 %v944
        %1026 = vmatpush.bf16.msra.mxu0 %v936
        %1027 = vmatpush.bf16.msra.mxu0 %v928
        %1028 = vmatpush.bf16.msra.mxu0 %v920
        %1029 = vmatpush.bf16.msra.mxu0 %v912
        %1030 = vmatpush.bf16.msra.mxu0 %v904
        %1031 = vmatpush.bf16.msra.mxu0 %v896
        %1032 = vmatmul.bf16.gmra.mxu0 %v621
        %v1033 = vpop.f32.mrf.mxu0
        %v1034 = vadd.f32 %v688, %v1033
        %v1035 = vpop.f32.mrf.mxu0
        %v1036 = vadd.f32 %v688, %v1035
        %1037 = vdwg.mxu0
        %1038 = vmatpush.bf16.msra.mxu0 %v953
        %1039 = vmatpush.bf16.msra.mxu0 %v945
        %1040 = vmatpush.bf16.msra.mxu0 %v937
        %1041 = vmatpush.bf16.msra.mxu0 %v929
        %1042 = vmatpush.bf16.msra.mxu0 %v921
        %1043 = vmatpush.bf16.msra.mxu0 %v913
        %1044 = vmatpush.bf16.msra.mxu0 %v905
        %1045 = vmatpush.bf16.msra.mxu0 %v897
        %1046 = vmatmul.bf16.gmra.mxu0 %v621
        %v1047 = vpop.f32.mrf.mxu0
        %v1048 = vadd.f32 %v689, %v1047
        %v1049 = vpop.f32.mrf.mxu0
        %v1050 = vadd.f32 %v689, %v1049
        %1051 = vdwg.mxu0
        %1052 = vmatpush.bf16.msra.mxu0 %v954
        %1053 = vmatpush.bf16.msra.mxu0 %v946
        %1054 = vmatpush.bf16.msra.mxu0 %v938
        %1055 = vmatpush.bf16.msra.mxu0 %v930
        %1056 = vmatpush.bf16.msra.mxu0 %v922
        %1057 = vmatpush.bf16.msra.mxu0 %v914
        %1058 = vmatpush.bf16.msra.mxu0 %v906
        %1059 = vmatpush.bf16.msra.mxu0 %v898
        %1060 = vmatmul.bf16.gmra.mxu0 %v621
        %v1061 = vpop.f32.mrf.mxu0
        %v1062 = vadd.f32 %v690, %v1061
        %v1063 = vpop.f32.mrf.mxu0
        %v1064 = vadd.f32 %v690, %v1063
        %1065 = vdwg.mxu0
        %1066 = vmatpush.bf16.msra.mxu0 %v955
        %1067 = vmatpush.bf16.msra.mxu0 %v947
        %1068 = vmatpush.bf16.msra.mxu0 %v939
        %1069 = vmatpush.bf16.msra.mxu0 %v931
        %1070 = vmatpush.bf16.msra.mxu0 %v923
        %1071 = vmatpush.bf16.msra.mxu0 %v915
        %1072 = vmatpush.bf16.msra.mxu0 %v907
        %1073 = vmatpush.bf16.msra.mxu0 %v899
        %1074 = vmatmul.bf16.gmra.mxu0 %v621
        %v1075 = vpop.f32.mrf.mxu0
        %v1076 = vadd.f32 %v691, %v1075
        %v1077 = vpop.f32.mrf.mxu0
        %v1078 = vadd.f32 %v691, %v1077
        %1079 = vdwg.mxu0
        %1080 = vmatpush.bf16.msra.mxu0 %v956
        %1081 = vmatpush.bf16.msra.mxu0 %v948
        %1082 = vmatpush.bf16.msra.mxu0 %v940
        %1083 = vmatpush.bf16.msra.mxu0 %v932
        %1084 = vmatpush.bf16.msra.mxu0 %v924
        %1085 = vmatpush.bf16.msra.mxu0 %v916
        %1086 = vmatpush.bf16.msra.mxu0 %v908
        %1087 = vmatpush.bf16.msra.mxu0 %v900
        %1088 = vmatmul.bf16.gmra.mxu0 %v621
        %v1089 = vpop.f32.mrf.mxu0
        %v1090 = vadd.f32 %v692, %v1089
        %v1091 = vpop.f32.mrf.mxu0
        %v1092 = vadd.f32 %v692, %v1091
        %1093 = vdwg.mxu0
        %1094 = vmatpush.bf16.msra.mxu0 %v957
        %1095 = vmatpush.bf16.msra.mxu0 %v949
        %1096 = vmatpush.bf16.msra.mxu0 %v941
        %1097 = vmatpush.bf16.msra.mxu0 %v933
        %1098 = vmatpush.bf16.msra.mxu0 %v925
        %1099 = vmatpush.bf16.msra.mxu0 %v917
        %1100 = vmatpush.bf16.msra.mxu0 %v909
        %1101 = vmatpush.bf16.msra.mxu0 %v901
        %1102 = vmatmul.bf16.gmra.mxu0 %v621
        %v1103 = vpop.f32.mrf.mxu0
        %v1104 = vadd.f32 %v693, %v1103
        %v1105 = vpop.f32.mrf.mxu0
        %v1106 = vadd.f32 %v693, %v1105
        %1107 = vdwg.mxu0
        %1108 = vmatpush.bf16.msra.mxu0 %v958
        %1109 = vmatpush.bf16.msra.mxu0 %v950
        %1110 = vmatpush.bf16.msra.mxu0 %v942
        %1111 = vmatpush.bf16.msra.mxu0 %v934
        %1112 = vmatpush.bf16.msra.mxu0 %v926
        %1113 = vmatpush.bf16.msra.mxu0 %v918
        %1114 = vmatpush.bf16.msra.mxu0 %v910
        %1115 = vmatpush.bf16.msra.mxu0 %v902
        %1116 = vmatmul.bf16.gmra.mxu0 %v621
        %v1117 = vpop.f32.mrf.mxu0
        %v1118 = vadd.f32 %v694, %v1117
        %v1119 = vpop.f32.mrf.mxu0
        %v1120 = vadd.f32 %v694, %v1119
        %1121 = vdwg.mxu0
        %1122 = vmatpush.bf16.msra.mxu0 %v959
        %1123 = vmatpush.bf16.msra.mxu0 %v951
        %1124 = vmatpush.bf16.msra.mxu0 %v943
        %1125 = vmatpush.bf16.msra.mxu0 %v935
        %1126 = vmatpush.bf16.msra.mxu0 %v927
        %1127 = vmatpush.bf16.msra.mxu0 %v919
        %1128 = vmatpush.bf16.msra.mxu0 %v911
        %1129 = vmatpush.bf16.msra.mxu0 %v903
        %1130 = vmatmul.bf16.gmra.mxu0 %v621
        %v1131 = vpop.f32.mrf.mxu0
        %v1132 = vadd.f32 %v695, %v1131
        %v1133 = vpop.f32.mrf.mxu0
        %v1134 = vadd.f32 %v695, %v1133
        %1135 = vdwg.mxu0
        %v1136 = vmax.f32 %v1034, 0.0
        %v1137 = vmax.f32 %v1048, 0.0
        %v1138 = vmax.f32 %v1062, 0.0
        %v1139 = vmax.f32 %v1076, 0.0
        %v1140 = vmax.f32 %v1090, 0.0
        %v1141 = vmax.f32 %v1104, 0.0
        %v1142 = vmax.f32 %v1118, 0.0
        %v1143 = vmax.f32 %v1132, 0.0
        %v1144 = vmax.f32 %v1036, 0.0
        %v1145 = vmax.f32 %v1050, 0.0
        %v1146 = vmax.f32 %v1064, 0.0
        %v1147 = vmax.f32 %v1078, 0.0
        %v1148 = vmax.f32 %v1092, 0.0
        %v1149 = vmax.f32 %v1106, 0.0
        %v1150 = vmax.f32 %v1120, 0.0
        %v1151 = vmax.f32 %v1134, 0.0
        %v1152 = vmax.f32 %v1136, %v1144
        %v1153 = vmax.f32 %v1137, %v1145
        %v1154 = vmax.f32 %v1138, %v1146
        %v1155 = vmax.f32 %v1139, %v1147
        %v1156 = vmax.f32 %v1140, %v1148
        %v1157 = vmax.f32 %v1141, %v1149
        %v1158 = vmax.f32 %v1142, %v1150
        %v1159 = vmax.f32 %v1143, %v1151
        %v1160 = vld [vmem:[#allocation2] sm:$0xff]
        %v1161 = vld [vmem:[#allocation2 + $0x8] sm:$0xff]
        %v1162 = vld [vmem:[#allocation2 + $0x10] sm:$0xff]
        %v1163 = vld [vmem:[#allocation2 + $0x18] sm:$0xff]
        %v1164 = vld [vmem:[#allocation2 + $0x20] sm:$0xff]
        %v1165 = vld [vmem:[#allocation2 + $0x28] sm:$0xff]
        %v1166 = vld [vmem:[#allocation2 + $0x30] sm:$0xff]
        %v1167 = vld [vmem:[#allocation2 + $0x38] sm:$0xff]
        %v1168 = vmax.f32 %v1160, %v1152
        %v1169 = vmax.f32 %v1161, %v1153
        %v1170 = vmax.f32 %v1162, %v1154
        %v1171 = vmax.f32 %v1163, %v1155
        %v1172 = vmax.f32 %v1164, %v1156
        %v1173 = vmax.f32 %v1165, %v1157
        %v1174 = vmax.f32 %v1166, %v1158
        %v1175 = vmax.f32 %v1167, %v1159
        %1176 = vst [vmem:[#allocation2] sm:$0xff] %v1168
        %1177 = vst [vmem:[#allocation2 + $0x8] sm:$0xff] %v1169
        %1178 = vst [vmem:[#allocation2 + $0x10] sm:$0xff] %v1170
        %1179 = vst [vmem:[#allocation2 + $0x18] sm:$0xff] %v1171
        %1180 = vst [vmem:[#allocation2 + $0x20] sm:$0xff] %v1172
        %1181 = vst [vmem:[#allocation2 + $0x28] sm:$0xff] %v1173
        %1182 = vst [vmem:[#allocation2 + $0x30] sm:$0xff] %v1174
        %1183 = vst [vmem:[#allocation2 + $0x38] sm:$0xff] %v1175
        // Predicated region
        $region89: #{tpu_custom_call.1} parent=71 // pred_check
          %p1184 = pneg %p517
        $region90: #{tpu_custom_call.1} parent=71 // pred_check_branch
          %1186 = sbr.rel (%p1184) target = $region92
        $region91: #{tpu_custom_call.1} parent=71 // pred_region
          %v1187 = vld [vmem:[#allocation2] sm:$0xff]
          %v1188 = vld [vmem:[#allocation2 + $0x8] sm:$0xff]
          %v1189 = vld [vmem:[#allocation2 + $0x10] sm:$0xff]
          %v1190 = vld [vmem:[#allocation2 + $0x18] sm:$0xff]
          %v1191 = vld [vmem:[#allocation2 + $0x20] sm:$0xff]
          %v1192 = vld [vmem:[#allocation2 + $0x28] sm:$0xff]
          %v1193 = vld [vmem:[#allocation2 + $0x30] sm:$0xff]
          %v1194 = vld [vmem:[#allocation2 + $0x38] sm:$0xff]
          %v1195 = vrot.slane %v1187, 4
          %v1196 = vmax.f32 %v1187, %v1195
          %v1197 = vrot.slane %v1196, 2
          %v1198 = vmax.f32 %v1196, %v1197
          %v1199 = vrot.slane %v1198, 1
          %v1200 = vmax.f32 %v1198, %v1199
          %v1201 = vrot.slane %v1188, 4
          %v1202 = vmax.f32 %v1188, %v1201
          %v1203 = vrot.slane %v1202, 2
          %v1204 = vmax.f32 %v1202, %v1203
          %v1205 = vrot.slane %v1204, 1
          %v1206 = vmax.f32 %v1204, %v1205
          %v1207 = vrot.slane %v1189, 4
          %v1208 = vmax.f32 %v1189, %v1207
          %v1209 = vrot.slane %v1208, 2
          %v1210 = vmax.f32 %v1208, %v1209
          %v1211 = vrot.slane %v1210, 1
          %v1212 = vmax.f32 %v1210, %v1211
          %v1213 = vrot.slane %v1190, 4
          %v1214 = vmax.f32 %v1190, %v1213
          %v1215 = vrot.slane %v1214, 2
          %v1216 = vmax.f32 %v1214, %v1215
          %v1217 = vrot.slane %v1216, 1
          %v1218 = vmax.f32 %v1216, %v1217
          %v1219 = vrot.slane %v1191, 4
          %v1220 = vmax.f32 %v1191, %v1219
          %v1221 = vrot.slane %v1220, 2
          %v1222 = vmax.f32 %v1220, %v1221
          %v1223 = vrot.slane %v1222, 1
          %v1224 = vmax.f32 %v1222, %v1223
          %v1225 = vrot.slane %v1192, 4
          %v1226 = vmax.f32 %v1192, %v1225
          %v1227 = vrot.slane %v1226, 2
          %v1228 = vmax.f32 %v1226, %v1227
          %v1229 = vrot.slane %v1228, 1
          %v1230 = vmax.f32 %v1228, %v1229
          %v1231 = vrot.slane %v1193, 4
          %v1232 = vmax.f32 %v1193, %v1231
          %v1233 = vrot.slane %v1232, 2
          %v1234 = vmax.f32 %v1232, %v1233
          %v1235 = vrot.slane %v1234, 1
          %v1236 = vmax.f32 %v1234, %v1235
          %v1237 = vrot.slane %v1194, 4
          %v1238 = vmax.f32 %v1194, %v1237
          %v1239 = vrot.slane %v1238, 2
          %v1240 = vmax.f32 %v1238, %v1239
          %v1241 = vrot.slane %v1240, 1
          %v1242 = vmax.f32 %v1240, %v1241
          %v1243 = vpack.c.bf16 %v1200, %v1200
          %v1244 = vpack.c.bf16 %v1206, %v1206
          %v1245 = vpack.c.bf16 %v1212, %v1212
          %v1246 = vpack.c.bf16 %v1218, %v1218
          %v1247 = vpack.c.bf16 %v1224, %v1224
          %v1248 = vpack.c.bf16 %v1230, %v1230
          %v1249 = vpack.c.bf16 %v1236, %v1236
          %v1250 = vpack.c.bf16 %v1242, %v1242
          %v1251 = vld [vmem:[#allocation6] sm:$0xff]
          %v1252 = vld [vmem:[#allocation6 + $0x8] sm:$0xff]
          %v1253 = vld [vmem:[#allocation6 + $0x10] sm:$0xff]
          %v1254 = vld [vmem:[#allocation6 + $0x18] sm:$0xff]
          %v1255 = vld [vmem:[#allocation6 + $0x20] sm:$0xff]
          %v1256 = vld [vmem:[#allocation6 + $0x28] sm:$0xff]
          %v1257 = vld [vmem:[#allocation6 + $0x30] sm:$0xff]
          %v1258 = vld [vmem:[#allocation6 + $0x38] sm:$0xff]
          %v1259 = vld [vmem:[#allocation6 + $0x40] sm:$0xff]
          %v1260 = vld [vmem:[#allocation6 + $0x48] sm:$0xff]
          %v1261 = vld [vmem:[#allocation6 + $0x50] sm:$0xff]
          %v1262 = vld [vmem:[#allocation6 + $0x58] sm:$0xff]
          %v1263 = vld [vmem:[#allocation6 + $0x60] sm:$0xff]
          %v1264 = vld [vmem:[#allocation6 + $0x68] sm:$0xff]
          %v1265 = vld [vmem:[#allocation6 + $0x70] sm:$0xff]
          %v1266 = vld [vmem:[#allocation6 + $0x78] sm:$0xff]
          %v1267 = vld [vmem:[#allocation6 + $0x80] sm:$0xff]
          %v1268 = vld [vmem:[#allocation6 + $0x88] sm:$0xff]
          %v1269 = vld [vmem:[#allocation6 + $0x90] sm:$0xff]
          %v1270 = vld [vmem:[#allocation6 + $0x98] sm:$0xff]
          %v1271 = vld [vmem:[#allocation6 + $0xa0] sm:$0xff]
          %v1272 = vld [vmem:[#allocation6 + $0xa8] sm:$0xff]
          %v1273 = vld [vmem:[#allocation6 + $0xb0] sm:$0xff]
          %v1274 = vld [vmem:[#allocation6 + $0xb8] sm:$0xff]
          %v1275 = vld [vmem:[#allocation6 + $0xc0] sm:$0xff]
          %v1276 = vld [vmem:[#allocation6 + $0xc8] sm:$0xff]
          %v1277 = vld [vmem:[#allocation6 + $0xd0] sm:$0xff]
          %v1278 = vld [vmem:[#allocation6 + $0xd8] sm:$0xff]
          %v1279 = vld [vmem:[#allocation6 + $0xe0] sm:$0xff]
          %v1280 = vld [vmem:[#allocation6 + $0xe8] sm:$0xff]
          %v1281 = vld [vmem:[#allocation6 + $0xf0] sm:$0xff]
          %v1282 = vld [vmem:[#allocation6 + $0xf8] sm:$0xff]
          %v1283 = vld [vmem:[#allocation6 + $0x100] sm:$0xff]
          %v1284 = vld [vmem:[#allocation6 + $0x108] sm:$0xff]
          %v1285 = vld [vmem:[#allocation6 + $0x110] sm:$0xff]
          %v1286 = vld [vmem:[#allocation6 + $0x118] sm:$0xff]
          %v1287 = vld [vmem:[#allocation6 + $0x120] sm:$0xff]
          %v1288 = vld [vmem:[#allocation6 + $0x128] sm:$0xff]
          %v1289 = vld [vmem:[#allocation6 + $0x130] sm:$0xff]
          %v1290 = vld [vmem:[#allocation6 + $0x138] sm:$0xff]
          %v1291 = vld [vmem:[#allocation6 + $0x140] sm:$0xff]
          %v1292 = vld [vmem:[#allocation6 + $0x148] sm:$0xff]
          %v1293 = vld [vmem:[#allocation6 + $0x150] sm:$0xff]
          %v1294 = vld [vmem:[#allocation6 + $0x158] sm:$0xff]
          %v1295 = vld [vmem:[#allocation6 + $0x160] sm:$0xff]
          %v1296 = vld [vmem:[#allocation6 + $0x168] sm:$0xff]
          %v1297 = vld [vmem:[#allocation6 + $0x170] sm:$0xff]
          %v1298 = vld [vmem:[#allocation6 + $0x178] sm:$0xff]
          %v1299 = vld [vmem:[#allocation6 + $0x180] sm:$0xff]
          %v1300 = vld [vmem:[#allocation6 + $0x188] sm:$0xff]
          %v1301 = vld [vmem:[#allocation6 + $0x190] sm:$0xff]
          %v1302 = vld [vmem:[#allocation6 + $0x198] sm:$0xff]
          %v1303 = vld [vmem:[#allocation6 + $0x1a0] sm:$0xff]
          %v1304 = vld [vmem:[#allocation6 + $0x1a8] sm:$0xff]
          %v1305 = vld [vmem:[#allocation6 + $0x1b0] sm:$0xff]
          %v1306 = vld [vmem:[#allocation6 + $0x1b8] sm:$0xff]
          %v1307 = vld [vmem:[#allocation6 + $0x1c0] sm:$0xff]
          %v1308 = vld [vmem:[#allocation6 + $0x1c8] sm:$0xff]
          %v1309 = vld [vmem:[#allocation6 + $0x1d0] sm:$0xff]
          %v1310 = vld [vmem:[#allocation6 + $0x1d8] sm:$0xff]
          %v1311 = vld [vmem:[#allocation6 + $0x1e0] sm:$0xff]
          %v1312 = vld [vmem:[#allocation6 + $0x1e8] sm:$0xff]
          %v1313 = vld [vmem:[#allocation6 + $0x1f0] sm:$0xff]
          %v1314 = vld [vmem:[#allocation6 + $0x1f8] sm:$0xff]
          %v1315 = vld [vmem:[#allocation6 + $0x200] sm:$0xff]
          %v1316 = vld [vmem:[#allocation6 + $0x208] sm:$0xff]
          %v1317 = vld [vmem:[#allocation6 + $0x210] sm:$0xff]
          %v1318 = vld [vmem:[#allocation6 + $0x218] sm:$0xff]
          %v1319 = vld [vmem:[#allocation6 + $0x220] sm:$0xff]
          %v1320 = vld [vmem:[#allocation6 + $0x228] sm:$0xff]
          %v1321 = vld [vmem:[#allocation6 + $0x230] sm:$0xff]
          %v1322 = vld [vmem:[#allocation6 + $0x238] sm:$0xff]
          %v1323 = vld [vmem:[#allocation6 + $0x240] sm:$0xff]
          %v1324 = vld [vmem:[#allocation6 + $0x248] sm:$0xff]
          %v1325 = vld [vmem:[#allocation6 + $0x250] sm:$0xff]
          %v1326 = vld [vmem:[#allocation6 + $0x258] sm:$0xff]
          %v1327 = vld [vmem:[#allocation6 + $0x260] sm:$0xff]
          %v1328 = vld [vmem:[#allocation6 + $0x268] sm:$0xff]
          %v1329 = vld [vmem:[#allocation6 + $0x270] sm:$0xff]
          %v1330 = vld [vmem:[#allocation6 + $0x278] sm:$0xff]
          %v1331 = vld [vmem:[#allocation6 + $0x280] sm:$0xff]
          %v1332 = vld [vmem:[#allocation6 + $0x288] sm:$0xff]
          %v1333 = vld [vmem:[#allocation6 + $0x290] sm:$0xff]
          %v1334 = vld [vmem:[#allocation6 + $0x298] sm:$0xff]
          %v1335 = vld [vmem:[#allocation6 + $0x2a0] sm:$0xff]
          %v1336 = vld [vmem:[#allocation6 + $0x2a8] sm:$0xff]
          %v1337 = vld [vmem:[#allocation6 + $0x2b0] sm:$0xff]
          %v1338 = vld [vmem:[#allocation6 + $0x2b8] sm:$0xff]
          %v1339 = vld [vmem:[#allocation6 + $0x2c0] sm:$0xff]
          %v1340 = vld [vmem:[#allocation6 + $0x2c8] sm:$0xff]
          %v1341 = vld [vmem:[#allocation6 + $0x2d0] sm:$0xff]
          %v1342 = vld [vmem:[#allocation6 + $0x2d8] sm:$0xff]
          %v1343 = vld [vmem:[#allocation6 + $0x2e0] sm:$0xff]
          %v1344 = vld [vmem:[#allocation6 + $0x2e8] sm:$0xff]
          %v1345 = vld [vmem:[#allocation6 + $0x2f0] sm:$0xff]
          %v1346 = vld [vmem:[#allocation6 + $0x2f8] sm:$0xff]
          %v1347 = vld [vmem:[#allocation6 + $0x300] sm:$0xff]
          %v1348 = vld [vmem:[#allocation6 + $0x308] sm:$0xff]
          %v1349 = vld [vmem:[#allocation6 + $0x310] sm:$0xff]
          %v1350 = vld [vmem:[#allocation6 + $0x318] sm:$0xff]
          %v1351 = vld [vmem:[#allocation6 + $0x320] sm:$0xff]
          %v1352 = vld [vmem:[#allocation6 + $0x328] sm:$0xff]
          %v1353 = vld [vmem:[#allocation6 + $0x330] sm:$0xff]
          %v1354 = vld [vmem:[#allocation6 + $0x338] sm:$0xff]
          %v1355 = vld [vmem:[#allocation6 + $0x340] sm:$0xff]
          %v1356 = vld [vmem:[#allocation6 + $0x348] sm:$0xff]
          %v1357 = vld [vmem:[#allocation6 + $0x350] sm:$0xff]
          %v1358 = vld [vmem:[#allocation6 + $0x358] sm:$0xff]
          %v1359 = vld [vmem:[#allocation6 + $0x360] sm:$0xff]
          %v1360 = vld [vmem:[#allocation6 + $0x368] sm:$0xff]
          %v1361 = vld [vmem:[#allocation6 + $0x370] sm:$0xff]
          %v1362 = vld [vmem:[#allocation6 + $0x378] sm:$0xff]
          %v1363 = vld [vmem:[#allocation6 + $0x380] sm:$0xff]
          %v1364 = vld [vmem:[#allocation6 + $0x388] sm:$0xff]
          %v1365 = vld [vmem:[#allocation6 + $0x390] sm:$0xff]
          %v1366 = vld [vmem:[#allocation6 + $0x398] sm:$0xff]
          %v1367 = vld [vmem:[#allocation6 + $0x3a0] sm:$0xff]
          %v1368 = vld [vmem:[#allocation6 + $0x3a8] sm:$0xff]
          %v1369 = vld [vmem:[#allocation6 + $0x3b0] sm:$0xff]
          %v1370 = vld [vmem:[#allocation6 + $0x3b8] sm:$0xff]
          %v1371 = vld [vmem:[#allocation6 + $0x3c0] sm:$0xff]
          %v1372 = vld [vmem:[#allocation6 + $0x3c8] sm:$0xff]
          %v1373 = vld [vmem:[#allocation6 + $0x3d0] sm:$0xff]
          %v1374 = vld [vmem:[#allocation6 + $0x3d8] sm:$0xff]
          %v1375 = vld [vmem:[#allocation6 + $0x3e0] sm:$0xff]
          %v1376 = vld [vmem:[#allocation6 + $0x3e8] sm:$0xff]
          %v1377 = vld [vmem:[#allocation6 + $0x3f0] sm:$0xff]
          %v1378 = vld [vmem:[#allocation6 + $0x3f8] sm:$0xff]
          %v1379 = vld [vmem:[#allocation6 + $0x400] sm:$0xff]
          %v1380 = vld [vmem:[#allocation6 + $0x408] sm:$0xff]
          %v1381 = vld [vmem:[#allocation6 + $0x410] sm:$0xff]
          %v1382 = vld [vmem:[#allocation6 + $0x418] sm:$0xff]
          %v1383 = vld [vmem:[#allocation6 + $0x420] sm:$0xff]
          %v1384 = vld [vmem:[#allocation6 + $0x428] sm:$0xff]
          %v1385 = vld [vmem:[#allocation6 + $0x430] sm:$0xff]
          %v1386 = vld [vmem:[#allocation6 + $0x438] sm:$0xff]
          %v1387 = vld [vmem:[#allocation6 + $0x440] sm:$0xff]
          %v1388 = vld [vmem:[#allocation6 + $0x448] sm:$0xff]
          %v1389 = vld [vmem:[#allocation6 + $0x450] sm:$0xff]
          %v1390 = vld [vmem:[#allocation6 + $0x458] sm:$0xff]
          %v1391 = vld [vmem:[#allocation6 + $0x460] sm:$0xff]
          %v1392 = vld [vmem:[#allocation6 + $0x468] sm:$0xff]
          %v1393 = vld [vmem:[#allocation6 + $0x470] sm:$0xff]
          %v1394 = vld [vmem:[#allocation6 + $0x478] sm:$0xff]
          %v1395 = vld [vmem:[#allocation6 + $0x480] sm:$0xff]
          %v1396 = vld [vmem:[#allocation6 + $0x488] sm:$0xff]
          %v1397 = vld [vmem:[#allocation6 + $0x490] sm:$0xff]
          %v1398 = vld [vmem:[#allocation6 + $0x498] sm:$0xff]
          %v1399 = vld [vmem:[#allocation6 + $0x4a0] sm:$0xff]
          %v1400 = vld [vmem:[#allocation6 + $0x4a8] sm:$0xff]
          %v1401 = vld [vmem:[#allocation6 + $0x4b0] sm:$0xff]
          %v1402 = vld [vmem:[#allocation6 + $0x4b8] sm:$0xff]
          %v1403 = vld [vmem:[#allocation6 + $0x4c0] sm:$0xff]
          %v1404 = vld [vmem:[#allocation6 + $0x4c8] sm:$0xff]
          %v1405 = vld [vmem:[#allocation6 + $0x4d0] sm:$0xff]
          %v1406 = vld [vmem:[#allocation6 + $0x4d8] sm:$0xff]
          %v1407 = vld [vmem:[#allocation6 + $0x4e0] sm:$0xff]
          %v1408 = vld [vmem:[#allocation6 + $0x4e8] sm:$0xff]
          %v1409 = vld [vmem:[#allocation6 + $0x4f0] sm:$0xff]
          %v1410 = vld [vmem:[#allocation6 + $0x4f8] sm:$0xff]
          %v1411 = vld [vmem:[#allocation6 + $0x500] sm:$0xff]
          %v1412 = vld [vmem:[#allocation6 + $0x508] sm:$0xff]
          %v1413 = vld [vmem:[#allocation6 + $0x510] sm:$0xff]
          %v1414 = vld [vmem:[#allocation6 + $0x518] sm:$0xff]
          %v1415 = vld [vmem:[#allocation6 + $0x520] sm:$0xff]
          %v1416 = vld [vmem:[#allocation6 + $0x528] sm:$0xff]
          %v1417 = vld [vmem:[#allocation6 + $0x530] sm:$0xff]
          %v1418 = vld [vmem:[#allocation6 + $0x538] sm:$0xff]
          %v1419 = vld [vmem:[#allocation6 + $0x540] sm:$0xff]
          %v1420 = vld [vmem:[#allocation6 + $0x548] sm:$0xff]
          %v1421 = vld [vmem:[#allocation6 + $0x550] sm:$0xff]
          %v1422 = vld [vmem:[#allocation6 + $0x558] sm:$0xff]
          %v1423 = vld [vmem:[#allocation6 + $0x560] sm:$0xff]
          %v1424 = vld [vmem:[#allocation6 + $0x568] sm:$0xff]
          %v1425 = vld [vmem:[#allocation6 + $0x570] sm:$0xff]
          %v1426 = vld [vmem:[#allocation6 + $0x578] sm:$0xff]
          %v1427 = vld [vmem:[#allocation6 + $0x580] sm:$0xff]
          %v1428 = vld [vmem:[#allocation6 + $0x588] sm:$0xff]
          %v1429 = vld [vmem:[#allocation6 + $0x590] sm:$0xff]
          %v1430 = vld [vmem:[#allocation6 + $0x598] sm:$0xff]
          %v1431 = vld [vmem:[#allocation6 + $0x5a0] sm:$0xff]
          %v1432 = vld [vmem:[#allocation6 + $0x5a8] sm:$0xff]
          %v1433 = vld [vmem:[#allocation6 + $0x5b0] sm:$0xff]
          %v1434 = vld [vmem:[#allocation6 + $0x5b8] sm:$0xff]
          %v1435 = vld [vmem:[#allocation6 + $0x5c0] sm:$0xff]
          %v1436 = vld [vmem:[#allocation6 + $0x5c8] sm:$0xff]
          %v1437 = vld [vmem:[#allocation6 + $0x5d0] sm:$0xff]
          %v1438 = vld [vmem:[#allocation6 + $0x5d8] sm:$0xff]
          %v1439 = vld [vmem:[#allocation6 + $0x5e0] sm:$0xff]
          %v1440 = vld [vmem:[#allocation6 + $0x5e8] sm:$0xff]
          %v1441 = vld [vmem:[#allocation6 + $0x5f0] sm:$0xff]
          %v1442 = vld [vmem:[#allocation6 + $0x5f8] sm:$0xff]
          %v1443 = vld [vmem:[#allocation6 + $0x600] sm:$0xff]
          %v1444 = vld [vmem:[#allocation6 + $0x608] sm:$0xff]
          %v1445 = vld [vmem:[#allocation6 + $0x610] sm:$0xff]
          %v1446 = vld [vmem:[#allocation6 + $0x618] sm:$0xff]
          %v1447 = vld [vmem:[#allocation6 + $0x620] sm:$0xff]
          %v1448 = vld [vmem:[#allocation6 + $0x628] sm:$0xff]
          %v1449 = vld [vmem:[#allocation6 + $0x630] sm:$0xff]
          %v1450 = vld [vmem:[#allocation6 + $0x638] sm:$0xff]
          %v1451 = vld [vmem:[#allocation6 + $0x640] sm:$0xff]
          %v1452 = vld [vmem:[#allocation6 + $0x648] sm:$0xff]
          %v1453 = vld [vmem:[#allocation6 + $0x650] sm:$0xff]
          %v1454 = vld [vmem:[#allocation6 + $0x658] sm:$0xff]
          %v1455 = vld [vmem:[#allocation6 + $0x660] sm:$0xff]
          %v1456 = vld [vmem:[#allocation6 + $0x668] sm:$0xff]
          %v1457 = vld [vmem:[#allocation6 + $0x670] sm:$0xff]
          %v1458 = vld [vmem:[#allocation6 + $0x678] sm:$0xff]
          %v1459 = vld [vmem:[#allocation6 + $0x680] sm:$0xff]
          %v1460 = vld [vmem:[#allocation6 + $0x688] sm:$0xff]
          %v1461 = vld [vmem:[#allocation6 + $0x690] sm:$0xff]
          %v1462 = vld [vmem:[#allocation6 + $0x698] sm:$0xff]
          %v1463 = vld [vmem:[#allocation6 + $0x6a0] sm:$0xff]
          %v1464 = vld [vmem:[#allocation6 + $0x6a8] sm:$0xff]
          %v1465 = vld [vmem:[#allocation6 + $0x6b0] sm:$0xff]
          %v1466 = vld [vmem:[#allocation6 + $0x6b8] sm:$0xff]
          %v1467 = vld [vmem:[#allocation6 + $0x6c0] sm:$0xff]
          %v1468 = vld [vmem:[#allocation6 + $0x6c8] sm:$0xff]
          %v1469 = vld [vmem:[#allocation6 + $0x6d0] sm:$0xff]
          %v1470 = vld [vmem:[#allocation6 + $0x6d8] sm:$0xff]
          %v1471 = vld [vmem:[#allocation6 + $0x6e0] sm:$0xff]
          %v1472 = vld [vmem:[#allocation6 + $0x6e8] sm:$0xff]
          %v1473 = vld [vmem:[#allocation6 + $0x6f0] sm:$0xff]
          %v1474 = vld [vmem:[#allocation6 + $0x6f8] sm:$0xff]
          %v1475 = vld [vmem:[#allocation6 + $0x700] sm:$0xff]
          %v1476 = vld [vmem:[#allocation6 + $0x708] sm:$0xff]
          %v1477 = vld [vmem:[#allocation6 + $0x710] sm:$0xff]
          %v1478 = vld [vmem:[#allocation6 + $0x718] sm:$0xff]
          %v1479 = vld [vmem:[#allocation6 + $0x720] sm:$0xff]
          %v1480 = vld [vmem:[#allocation6 + $0x728] sm:$0xff]
          %v1481 = vld [vmem:[#allocation6 + $0x730] sm:$0xff]
          %v1482 = vld [vmem:[#allocation6 + $0x738] sm:$0xff]
          %v1483 = vld [vmem:[#allocation6 + $0x740] sm:$0xff]
          %v1484 = vld [vmem:[#allocation6 + $0x748] sm:$0xff]
          %v1485 = vld [vmem:[#allocation6 + $0x750] sm:$0xff]
          %v1486 = vld [vmem:[#allocation6 + $0x758] sm:$0xff]
          %v1487 = vld [vmem:[#allocation6 + $0x760] sm:$0xff]
          %v1488 = vld [vmem:[#allocation6 + $0x768] sm:$0xff]
          %v1489 = vld [vmem:[#allocation6 + $0x770] sm:$0xff]
          %v1490 = vld [vmem:[#allocation6 + $0x778] sm:$0xff]
          %v1491 = vld [vmem:[#allocation6 + $0x780] sm:$0xff]
          %v1492 = vld [vmem:[#allocation6 + $0x788] sm:$0xff]
          %v1493 = vld [vmem:[#allocation6 + $0x790] sm:$0xff]
          %v1494 = vld [vmem:[#allocation6 + $0x798] sm:$0xff]
          %v1495 = vld [vmem:[#allocation6 + $0x7a0] sm:$0xff]
          %v1496 = vld [vmem:[#allocation6 + $0x7a8] sm:$0xff]
          %v1497 = vld [vmem:[#allocation6 + $0x7b0] sm:$0xff]
          %v1498 = vld [vmem:[#allocation6 + $0x7b8] sm:$0xff]
          %v1499 = vld [vmem:[#allocation6 + $0x7c0] sm:$0xff]
          %v1500 = vld [vmem:[#allocation6 + $0x7c8] sm:$0xff]
          %v1501 = vld [vmem:[#allocation6 + $0x7d0] sm:$0xff]
          %v1502 = vld [vmem:[#allocation6 + $0x7d8] sm:$0xff]
          %v1503 = vld [vmem:[#allocation6 + $0x7e0] sm:$0xff]
          %v1504 = vld [vmem:[#allocation6 + $0x7e8] sm:$0xff]
          %v1505 = vld [vmem:[#allocation6 + $0x7f0] sm:$0xff]
          %v1506 = vld [vmem:[#allocation6 + $0x7f8] sm:$0xff]
          %v1507 = vld [vmem:[%s8] sm:$0xf]
          %v1764 = vunpack.c.l.b16 %v1251
          %v1765 = vunpack.c.h.b16 %v1251
          %v1766 = vunpack.c.l.b16 %v1252
          %v1767 = vunpack.c.h.b16 %v1252
          %v1768 = vunpack.c.l.b16 %v1253
          %v1769 = vunpack.c.h.b16 %v1253
          %v1770 = vunpack.c.l.b16 %v1254
          %v1771 = vunpack.c.h.b16 %v1254
          %v1772 = vunpack.c.l.b16 %v1255
          %v1773 = vunpack.c.h.b16 %v1255
          %v1774 = vunpack.c.l.b16 %v1256
          %v1775 = vunpack.c.h.b16 %v1256
          %v1776 = vunpack.c.l.b16 %v1257
          %v1777 = vunpack.c.h.b16 %v1257
          %v1778 = vunpack.c.l.b16 %v1258
          %v1779 = vunpack.c.h.b16 %v1258
          %v1780 = vunpack.c.l.b16 %v1259
          %v1781 = vunpack.c.h.b16 %v1259
          %v1782 = vunpack.c.l.b16 %v1260
          %v1783 = vunpack.c.h.b16 %v1260
          %v1784 = vunpack.c.l.b16 %v1261
          %v1785 = vunpack.c.h.b16 %v1261
          %v1786 = vunpack.c.l.b16 %v1262
          %v1787 = vunpack.c.h.b16 %v1262
          %v1788 = vunpack.c.l.b16 %v1263
          %v1789 = vunpack.c.h.b16 %v1263
          %v1790 = vunpack.c.l.b16 %v1264
          %v1791 = vunpack.c.h.b16 %v1264
          %v1792 = vunpack.c.l.b16 %v1265
          %v1793 = vunpack.c.h.b16 %v1265
          %v1794 = vunpack.c.l.b16 %v1266
          %v1795 = vunpack.c.h.b16 %v1266
          %v1796 = vunpack.c.l.b16 %v1267
          %v1797 = vunpack.c.h.b16 %v1267
          %v1798 = vunpack.c.l.b16 %v1268
          %v1799 = vunpack.c.h.b16 %v1268
          %v1800 = vunpack.c.l.b16 %v1269
          %v1801 = vunpack.c.h.b16 %v1269
          %v1802 = vunpack.c.l.b16 %v1270
          %v1803 = vunpack.c.h.b16 %v1270
          %v1804 = vunpack.c.l.b16 %v1271
          %v1805 = vunpack.c.h.b16 %v1271
          %v1806 = vunpack.c.l.b16 %v1272
          %v1807 = vunpack.c.h.b16 %v1272
          %v1808 = vunpack.c.l.b16 %v1273
          %v1809 = vunpack.c.h.b16 %v1273
          %v1810 = vunpack.c.l.b16 %v1274
          %v1811 = vunpack.c.h.b16 %v1274
          %v1812 = vunpack.c.l.b16 %v1275
          %v1813 = vunpack.c.h.b16 %v1275
          %v1814 = vunpack.c.l.b16 %v1276
          %v1815 = vunpack.c.h.b16 %v1276
          %v1816 = vunpack.c.l.b16 %v1277
          %v1817 = vunpack.c.h.b16 %v1277
          %v1818 = vunpack.c.l.b16 %v1278
          %v1819 = vunpack.c.h.b16 %v1278
          %v1820 = vunpack.c.l.b16 %v1279
          %v1821 = vunpack.c.h.b16 %v1279
          %v1822 = vunpack.c.l.b16 %v1280
          %v1823 = vunpack.c.h.b16 %v1280
          %v1824 = vunpack.c.l.b16 %v1281
          %v1825 = vunpack.c.h.b16 %v1281
          %v1826 = vunpack.c.l.b16 %v1282
          %v1827 = vunpack.c.h.b16 %v1282
          %v1828 = vunpack.c.l.b16 %v1283
          %v1829 = vunpack.c.h.b16 %v1283
          %v1830 = vunpack.c.l.b16 %v1284
          %v1831 = vunpack.c.h.b16 %v1284
          %v1832 = vunpack.c.l.b16 %v1285
          %v1833 = vunpack.c.h.b16 %v1285
          %v1834 = vunpack.c.l.b16 %v1286
          %v1835 = vunpack.c.h.b16 %v1286
          %v1836 = vunpack.c.l.b16 %v1287
          %v1837 = vunpack.c.h.b16 %v1287
          %v1838 = vunpack.c.l.b16 %v1288
          %v1839 = vunpack.c.h.b16 %v1288
          %v1840 = vunpack.c.l.b16 %v1289
          %v1841 = vunpack.c.h.b16 %v1289
          %v1842 = vunpack.c.l.b16 %v1290
          %v1843 = vunpack.c.h.b16 %v1290
          %v1844 = vunpack.c.l.b16 %v1291
          %v1845 = vunpack.c.h.b16 %v1291
          %v1846 = vunpack.c.l.b16 %v1292
          %v1847 = vunpack.c.h.b16 %v1292
          %v1848 = vunpack.c.l.b16 %v1293
          %v1849 = vunpack.c.h.b16 %v1293
          %v1850 = vunpack.c.l.b16 %v1294
          %v1851 = vunpack.c.h.b16 %v1294
          %v1852 = vunpack.c.l.b16 %v1295
          %v1853 = vunpack.c.h.b16 %v1295
          %v1854 = vunpack.c.l.b16 %v1296
          %v1855 = vunpack.c.h.b16 %v1296
          %v1856 = vunpack.c.l.b16 %v1297
          %v1857 = vunpack.c.h.b16 %v1297
          %v1858 = vunpack.c.l.b16 %v1298
          %v1859 = vunpack.c.h.b16 %v1298
          %v1860 = vunpack.c.l.b16 %v1299
          %v1861 = vunpack.c.h.b16 %v1299
          %v1862 = vunpack.c.l.b16 %v1300
          %v1863 = vunpack.c.h.b16 %v1300
          %v1864 = vunpack.c.l.b16 %v1301
          %v1865 = vunpack.c.h.b16 %v1301
          %v1866 = vunpack.c.l.b16 %v1302
          %v1867 = vunpack.c.h.b16 %v1302
          %v1868 = vunpack.c.l.b16 %v1303
          %v1869 = vunpack.c.h.b16 %v1303
          %v1870 = vunpack.c.l.b16 %v1304
          %v1871 = vunpack.c.h.b16 %v1304
          %v1872 = vunpack.c.l.b16 %v1305
          %v1873 = vunpack.c.h.b16 %v1305
          %v1874 = vunpack.c.l.b16 %v1306
          %v1875 = vunpack.c.h.b16 %v1306
          %v1876 = vunpack.c.l.b16 %v1307
          %v1877 = vunpack.c.h.b16 %v1307
          %v1878 = vunpack.c.l.b16 %v1308
          %v1879 = vunpack.c.h.b16 %v1308
          %v1880 = vunpack.c.l.b16 %v1309
          %v1881 = vunpack.c.h.b16 %v1309
          %v1882 = vunpack.c.l.b16 %v1310
          %v1883 = vunpack.c.h.b16 %v1310
          %v1884 = vunpack.c.l.b16 %v1311
          %v1885 = vunpack.c.h.b16 %v1311
          %v1886 = vunpack.c.l.b16 %v1312
          %v1887 = vunpack.c.h.b16 %v1312
          %v1888 = vunpack.c.l.b16 %v1313
          %v1889 = vunpack.c.h.b16 %v1313
          %v1890 = vunpack.c.l.b16 %v1314
          %v1891 = vunpack.c.h.b16 %v1314
          %v1892 = vunpack.c.l.b16 %v1315
          %v1893 = vunpack.c.h.b16 %v1315
          %v1894 = vunpack.c.l.b16 %v1316
          %v1895 = vunpack.c.h.b16 %v1316
          %v1896 = vunpack.c.l.b16 %v1317
          %v1897 = vunpack.c.h.b16 %v1317
          %v1898 = vunpack.c.l.b16 %v1318
          %v1899 = vunpack.c.h.b16 %v1318
          %v1900 = vunpack.c.l.b16 %v1319
          %v1901 = vunpack.c.h.b16 %v1319
          %v1902 = vunpack.c.l.b16 %v1320
          %v1903 = vunpack.c.h.b16 %v1320
          %v1904 = vunpack.c.l.b16 %v1321
          %v1905 = vunpack.c.h.b16 %v1321
          %v1906 = vunpack.c.l.b16 %v1322
          %v1907 = vunpack.c.h.b16 %v1322
          %v1908 = vunpack.c.l.b16 %v1323
          %v1909 = vunpack.c.h.b16 %v1323
          %v1910 = vunpack.c.l.b16 %v1324
          %v1911 = vunpack.c.h.b16 %v1324
          %v1912 = vunpack.c.l.b16 %v1325
          %v1913 = vunpack.c.h.b16 %v1325
          %v1914 = vunpack.c.l.b16 %v1326
          %v1915 = vunpack.c.h.b16 %v1326
          %v1916 = vunpack.c.l.b16 %v1327
          %v1917 = vunpack.c.h.b16 %v1327
          %v1918 = vunpack.c.l.b16 %v1328
          %v1919 = vunpack.c.h.b16 %v1328
          %v1920 = vunpack.c.l.b16 %v1329
          %v1921 = vunpack.c.h.b16 %v1329
          %v1922 = vunpack.c.l.b16 %v1330
          %v1923 = vunpack.c.h.b16 %v1330
          %v1924 = vunpack.c.l.b16 %v1331
          %v1925 = vunpack.c.h.b16 %v1331
          %v1926 = vunpack.c.l.b16 %v1332
          %v1927 = vunpack.c.h.b16 %v1332
          %v1928 = vunpack.c.l.b16 %v1333
          %v1929 = vunpack.c.h.b16 %v1333
          %v1930 = vunpack.c.l.b16 %v1334
          %v1931 = vunpack.c.h.b16 %v1334
          %v1932 = vunpack.c.l.b16 %v1335
          %v1933 = vunpack.c.h.b16 %v1335
          %v1934 = vunpack.c.l.b16 %v1336
          %v1935 = vunpack.c.h.b16 %v1336
          %v1936 = vunpack.c.l.b16 %v1337
          %v1937 = vunpack.c.h.b16 %v1337
          %v1938 = vunpack.c.l.b16 %v1338
          %v1939 = vunpack.c.h.b16 %v1338
          %v1940 = vunpack.c.l.b16 %v1339
          %v1941 = vunpack.c.h.b16 %v1339
          %v1942 = vunpack.c.l.b16 %v1340
          %v1943 = vunpack.c.h.b16 %v1340
          %v1944 = vunpack.c.l.b16 %v1341
          %v1945 = vunpack.c.h.b16 %v1341
          %v1946 = vunpack.c.l.b16 %v1342
          %v1947 = vunpack.c.h.b16 %v1342
          %v1948 = vunpack.c.l.b16 %v1343
          %v1949 = vunpack.c.h.b16 %v1343
          %v1950 = vunpack.c.l.b16 %v1344
          %v1951 = vunpack.c.h.b16 %v1344
          %v1952 = vunpack.c.l.b16 %v1345
          %v1953 = vunpack.c.h.b16 %v1345
          %v1954 = vunpack.c.l.b16 %v1346
          %v1955 = vunpack.c.h.b16 %v1346
          %v1956 = vunpack.c.l.b16 %v1347
          %v1957 = vunpack.c.h.b16 %v1347
          %v1958 = vunpack.c.l.b16 %v1348
          %v1959 = vunpack.c.h.b16 %v1348
          %v1960 = vunpack.c.l.b16 %v1349
          %v1961 = vunpack.c.h.b16 %v1349
          %v1962 = vunpack.c.l.b16 %v1350
          %v1963 = vunpack.c.h.b16 %v1350
          %v1964 = vunpack.c.l.b16 %v1351
          %v1965 = vunpack.c.h.b16 %v1351
          %v1966 = vunpack.c.l.b16 %v1352
          %v1967 = vunpack.c.h.b16 %v1352
          %v1968 = vunpack.c.l.b16 %v1353
          %v1969 = vunpack.c.h.b16 %v1353
          %v1970 = vunpack.c.l.b16 %v1354
          %v1971 = vunpack.c.h.b16 %v1354
          %v1972 = vunpack.c.l.b16 %v1355
          %v1973 = vunpack.c.h.b16 %v1355
          %v1974 = vunpack.c.l.b16 %v1356
          %v1975 = vunpack.c.h.b16 %v1356
          %v1976 = vunpack.c.l.b16 %v1357
          %v1977 = vunpack.c.h.b16 %v1357
          %v1978 = vunpack.c.l.b16 %v1358
          %v1979 = vunpack.c.h.b16 %v1358
          %v1980 = vunpack.c.l.b16 %v1359
          %v1981 = vunpack.c.h.b16 %v1359
          %v1982 = vunpack.c.l.b16 %v1360
          %v1983 = vunpack.c.h.b16 %v1360
          %v1984 = vunpack.c.l.b16 %v1361
          %v1985 = vunpack.c.h.b16 %v1361
          %v1986 = vunpack.c.l.b16 %v1362
          %v1987 = vunpack.c.h.b16 %v1362
          %v1988 = vunpack.c.l.b16 %v1363
          %v1989 = vunpack.c.h.b16 %v1363
          %v1990 = vunpack.c.l.b16 %v1364
          %v1991 = vunpack.c.h.b16 %v1364
          %v1992 = vunpack.c.l.b16 %v1365
          %v1993 = vunpack.c.h.b16 %v1365
          %v1994 = vunpack.c.l.b16 %v1366
          %v1995 = vunpack.c.h.b16 %v1366
          %v1996 = vunpack.c.l.b16 %v1367
          %v1997 = vunpack.c.h.b16 %v1367
          %v1998 = vunpack.c.l.b16 %v1368
          %v1999 = vunpack.c.h.b16 %v1368
          %v2000 = vunpack.c.l.b16 %v1369
          %v2001 = vunpack.c.h.b16 %v1369
          %v2002 = vunpack.c.l.b16 %v1370
          %v2003 = vunpack.c.h.b16 %v1370
          %v2004 = vunpack.c.l.b16 %v1371
          %v2005 = vunpack.c.h.b16 %v1371
          %v2006 = vunpack.c.l.b16 %v1372
          %v2007 = vunpack.c.h.b16 %v1372
          %v2008 = vunpack.c.l.b16 %v1373
          %v2009 = vunpack.c.h.b16 %v1373
          %v2010 = vunpack.c.l.b16 %v1374
          %v2011 = vunpack.c.h.b16 %v1374
          %v2012 = vunpack.c.l.b16 %v1375
          %v2013 = vunpack.c.h.b16 %v1375
          %v2014 = vunpack.c.l.b16 %v1376
          %v2015 = vunpack.c.h.b16 %v1376
          %v2016 = vunpack.c.l.b16 %v1377
          %v2017 = vunpack.c.h.b16 %v1377
          %v2018 = vunpack.c.l.b16 %v1378
          %v2019 = vunpack.c.h.b16 %v1378
          %v2020 = vunpack.c.l.b16 %v1379
          %v2021 = vunpack.c.h.b16 %v1379
          %v2022 = vunpack.c.l.b16 %v1380
          %v2023 = vunpack.c.h.b16 %v1380
          %v2024 = vunpack.c.l.b16 %v1381
          %v2025 = vunpack.c.h.b16 %v1381
          %v2026 = vunpack.c.l.b16 %v1382
          %v2027 = vunpack.c.h.b16 %v1382
          %v2028 = vunpack.c.l.b16 %v1383
          %v2029 = vunpack.c.h.b16 %v1383
          %v2030 = vunpack.c.l.b16 %v1384
          %v2031 = vunpack.c.h.b16 %v1384
          %v2032 = vunpack.c.l.b16 %v1385
          %v2033 = vunpack.c.h.b16 %v1385
          %v2034 = vunpack.c.l.b16 %v1386
          %v2035 = vunpack.c.h.b16 %v1386
          %v2036 = vunpack.c.l.b16 %v1387
          %v2037 = vunpack.c.h.b16 %v1387
          %v2038 = vunpack.c.l.b16 %v1388
          %v2039 = vunpack.c.h.b16 %v1388
          %v2040 = vunpack.c.l.b16 %v1389
          %v2041 = vunpack.c.h.b16 %v1389
          %v2042 = vunpack.c.l.b16 %v1390
          %v2043 = vunpack.c.h.b16 %v1390
          %v2044 = vunpack.c.l.b16 %v1391
          %v2045 = vunpack.c.h.b16 %v1391
          %v2046 = vunpack.c.l.b16 %v1392
          %v2047 = vunpack.c.h.b16 %v1392
          %v2048 = vunpack.c.l.b16 %v1393
          %v2049 = vunpack.c.h.b16 %v1393
          %v2050 = vunpack.c.l.b16 %v1394
          %v2051 = vunpack.c.h.b16 %v1394
          %v2052 = vunpack.c.l.b16 %v1395
          %v2053 = vunpack.c.h.b16 %v1395
          %v2054 = vunpack.c.l.b16 %v1396
          %v2055 = vunpack.c.h.b16 %v1396
          %v2056 = vunpack.c.l.b16 %v1397
          %v2057 = vunpack.c.h.b16 %v1397
          %v2058 = vunpack.c.l.b16 %v1398
          %v2059 = vunpack.c.h.b16 %v1398
          %v2060 = vunpack.c.l.b16 %v1399
          %v2061 = vunpack.c.h.b16 %v1399
          %v2062 = vunpack.c.l.b16 %v1400
          %v2063 = vunpack.c.h.b16 %v1400
          %v2064 = vunpack.c.l.b16 %v1401
          %v2065 = vunpack.c.h.b16 %v1401
          %v2066 = vunpack.c.l.b16 %v1402
          %v2067 = vunpack.c.h.b16 %v1402
          %v2068 = vunpack.c.l.b16 %v1403
          %v2069 = vunpack.c.h.b16 %v1403
          %v2070 = vunpack.c.l.b16 %v1404
          %v2071 = vunpack.c.h.b16 %v1404
          %v2072 = vunpack.c.l.b16 %v1405
          %v2073 = vunpack.c.h.b16 %v1405
          %v2074 = vunpack.c.l.b16 %v1406
          %v2075 = vunpack.c.h.b16 %v1406
          %v2076 = vunpack.c.l.b16 %v1407
          %v2077 = vunpack.c.h.b16 %v1407
          %v2078 = vunpack.c.l.b16 %v1408
          %v2079 = vunpack.c.h.b16 %v1408
          %v2080 = vunpack.c.l.b16 %v1409
          %v2081 = vunpack.c.h.b16 %v1409
          %v2082 = vunpack.c.l.b16 %v1410
          %v2083 = vunpack.c.h.b16 %v1410
          %v2084 = vunpack.c.l.b16 %v1411
          %v2085 = vunpack.c.h.b16 %v1411
          %v2086 = vunpack.c.l.b16 %v1412
          %v2087 = vunpack.c.h.b16 %v1412
          %v2088 = vunpack.c.l.b16 %v1413
          %v2089 = vunpack.c.h.b16 %v1413
          %v2090 = vunpack.c.l.b16 %v1414
          %v2091 = vunpack.c.h.b16 %v1414
          %v2092 = vunpack.c.l.b16 %v1415
          %v2093 = vunpack.c.h.b16 %v1415
          %v2094 = vunpack.c.l.b16 %v1416
          %v2095 = vunpack.c.h.b16 %v1416
          %v2096 = vunpack.c.l.b16 %v1417
          %v2097 = vunpack.c.h.b16 %v1417
          %v2098 = vunpack.c.l.b16 %v1418
          %v2099 = vunpack.c.h.b16 %v1418
          %v2100 = vunpack.c.l.b16 %v1419
          %v2101 = vunpack.c.h.b16 %v1419
          %v2102 = vunpack.c.l.b16 %v1420
          %v2103 = vunpack.c.h.b16 %v1420
          %v2104 = vunpack.c.l.b16 %v1421
          %v2105 = vunpack.c.h.b16 %v1421
          %v2106 = vunpack.c.l.b16 %v1422
          %v2107 = vunpack.c.h.b16 %v1422
          %v2108 = vunpack.c.l.b16 %v1423
          %v2109 = vunpack.c.h.b16 %v1423
          %v2110 = vunpack.c.l.b16 %v1424
          %v2111 = vunpack.c.h.b16 %v1424
          %v2112 = vunpack.c.l.b16 %v1425
          %v2113 = vunpack.c.h.b16 %v1425
          %v2114 = vunpack.c.l.b16 %v1426
          %v2115 = vunpack.c.h.b16 %v1426
          %v2116 = vunpack.c.l.b16 %v1427
          %v2117 = vunpack.c.h.b16 %v1427
          %v2118 = vunpack.c.l.b16 %v1428
          %v2119 = vunpack.c.h.b16 %v1428
          %v2120 = vunpack.c.l.b16 %v1429
          %v2121 = vunpack.c.h.b16 %v1429
          %v2122 = vunpack.c.l.b16 %v1430
          %v2123 = vunpack.c.h.b16 %v1430
          %v2124 = vunpack.c.l.b16 %v1431
          %v2125 = vunpack.c.h.b16 %v1431
          %v2126 = vunpack.c.l.b16 %v1432
          %v2127 = vunpack.c.h.b16 %v1432
          %v2128 = vunpack.c.l.b16 %v1433
          %v2129 = vunpack.c.h.b16 %v1433
          %v2130 = vunpack.c.l.b16 %v1434
          %v2131 = vunpack.c.h.b16 %v1434
          %v2132 = vunpack.c.l.b16 %v1435
          %v2133 = vunpack.c.h.b16 %v1435
          %v2134 = vunpack.c.l.b16 %v1436
          %v2135 = vunpack.c.h.b16 %v1436
          %v2136 = vunpack.c.l.b16 %v1437
          %v2137 = vunpack.c.h.b16 %v1437
          %v2138 = vunpack.c.l.b16 %v1438
          %v2139 = vunpack.c.h.b16 %v1438
          %v2140 = vunpack.c.l.b16 %v1439
          %v2141 = vunpack.c.h.b16 %v1439
          %v2142 = vunpack.c.l.b16 %v1440
          %v2143 = vunpack.c.h.b16 %v1440
          %v2144 = vunpack.c.l.b16 %v1441
          %v2145 = vunpack.c.h.b16 %v1441
          %v2146 = vunpack.c.l.b16 %v1442
          %v2147 = vunpack.c.h.b16 %v1442
          %v2148 = vunpack.c.l.b16 %v1443
          %v2149 = vunpack.c.h.b16 %v1443
          %v2150 = vunpack.c.l.b16 %v1444
          %v2151 = vunpack.c.h.b16 %v1444
          %v2152 = vunpack.c.l.b16 %v1445
          %v2153 = vunpack.c.h.b16 %v1445
          %v2154 = vunpack.c.l.b16 %v1446
          %v2155 = vunpack.c.h.b16 %v1446
          %v2156 = vunpack.c.l.b16 %v1447
          %v2157 = vunpack.c.h.b16 %v1447
          %v2158 = vunpack.c.l.b16 %v1448
          %v2159 = vunpack.c.h.b16 %v1448
          %v2160 = vunpack.c.l.b16 %v1449
          %v2161 = vunpack.c.h.b16 %v1449
          %v2162 = vunpack.c.l.b16 %v1450
          %v2163 = vunpack.c.h.b16 %v1450
          %v2164 = vunpack.c.l.b16 %v1451
          %v2165 = vunpack.c.h.b16 %v1451
          %v2166 = vunpack.c.l.b16 %v1452
          %v2167 = vunpack.c.h.b16 %v1452
          %v2168 = vunpack.c.l.b16 %v1453
          %v2169 = vunpack.c.h.b16 %v1453
          %v2170 = vunpack.c.l.b16 %v1454
          %v2171 = vunpack.c.h.b16 %v1454
          %v2172 = vunpack.c.l.b16 %v1455
          %v2173 = vunpack.c.h.b16 %v1455
          %v2174 = vunpack.c.l.b16 %v1456
          %v2175 = vunpack.c.h.b16 %v1456
          %v2176 = vunpack.c.l.b16 %v1457
          %v2177 = vunpack.c.h.b16 %v1457
          %v2178 = vunpack.c.l.b16 %v1458
          %v2179 = vunpack.c.h.b16 %v1458
          %v2180 = vunpack.c.l.b16 %v1459
          %v2181 = vunpack.c.h.b16 %v1459
          %v2182 = vunpack.c.l.b16 %v1460
          %v2183 = vunpack.c.h.b16 %v1460
          %v2184 = vunpack.c.l.b16 %v1461
          %v2185 = vunpack.c.h.b16 %v1461
          %v2186 = vunpack.c.l.b16 %v1462
          %v2187 = vunpack.c.h.b16 %v1462
          %v2188 = vunpack.c.l.b16 %v1463
          %v2189 = vunpack.c.h.b16 %v1463
          %v2190 = vunpack.c.l.b16 %v1464
          %v2191 = vunpack.c.h.b16 %v1464
          %v2192 = vunpack.c.l.b16 %v1465
          %v2193 = vunpack.c.h.b16 %v1465
          %v2194 = vunpack.c.l.b16 %v1466
          %v2195 = vunpack.c.h.b16 %v1466
          %v2196 = vunpack.c.l.b16 %v1467
          %v2197 = vunpack.c.h.b16 %v1467
          %v2198 = vunpack.c.l.b16 %v1468
          %v2199 = vunpack.c.h.b16 %v1468
          %v2200 = vunpack.c.l.b16 %v1469
          %v2201 = vunpack.c.h.b16 %v1469
          %v2202 = vunpack.c.l.b16 %v1470
          %v2203 = vunpack.c.h.b16 %v1470
          %v2204 = vunpack.c.l.b16 %v1471
          %v2205 = vunpack.c.h.b16 %v1471
          %v2206 = vunpack.c.l.b16 %v1472
          %v2207 = vunpack.c.h.b16 %v1472
          %v2208 = vunpack.c.l.b16 %v1473
          %v2209 = vunpack.c.h.b16 %v1473
          %v2210 = vunpack.c.l.b16 %v1474
          %v2211 = vunpack.c.h.b16 %v1474
          %v2212 = vunpack.c.l.b16 %v1475
          %v2213 = vunpack.c.h.b16 %v1475
          %v2214 = vunpack.c.l.b16 %v1476
          %v2215 = vunpack.c.h.b16 %v1476
          %v2216 = vunpack.c.l.b16 %v1477
          %v2217 = vunpack.c.h.b16 %v1477
          %v2218 = vunpack.c.l.b16 %v1478
          %v2219 = vunpack.c.h.b16 %v1478
          %v2220 = vunpack.c.l.b16 %v1479
          %v2221 = vunpack.c.h.b16 %v1479
          %v2222 = vunpack.c.l.b16 %v1480
          %v2223 = vunpack.c.h.b16 %v1480
          %v2224 = vunpack.c.l.b16 %v1481
          %v2225 = vunpack.c.h.b16 %v1481
          %v2226 = vunpack.c.l.b16 %v1482
          %v2227 = vunpack.c.h.b16 %v1482
          %v2228 = vunpack.c.l.b16 %v1483
          %v2229 = vunpack.c.h.b16 %v1483
          %v2230 = vunpack.c.l.b16 %v1484
          %v2231 = vunpack.c.h.b16 %v1484
          %v2232 = vunpack.c.l.b16 %v1485
          %v2233 = vunpack.c.h.b16 %v1485
          %v2234 = vunpack.c.l.b16 %v1486
          %v2235 = vunpack.c.h.b16 %v1486
          %v2236 = vunpack.c.l.b16 %v1487
          %v2237 = vunpack.c.h.b16 %v1487
          %v2238 = vunpack.c.l.b16 %v1488
          %v2239 = vunpack.c.h.b16 %v1488
          %v2240 = vunpack.c.l.b16 %v1489
          %v2241 = vunpack.c.h.b16 %v1489
          %v2242 = vunpack.c.l.b16 %v1490
          %v2243 = vunpack.c.h.b16 %v1490
          %v2244 = vunpack.c.l.b16 %v1491
          %v2245 = vunpack.c.h.b16 %v1491
          %v2246 = vunpack.c.l.b16 %v1492
          %v2247 = vunpack.c.h.b16 %v1492
          %v2248 = vunpack.c.l.b16 %v1493
          %v2249 = vunpack.c.h.b16 %v1493
          %v2250 = vunpack.c.l.b16 %v1494
          %v2251 = vunpack.c.h.b16 %v1494
          %v2252 = vunpack.c.l.b16 %v1495
          %v2253 = vunpack.c.h.b16 %v1495
          %v2254 = vunpack.c.l.b16 %v1496
          %v2255 = vunpack.c.h.b16 %v1496
          %v2256 = vunpack.c.l.b16 %v1497
          %v2257 = vunpack.c.h.b16 %v1497
          %v2258 = vunpack.c.l.b16 %v1498
          %v2259 = vunpack.c.h.b16 %v1498
          %v2260 = vunpack.c.l.b16 %v1499
          %v2261 = vunpack.c.h.b16 %v1499
          %v2262 = vunpack.c.l.b16 %v1500
          %v2263 = vunpack.c.h.b16 %v1500
          %v2264 = vunpack.c.l.b16 %v1501
          %v2265 = vunpack.c.h.b16 %v1501
          %v2266 = vunpack.c.l.b16 %v1502
          %v2267 = vunpack.c.h.b16 %v1502
          %v2268 = vunpack.c.l.b16 %v1503
          %v2269 = vunpack.c.h.b16 %v1503
          %v2270 = vunpack.c.l.b16 %v1504
          %v2271 = vunpack.c.h.b16 %v1504
          %v2272 = vunpack.c.l.b16 %v1505
          %v2273 = vunpack.c.h.b16 %v1505
          %v2274 = vunpack.c.l.b16 %v1506
          %v2275 = vunpack.c.h.b16 %v1506
          %v2276 = vpack.c.b16 %v1768, %v1764
          %v2277 = vpack.c.b16 %v1769, %v1765
          %v2278 = vpack.c.b16 %v1770, %v1766
          %v2279 = vpack.c.b16 %v1771, %v1767
          %v2280 = vpack.c.b16 %v1776, %v1772
          %v2281 = vpack.c.b16 %v1777, %v1773
          %v2282 = vpack.c.b16 %v1778, %v1774
          %v2283 = vpack.c.b16 %v1779, %v1775
          %v2284 = vpack.c.b16 %v1784, %v1780
          %v2285 = vpack.c.b16 %v1785, %v1781
          %v2286 = vpack.c.b16 %v1786, %v1782
          %v2287 = vpack.c.b16 %v1787, %v1783
          %v2288 = vpack.c.b16 %v1792, %v1788
          %v2289 = vpack.c.b16 %v1793, %v1789
          %v2290 = vpack.c.b16 %v1794, %v1790
          %v2291 = vpack.c.b16 %v1795, %v1791
          %v2292 = vpack.c.b16 %v1800, %v1796
          %v2293 = vpack.c.b16 %v1801, %v1797
          %v2294 = vpack.c.b16 %v1802, %v1798
          %v2295 = vpack.c.b16 %v1803, %v1799
          %v2296 = vpack.c.b16 %v1808, %v1804
          %v2297 = vpack.c.b16 %v1809, %v1805
          %v2298 = vpack.c.b16 %v1810, %v1806
          %v2299 = vpack.c.b16 %v1811, %v1807
          %v2300 = vpack.c.b16 %v1816, %v1812
          %v2301 = vpack.c.b16 %v1817, %v1813
          %v2302 = vpack.c.b16 %v1818, %v1814
          %v2303 = vpack.c.b16 %v1819, %v1815
          %v2304 = vpack.c.b16 %v1824, %v1820
          %v2305 = vpack.c.b16 %v1825, %v1821
          %v2306 = vpack.c.b16 %v1826, %v1822
          %v2307 = vpack.c.b16 %v1827, %v1823
          %v2308 = vpack.c.b16 %v1832, %v1828
          %v2309 = vpack.c.b16 %v1833, %v1829
          %v2310 = vpack.c.b16 %v1834, %v1830
          %v2311 = vpack.c.b16 %v1835, %v1831
          %v2312 = vpack.c.b16 %v1840, %v1836
          %v2313 = vpack.c.b16 %v1841, %v1837
          %v2314 = vpack.c.b16 %v1842, %v1838
          %v2315 = vpack.c.b16 %v1843, %v1839
          %v2316 = vpack.c.b16 %v1848, %v1844
          %v2317 = vpack.c.b16 %v1849, %v1845
          %v2318 = vpack.c.b16 %v1850, %v1846
          %v2319 = vpack.c.b16 %v1851, %v1847
          %v2320 = vpack.c.b16 %v1856, %v1852
          %v2321 = vpack.c.b16 %v1857, %v1853
          %v2322 = vpack.c.b16 %v1858, %v1854
          %v2323 = vpack.c.b16 %v1859, %v1855
          %v2324 = vpack.c.b16 %v1864, %v1860
          %v2325 = vpack.c.b16 %v1865, %v1861
          %v2326 = vpack.c.b16 %v1866, %v1862
          %v2327 = vpack.c.b16 %v1867, %v1863
          %v2328 = vpack.c.b16 %v1872, %v1868
          %v2329 = vpack.c.b16 %v1873, %v1869
          %v2330 = vpack.c.b16 %v1874, %v1870
          %v2331 = vpack.c.b16 %v1875, %v1871
          %v2332 = vpack.c.b16 %v1880, %v1876
          %v2333 = vpack.c.b16 %v1881, %v1877
          %v2334 = vpack.c.b16 %v1882, %v1878
          %v2335 = vpack.c.b16 %v1883, %v1879
          %v2336 = vpack.c.b16 %v1888, %v1884
          %v2337 = vpack.c.b16 %v1889, %v1885
          %v2338 = vpack.c.b16 %v1890, %v1886
          %v2339 = vpack.c.b16 %v1891, %v1887
          %v2340 = vpack.c.b16 %v1896, %v1892
          %v2341 = vpack.c.b16 %v1897, %v1893
          %v2342 = vpack.c.b16 %v1898, %v1894
          %v2343 = vpack.c.b16 %v1899, %v1895
          %v2344 = vpack.c.b16 %v1904, %v1900
          %v2345 = vpack.c.b16 %v1905, %v1901
          %v2346 = vpack.c.b16 %v1906, %v1902
          %v2347 = vpack.c.b16 %v1907, %v1903
          %v2348 = vpack.c.b16 %v1912, %v1908
          %v2349 = vpack.c.b16 %v1913, %v1909
          %v2350 = vpack.c.b16 %v1914, %v1910
          %v2351 = vpack.c.b16 %v1915, %v1911
          %v2352 = vpack.c.b16 %v1920, %v1916
          %v2353 = vpack.c.b16 %v1921, %v1917
          %v2354 = vpack.c.b16 %v1922, %v1918
          %v2355 = vpack.c.b16 %v1923, %v1919
          %v2356 = vpack.c.b16 %v1928, %v1924
          %v2357 = vpack.c.b16 %v1929, %v1925
          %v2358 = vpack.c.b16 %v1930, %v1926
          %v2359 = vpack.c.b16 %v1931, %v1927
          %v2360 = vpack.c.b16 %v1936, %v1932
          %v2361 = vpack.c.b16 %v1937, %v1933
          %v2362 = vpack.c.b16 %v1938, %v1934
          %v2363 = vpack.c.b16 %v1939, %v1935
          %v2364 = vpack.c.b16 %v1944, %v1940
          %v2365 = vpack.c.b16 %v1945, %v1941
          %v2366 = vpack.c.b16 %v1946, %v1942
          %v2367 = vpack.c.b16 %v1947, %v1943
          %v2368 = vpack.c.b16 %v1952, %v1948
          %v2369 = vpack.c.b16 %v1953, %v1949
          %v2370 = vpack.c.b16 %v1954, %v1950
          %v2371 = vpack.c.b16 %v1955, %v1951
          %v2372 = vpack.c.b16 %v1960, %v1956
          %v2373 = vpack.c.b16 %v1961, %v1957
          %v2374 = vpack.c.b16 %v1962, %v1958
          %v2375 = vpack.c.b16 %v1963, %v1959
          %v2376 = vpack.c.b16 %v1968, %v1964
          %v2377 = vpack.c.b16 %v1969, %v1965
          %v2378 = vpack.c.b16 %v1970, %v1966
          %v2379 = vpack.c.b16 %v1971, %v1967
          %v2380 = vpack.c.b16 %v1976, %v1972
          %v2381 = vpack.c.b16 %v1977, %v1973
          %v2382 = vpack.c.b16 %v1978, %v1974
          %v2383 = vpack.c.b16 %v1979, %v1975
          %v2384 = vpack.c.b16 %v1984, %v1980
          %v2385 = vpack.c.b16 %v1985, %v1981
          %v2386 = vpack.c.b16 %v1986, %v1982
          %v2387 = vpack.c.b16 %v1987, %v1983
          %v2388 = vpack.c.b16 %v1992, %v1988
          %v2389 = vpack.c.b16 %v1993, %v1989
          %v2390 = vpack.c.b16 %v1994, %v1990
          %v2391 = vpack.c.b16 %v1995, %v1991
          %v2392 = vpack.c.b16 %v2000, %v1996
          %v2393 = vpack.c.b16 %v2001, %v1997
          %v2394 = vpack.c.b16 %v2002, %v1998
          %v2395 = vpack.c.b16 %v2003, %v1999
          %v2396 = vpack.c.b16 %v2008, %v2004
          %v2397 = vpack.c.b16 %v2009, %v2005
          %v2398 = vpack.c.b16 %v2010, %v2006
          %v2399 = vpack.c.b16 %v2011, %v2007
          %v2400 = vpack.c.b16 %v2016, %v2012
          %v2401 = vpack.c.b16 %v2017, %v2013
          %v2402 = vpack.c.b16 %v2018, %v2014
          %v2403 = vpack.c.b16 %v2019, %v2015
          %v2404 = vpack.c.b16 %v2024, %v2020
          %v2405 = vpack.c.b16 %v2025, %v2021
          %v2406 = vpack.c.b16 %v2026, %v2022
          %v2407 = vpack.c.b16 %v2027, %v2023
          %v2408 = vpack.c.b16 %v2032, %v2028
          %v2409 = vpack.c.b16 %v2033, %v2029
          %v2410 = vpack.c.b16 %v2034, %v2030
          %v2411 = vpack.c.b16 %v2035, %v2031
          %v2412 = vpack.c.b16 %v2040, %v2036
          %v2413 = vpack.c.b16 %v2041, %v2037
          %v2414 = vpack.c.b16 %v2042, %v2038
          %v2415 = vpack.c.b16 %v2043, %v2039
          %v2416 = vpack.c.b16 %v2048, %v2044
          %v2417 = vpack.c.b16 %v2049, %v2045
          %v2418 = vpack.c.b16 %v2050, %v2046
          %v2419 = vpack.c.b16 %v2051, %v2047
          %v2420 = vpack.c.b16 %v2056, %v2052
          %v2421 = vpack.c.b16 %v2057, %v2053
          %v2422 = vpack.c.b16 %v2058, %v2054
          %v2423 = vpack.c.b16 %v2059, %v2055
          %v2424 = vpack.c.b16 %v2064, %v2060
          %v2425 = vpack.c.b16 %v2065, %v2061
          %v2426 = vpack.c.b16 %v2066, %v2062
          %v2427 = vpack.c.b16 %v2067, %v2063
          %v2428 = vpack.c.b16 %v2072, %v2068
          %v2429 = vpack.c.b16 %v2073, %v2069
          %v2430 = vpack.c.b16 %v2074, %v2070
          %v2431 = vpack.c.b16 %v2075, %v2071
          %v2432 = vpack.c.b16 %v2080, %v2076
          %v2433 = vpack.c.b16 %v2081, %v2077
          %v2434 = vpack.c.b16 %v2082, %v2078
          %v2435 = vpack.c.b16 %v2083, %v2079
          %v2436 = vpack.c.b16 %v2088, %v2084
          %v2437 = vpack.c.b16 %v2089, %v2085
          %v2438 = vpack.c.b16 %v2090, %v2086
          %v2439 = vpack.c.b16 %v2091, %v2087
          %v2440 = vpack.c.b16 %v2096, %v2092
          %v2441 = vpack.c.b16 %v2097, %v2093
          %v2442 = vpack.c.b16 %v2098, %v2094
          %v2443 = vpack.c.b16 %v2099, %v2095
          %v2444 = vpack.c.b16 %v2104, %v2100
          %v2445 = vpack.c.b16 %v2105, %v2101
          %v2446 = vpack.c.b16 %v2106, %v2102
          %v2447 = vpack.c.b16 %v2107, %v2103
          %v2448 = vpack.c.b16 %v2112, %v2108
          %v2449 = vpack.c.b16 %v2113, %v2109
          %v2450 = vpack.c.b16 %v2114, %v2110
          %v2451 = vpack.c.b16 %v2115, %v2111
          %v2452 = vpack.c.b16 %v2120, %v2116
          %v2453 = vpack.c.b16 %v2121, %v2117
          %v2454 = vpack.c.b16 %v2122, %v2118
          %v2455 = vpack.c.b16 %v2123, %v2119
          %v2456 = vpack.c.b16 %v2128, %v2124
          %v2457 = vpack.c.b16 %v2129, %v2125
          %v2458 = vpack.c.b16 %v2130, %v2126
          %v2459 = vpack.c.b16 %v2131, %v2127
          %v2460 = vpack.c.b16 %v2136, %v2132
          %v2461 = vpack.c.b16 %v2137, %v2133
          %v2462 = vpack.c.b16 %v2138, %v2134
          %v2463 = vpack.c.b16 %v2139, %v2135
          %v2464 = vpack.c.b16 %v2144, %v2140
          %v2465 = vpack.c.b16 %v2145, %v2141
          %v2466 = vpack.c.b16 %v2146, %v2142
          %v2467 = vpack.c.b16 %v2147, %v2143
          %v2468 = vpack.c.b16 %v2152, %v2148
          %v2469 = vpack.c.b16 %v2153, %v2149
          %v2470 = vpack.c.b16 %v2154, %v2150
          %v2471 = vpack.c.b16 %v2155, %v2151
          %v2472 = vpack.c.b16 %v2160, %v2156
          %v2473 = vpack.c.b16 %v2161, %v2157
          %v2474 = vpack.c.b16 %v2162, %v2158
          %v2475 = vpack.c.b16 %v2163, %v2159
          %v2476 = vpack.c.b16 %v2168, %v2164
          %v2477 = vpack.c.b16 %v2169, %v2165
          %v2478 = vpack.c.b16 %v2170, %v2166
          %v2479 = vpack.c.b16 %v2171, %v2167
          %v2480 = vpack.c.b16 %v2176, %v2172
          %v2481 = vpack.c.b16 %v2177, %v2173
          %v2482 = vpack.c.b16 %v2178, %v2174
          %v2483 = vpack.c.b16 %v2179, %v2175
          %v2484 = vpack.c.b16 %v2184, %v2180
          %v2485 = vpack.c.b16 %v2185, %v2181
          %v2486 = vpack.c.b16 %v2186, %v2182
          %v2487 = vpack.c.b16 %v2187, %v2183
          %v2488 = vpack.c.b16 %v2192, %v2188
          %v2489 = vpack.c.b16 %v2193, %v2189
          %v2490 = vpack.c.b16 %v2194, %v2190
          %v2491 = vpack.c.b16 %v2195, %v2191
          %v2492 = vpack.c.b16 %v2200, %v2196
          %v2493 = vpack.c.b16 %v2201, %v2197
          %v2494 = vpack.c.b16 %v2202, %v2198
          %v2495 = vpack.c.b16 %v2203, %v2199
          %v2496 = vpack.c.b16 %v2208, %v2204
          %v2497 = vpack.c.b16 %v2209, %v2205
          %v2498 = vpack.c.b16 %v2210, %v2206
          %v2499 = vpack.c.b16 %v2211, %v2207
          %v2500 = vpack.c.b16 %v2216, %v2212
          %v2501 = vpack.c.b16 %v2217, %v2213
          %v2502 = vpack.c.b16 %v2218, %v2214
          %v2503 = vpack.c.b16 %v2219, %v2215
          %v2504 = vpack.c.b16 %v2224, %v2220
          %v2505 = vpack.c.b16 %v2225, %v2221
          %v2506 = vpack.c.b16 %v2226, %v2222
          %v2507 = vpack.c.b16 %v2227, %v2223
          %v2508 = vpack.c.b16 %v2232, %v2228
          %v2509 = vpack.c.b16 %v2233, %v2229
          %v2510 = vpack.c.b16 %v2234, %v2230
          %v2511 = vpack.c.b16 %v2235, %v2231
          %v2512 = vpack.c.b16 %v2240, %v2236
          %v2513 = vpack.c.b16 %v2241, %v2237
          %v2514 = vpack.c.b16 %v2242, %v2238
          %v2515 = vpack.c.b16 %v2243, %v2239
          %v2516 = vpack.c.b16 %v2248, %v2244
          %v2517 = vpack.c.b16 %v2249, %v2245
          %v2518 = vpack.c.b16 %v2250, %v2246
          %v2519 = vpack.c.b16 %v2251, %v2247
          %v2520 = vpack.c.b16 %v2256, %v2252
          %v2521 = vpack.c.b16 %v2257, %v2253
          %v2522 = vpack.c.b16 %v2258, %v2254
          %v2523 = vpack.c.b16 %v2259, %v2255
          %v2524 = vpack.c.b16 %v2264, %v2260
          %v2525 = vpack.c.b16 %v2265, %v2261
          %v2526 = vpack.c.b16 %v2266, %v2262
          %v2527 = vpack.c.b16 %v2267, %v2263
          %v2528 = vpack.c.b16 %v2272, %v2268
          %v2529 = vpack.c.b16 %v2273, %v2269
          %v2530 = vpack.c.b16 %v2274, %v2270
          %v2531 = vpack.c.b16 %v2275, %v2271
          %v2789 = vperm.slane %v1507, 0
          %v2790 = vperm.slane %v1507, 1
          %v2791 = vperm.slane %v1507, 2
          %v2792 = vperm.slane %v1507, 3
          %2797 = vmatpush.bf16.msra.mxu0 %v2304
          %2798 = vmatpush.bf16.msra.mxu0 %v2300
          %2799 = vmatpush.bf16.msra.mxu0 %v2296
          %2800 = vmatpush.bf16.msra.mxu0 %v2292
          %2801 = vmatpush.bf16.msra.mxu0 %v2288
          %2802 = vmatpush.bf16.msra.mxu0 %v2284
          %2803 = vmatpush.bf16.msra.mxu0 %v2280
          %2804 = vmatpush.bf16.msra.mxu0 %v2276
          %2805 = vmatmul.bf16.gmra.mxu0 %v1243
          %v2806 = vpop.f32.mrf.mxu0
          %v2807 = vadd.f32 %v2789, %v2806
          %v2808 = vpop.f32.mrf.mxu0
          %2809 = vdwg.mxu0
          %2810 = vmatpush.bf16.msra.mxu0 %v2336
          %2811 = vmatpush.bf16.msra.mxu0 %v2332
          %2812 = vmatpush.bf16.msra.mxu0 %v2328
          %2813 = vmatpush.bf16.msra.mxu0 %v2324
          %2814 = vmatpush.bf16.msra.mxu0 %v2320
          %2815 = vmatpush.bf16.msra.mxu0 %v2316
          %2816 = vmatpush.bf16.msra.mxu0 %v2312
          %2817 = vmatpush.bf16.msra.mxu0 %v2308
          %2818 = vmatmul.bf16.gmra.mxu0 %v1244
          %v2819 = vpop.f32.mrf.mxu0
          %v2820 = vadd.f32 %v2807, %v2819
          %v2821 = vpop.f32.mrf.mxu0
          %2822 = vdwg.mxu0
          %2823 = vmatpush.bf16.msra.mxu0 %v2368
          %2824 = vmatpush.bf16.msra.mxu0 %v2364
          %2825 = vmatpush.bf16.msra.mxu0 %v2360
          %2826 = vmatpush.bf16.msra.mxu0 %v2356
          %2827 = vmatpush.bf16.msra.mxu0 %v2352
          %2828 = vmatpush.bf16.msra.mxu0 %v2348
          %2829 = vmatpush.bf16.msra.mxu0 %v2344
          %2830 = vmatpush.bf16.msra.mxu0 %v2340
          %2831 = vmatmul.bf16.gmra.mxu0 %v1245
          %v2832 = vpop.f32.mrf.mxu0
          %v2833 = vadd.f32 %v2820, %v2832
          %v2834 = vpop.f32.mrf.mxu0
          %2835 = vdwg.mxu0
          %2836 = vmatpush.bf16.msra.mxu0 %v2400
          %2837 = vmatpush.bf16.msra.mxu0 %v2396
          %2838 = vmatpush.bf16.msra.mxu0 %v2392
          %2839 = vmatpush.bf16.msra.mxu0 %v2388
          %2840 = vmatpush.bf16.msra.mxu0 %v2384
          %2841 = vmatpush.bf16.msra.mxu0 %v2380
          %2842 = vmatpush.bf16.msra.mxu0 %v2376
          %2843 = vmatpush.bf16.msra.mxu0 %v2372
          %2844 = vmatmul.bf16.gmra.mxu0 %v1246
          %v2845 = vpop.f32.mrf.mxu0
          %v2846 = vadd.f32 %v2833, %v2845
          %v2847 = vpop.f32.mrf.mxu0
          %2848 = vdwg.mxu0
          %2849 = vmatpush.bf16.msra.mxu0 %v2432
          %2850 = vmatpush.bf16.msra.mxu0 %v2428
          %2851 = vmatpush.bf16.msra.mxu0 %v2424
          %2852 = vmatpush.bf16.msra.mxu0 %v2420
          %2853 = vmatpush.bf16.msra.mxu0 %v2416
          %2854 = vmatpush.bf16.msra.mxu0 %v2412
          %2855 = vmatpush.bf16.msra.mxu0 %v2408
          %2856 = vmatpush.bf16.msra.mxu0 %v2404
          %2857 = vmatmul.bf16.gmra.mxu0 %v1247
          %v2858 = vpop.f32.mrf.mxu0
          %v2859 = vadd.f32 %v2846, %v2858
          %v2860 = vpop.f32.mrf.mxu0
          %2861 = vdwg.mxu0
          %2862 = vmatpush.bf16.msra.mxu0 %v2464
          %2863 = vmatpush.bf16.msra.mxu0 %v2460
          %2864 = vmatpush.bf16.msra.mxu0 %v2456
          %2865 = vmatpush.bf16.msra.mxu0 %v2452
          %2866 = vmatpush.bf16.msra.mxu0 %v2448
          %2867 = vmatpush.bf16.msra.mxu0 %v2444
          %2868 = vmatpush.bf16.msra.mxu0 %v2440
          %2869 = vmatpush.bf16.msra.mxu0 %v2436
          %2870 = vmatmul.bf16.gmra.mxu0 %v1248
          %v2871 = vpop.f32.mrf.mxu0
          %v2872 = vadd.f32 %v2859, %v2871
          %v2873 = vpop.f32.mrf.mxu0
          %2874 = vdwg.mxu0
          %2875 = vmatpush.bf16.msra.mxu0 %v2496
          %2876 = vmatpush.bf16.msra.mxu0 %v2492
          %2877 = vmatpush.bf16.msra.mxu0 %v2488
          %2878 = vmatpush.bf16.msra.mxu0 %v2484
          %2879 = vmatpush.bf16.msra.mxu0 %v2480
          %2880 = vmatpush.bf16.msra.mxu0 %v2476
          %2881 = vmatpush.bf16.msra.mxu0 %v2472
          %2882 = vmatpush.bf16.msra.mxu0 %v2468
          %2883 = vmatmul.bf16.gmra.mxu0 %v1249
          %v2884 = vpop.f32.mrf.mxu0
          %v2885 = vadd.f32 %v2872, %v2884
          %v2886 = vpop.f32.mrf.mxu0
          %2887 = vdwg.mxu0
          %2888 = vmatpush.bf16.msra.mxu0 %v2528
          %2889 = vmatpush.bf16.msra.mxu0 %v2524
          %2890 = vmatpush.bf16.msra.mxu0 %v2520
          %2891 = vmatpush.bf16.msra.mxu0 %v2516
          %2892 = vmatpush.bf16.msra.mxu0 %v2512
          %2893 = vmatpush.bf16.msra.mxu0 %v2508
          %2894 = vmatpush.bf16.msra.mxu0 %v2504
          %2895 = vmatpush.bf16.msra.mxu0 %v2500
          %2896 = vmatmul.bf16.gmra.mxu0 %v1250
          %v2897 = vpop.f32.mrf.mxu0
          %v2898 = vadd.f32 %v2885, %v2897
          %v2899 = vpop.f32.mrf.mxu0
          %2900 = vdwg.mxu0
          %2901 = vmatpush.bf16.msra.mxu0 %v2305
          %2902 = vmatpush.bf16.msra.mxu0 %v2301
          %2903 = vmatpush.bf16.msra.mxu0 %v2297
          %2904 = vmatpush.bf16.msra.mxu0 %v2293
          %2905 = vmatpush.bf16.msra.mxu0 %v2289
          %2906 = vmatpush.bf16.msra.mxu0 %v2285
          %2907 = vmatpush.bf16.msra.mxu0 %v2281
          %2908 = vmatpush.bf16.msra.mxu0 %v2277
          %2909 = vmatmul.bf16.gmra.mxu0 %v1243
          %v2910 = vpop.f32.mrf.mxu0
          %v2911 = vadd.f32 %v2790, %v2910
          %v2912 = vpop.f32.mrf.mxu0
          %2913 = vdwg.mxu0
          %2914 = vmatpush.bf16.msra.mxu0 %v2337
          %2915 = vmatpush.bf16.msra.mxu0 %v2333
          %2916 = vmatpush.bf16.msra.mxu0 %v2329
          %2917 = vmatpush.bf16.msra.mxu0 %v2325
          %2918 = vmatpush.bf16.msra.mxu0 %v2321
          %2919 = vmatpush.bf16.msra.mxu0 %v2317
          %2920 = vmatpush.bf16.msra.mxu0 %v2313
          %2921 = vmatpush.bf16.msra.mxu0 %v2309
          %2922 = vmatmul.bf16.gmra.mxu0 %v1244
          %v2923 = vpop.f32.mrf.mxu0
          %v2924 = vadd.f32 %v2911, %v2923
          %v2925 = vpop.f32.mrf.mxu0
          %2926 = vdwg.mxu0
          %2927 = vmatpush.bf16.msra.mxu0 %v2369
          %2928 = vmatpush.bf16.msra.mxu0 %v2365
          %2929 = vmatpush.bf16.msra.mxu0 %v2361
          %2930 = vmatpush.bf16.msra.mxu0 %v2357
          %2931 = vmatpush.bf16.msra.mxu0 %v2353
          %2932 = vmatpush.bf16.msra.mxu0 %v2349
          %2933 = vmatpush.bf16.msra.mxu0 %v2345
          %2934 = vmatpush.bf16.msra.mxu0 %v2341
          %2935 = vmatmul.bf16.gmra.mxu0 %v1245
          %v2936 = vpop.f32.mrf.mxu0
          %v2937 = vadd.f32 %v2924, %v2936
          %v2938 = vpop.f32.mrf.mxu0
          %2939 = vdwg.mxu0
          %2940 = vmatpush.bf16.msra.mxu0 %v2401
          %2941 = vmatpush.bf16.msra.mxu0 %v2397
          %2942 = vmatpush.bf16.msra.mxu0 %v2393
          %2943 = vmatpush.bf16.msra.mxu0 %v2389
          %2944 = vmatpush.bf16.msra.mxu0 %v2385
          %2945 = vmatpush.bf16.msra.mxu0 %v2381
          %2946 = vmatpush.bf16.msra.mxu0 %v2377
          %2947 = vmatpush.bf16.msra.mxu0 %v2373
          %2948 = vmatmul.bf16.gmra.mxu0 %v1246
          %v2949 = vpop.f32.mrf.mxu0
          %v2950 = vadd.f32 %v2937, %v2949
          %v2951 = vpop.f32.mrf.mxu0
          %2952 = vdwg.mxu0
          %2953 = vmatpush.bf16.msra.mxu0 %v2433
          %2954 = vmatpush.bf16.msra.mxu0 %v2429
          %2955 = vmatpush.bf16.msra.mxu0 %v2425
          %2956 = vmatpush.bf16.msra.mxu0 %v2421
          %2957 = vmatpush.bf16.msra.mxu0 %v2417
          %2958 = vmatpush.bf16.msra.mxu0 %v2413
          %2959 = vmatpush.bf16.msra.mxu0 %v2409
          %2960 = vmatpush.bf16.msra.mxu0 %v2405
          %2961 = vmatmul.bf16.gmra.mxu0 %v1247
          %v2962 = vpop.f32.mrf.mxu0
          %v2963 = vadd.f32 %v2950, %v2962
          %v2964 = vpop.f32.mrf.mxu0
          %2965 = vdwg.mxu0
          %2966 = vmatpush.bf16.msra.mxu0 %v2465
          %2967 = vmatpush.bf16.msra.mxu0 %v2461
          %2968 = vmatpush.bf16.msra.mxu0 %v2457
          %2969 = vmatpush.bf16.msra.mxu0 %v2453
          %2970 = vmatpush.bf16.msra.mxu0 %v2449
          %2971 = vmatpush.bf16.msra.mxu0 %v2445
          %2972 = vmatpush.bf16.msra.mxu0 %v2441
          %2973 = vmatpush.bf16.msra.mxu0 %v2437
          %2974 = vmatmul.bf16.gmra.mxu0 %v1248
          %v2975 = vpop.f32.mrf.mxu0
          %v2976 = vadd.f32 %v2963, %v2975
          %v2977 = vpop.f32.mrf.mxu0
          %2978 = vdwg.mxu0
          %2979 = vmatpush.bf16.msra.mxu0 %v2497
          %2980 = vmatpush.bf16.msra.mxu0 %v2493
          %2981 = vmatpush.bf16.msra.mxu0 %v2489
          %2982 = vmatpush.bf16.msra.mxu0 %v2485
          %2983 = vmatpush.bf16.msra.mxu0 %v2481
          %2984 = vmatpush.bf16.msra.mxu0 %v2477
          %2985 = vmatpush.bf16.msra.mxu0 %v2473
          %2986 = vmatpush.bf16.msra.mxu0 %v2469
          %2987 = vmatmul.bf16.gmra.mxu0 %v1249
          %v2988 = vpop.f32.mrf.mxu0
          %v2989 = vadd.f32 %v2976, %v2988
          %v2990 = vpop.f32.mrf.mxu0
          %2991 = vdwg.mxu0
          %2992 = vmatpush.bf16.msra.mxu0 %v2529
          %2993 = vmatpush.bf16.msra.mxu0 %v2525
          %2994 = vmatpush.bf16.msra.mxu0 %v2521
          %2995 = vmatpush.bf16.msra.mxu0 %v2517
          %2996 = vmatpush.bf16.msra.mxu0 %v2513
          %2997 = vmatpush.bf16.msra.mxu0 %v2509
          %2998 = vmatpush.bf16.msra.mxu0 %v2505
          %2999 = vmatpush.bf16.msra.mxu0 %v2501
          %3000 = vmatmul.bf16.gmra.mxu0 %v1250
          %v3001 = vpop.f32.mrf.mxu0
          %v3002 = vadd.f32 %v2989, %v3001
          %v3003 = vpop.f32.mrf.mxu0
          %3004 = vdwg.mxu0
          %3005 = vmatpush.bf16.msra.mxu0 %v2306
          %3006 = vmatpush.bf16.msra.mxu0 %v2302
          %3007 = vmatpush.bf16.msra.mxu0 %v2298
          %3008 = vmatpush.bf16.msra.mxu0 %v2294
          %3009 = vmatpush.bf16.msra.mxu0 %v2290
          %3010 = vmatpush.bf16.msra.mxu0 %v2286
          %3011 = vmatpush.bf16.msra.mxu0 %v2282
          %3012 = vmatpush.bf16.msra.mxu0 %v2278
          %3013 = vmatmul.bf16.gmra.mxu0 %v1243
          %v3014 = vpop.f32.mrf.mxu0
          %v3015 = vadd.f32 %v2791, %v3014
          %v3016 = vpop.f32.mrf.mxu0
          %3017 = vdwg.mxu0
          %3018 = vmatpush.bf16.msra.mxu0 %v2338
          %3019 = vmatpush.bf16.msra.mxu0 %v2334
          %3020 = vmatpush.bf16.msra.mxu0 %v2330
          %3021 = vmatpush.bf16.msra.mxu0 %v2326
          %3022 = vmatpush.bf16.msra.mxu0 %v2322
          %3023 = vmatpush.bf16.msra.mxu0 %v2318
          %3024 = vmatpush.bf16.msra.mxu0 %v2314
          %3025 = vmatpush.bf16.msra.mxu0 %v2310
          %3026 = vmatmul.bf16.gmra.mxu0 %v1244
          %v3027 = vpop.f32.mrf.mxu0
          %v3028 = vadd.f32 %v3015, %v3027
          %v3029 = vpop.f32.mrf.mxu0
          %3030 = vdwg.mxu0
          %3031 = vmatpush.bf16.msra.mxu0 %v2370
          %3032 = vmatpush.bf16.msra.mxu0 %v2366
          %3033 = vmatpush.bf16.msra.mxu0 %v2362
          %3034 = vmatpush.bf16.msra.mxu0 %v2358
          %3035 = vmatpush.bf16.msra.mxu0 %v2354
          %3036 = vmatpush.bf16.msra.mxu0 %v2350
          %3037 = vmatpush.bf16.msra.mxu0 %v2346
          %3038 = vmatpush.bf16.msra.mxu0 %v2342
          %3039 = vmatmul.bf16.gmra.mxu0 %v1245
          %v3040 = vpop.f32.mrf.mxu0
          %v3041 = vadd.f32 %v3028, %v3040
          %v3042 = vpop.f32.mrf.mxu0
          %3043 = vdwg.mxu0
          %3044 = vmatpush.bf16.msra.mxu0 %v2402
          %3045 = vmatpush.bf16.msra.mxu0 %v2398
          %3046 = vmatpush.bf16.msra.mxu0 %v2394
          %3047 = vmatpush.bf16.msra.mxu0 %v2390
          %3048 = vmatpush.bf16.msra.mxu0 %v2386
          %3049 = vmatpush.bf16.msra.mxu0 %v2382
          %3050 = vmatpush.bf16.msra.mxu0 %v2378
          %3051 = vmatpush.bf16.msra.mxu0 %v2374
          %3052 = vmatmul.bf16.gmra.mxu0 %v1246
          %v3053 = vpop.f32.mrf.mxu0
          %v3054 = vadd.f32 %v3041, %v3053
          %v3055 = vpop.f32.mrf.mxu0
          %3056 = vdwg.mxu0
          %3057 = vmatpush.bf16.msra.mxu0 %v2434
          %3058 = vmatpush.bf16.msra.mxu0 %v2430
          %3059 = vmatpush.bf16.msra.mxu0 %v2426
          %3060 = vmatpush.bf16.msra.mxu0 %v2422
          %3061 = vmatpush.bf16.msra.mxu0 %v2418
          %3062 = vmatpush.bf16.msra.mxu0 %v2414
          %3063 = vmatpush.bf16.msra.mxu0 %v2410
          %3064 = vmatpush.bf16.msra.mxu0 %v2406
          %3065 = vmatmul.bf16.gmra.mxu0 %v1247
          %v3066 = vpop.f32.mrf.mxu0
          %v3067 = vadd.f32 %v3054, %v3066
          %v3068 = vpop.f32.mrf.mxu0
          %3069 = vdwg.mxu0
          %3070 = vmatpush.bf16.msra.mxu0 %v2466
          %3071 = vmatpush.bf16.msra.mxu0 %v2462
          %3072 = vmatpush.bf16.msra.mxu0 %v2458
          %3073 = vmatpush.bf16.msra.mxu0 %v2454
          %3074 = vmatpush.bf16.msra.mxu0 %v2450
          %3075 = vmatpush.bf16.msra.mxu0 %v2446
          %3076 = vmatpush.bf16.msra.mxu0 %v2442
          %3077 = vmatpush.bf16.msra.mxu0 %v2438
          %3078 = vmatmul.bf16.gmra.mxu0 %v1248
          %v3079 = vpop.f32.mrf.mxu0
          %v3080 = vadd.f32 %v3067, %v3079
          %v3081 = vpop.f32.mrf.mxu0
          %3082 = vdwg.mxu0
          %3083 = vmatpush.bf16.msra.mxu0 %v2498
          %3084 = vmatpush.bf16.msra.mxu0 %v2494
          %3085 = vmatpush.bf16.msra.mxu0 %v2490
          %3086 = vmatpush.bf16.msra.mxu0 %v2486
          %3087 = vmatpush.bf16.msra.mxu0 %v2482
          %3088 = vmatpush.bf16.msra.mxu0 %v2478
          %3089 = vmatpush.bf16.msra.mxu0 %v2474
          %3090 = vmatpush.bf16.msra.mxu0 %v2470
          %3091 = vmatmul.bf16.gmra.mxu0 %v1249
          %v3092 = vpop.f32.mrf.mxu0
          %v3093 = vadd.f32 %v3080, %v3092
          %v3094 = vpop.f32.mrf.mxu0
          %3095 = vdwg.mxu0
          %3096 = vmatpush.bf16.msra.mxu0 %v2530
          %3097 = vmatpush.bf16.msra.mxu0 %v2526
          %3098 = vmatpush.bf16.msra.mxu0 %v2522
          %3099 = vmatpush.bf16.msra.mxu0 %v2518
          %3100 = vmatpush.bf16.msra.mxu0 %v2514
          %3101 = vmatpush.bf16.msra.mxu0 %v2510
          %3102 = vmatpush.bf16.msra.mxu0 %v2506
          %3103 = vmatpush.bf16.msra.mxu0 %v2502
          %3104 = vmatmul.bf16.gmra.mxu0 %v1250
          %v3105 = vpop.f32.mrf.mxu0
          %v3106 = vadd.f32 %v3093, %v3105
          %v3107 = vpop.f32.mrf.mxu0
          %3108 = vdwg.mxu0
          %3109 = vmatpush.bf16.msra.mxu0 %v2307
          %3110 = vmatpush.bf16.msra.mxu0 %v2303
          %3111 = vmatpush.bf16.msra.mxu0 %v2299
          %3112 = vmatpush.bf16.msra.mxu0 %v2295
          %3113 = vmatpush.bf16.msra.mxu0 %v2291
          %3114 = vmatpush.bf16.msra.mxu0 %v2287
          %3115 = vmatpush.bf16.msra.mxu0 %v2283
          %3116 = vmatpush.bf16.msra.mxu0 %v2279
          %3117 = vmatmul.bf16.gmra.mxu0 %v1243
          %v3118 = vpop.f32.mrf.mxu0
          %v3119 = vadd.f32 %v2792, %v3118
          %v3120 = vpop.f32.mrf.mxu0
          %3121 = vdwg.mxu0
          %3122 = vmatpush.bf16.msra.mxu0 %v2339
          %3123 = vmatpush.bf16.msra.mxu0 %v2335
          %3124 = vmatpush.bf16.msra.mxu0 %v2331
          %3125 = vmatpush.bf16.msra.mxu0 %v2327
          %3126 = vmatpush.bf16.msra.mxu0 %v2323
          %3127 = vmatpush.bf16.msra.mxu0 %v2319
          %3128 = vmatpush.bf16.msra.mxu0 %v2315
          %3129 = vmatpush.bf16.msra.mxu0 %v2311
          %3130 = vmatmul.bf16.gmra.mxu0 %v1244
          %v3131 = vpop.f32.mrf.mxu0
          %v3132 = vadd.f32 %v3119, %v3131
          %v3133 = vpop.f32.mrf.mxu0
          %3134 = vdwg.mxu0
          %3135 = vmatpush.bf16.msra.mxu0 %v2371
          %3136 = vmatpush.bf16.msra.mxu0 %v2367
          %3137 = vmatpush.bf16.msra.mxu0 %v2363
          %3138 = vmatpush.bf16.msra.mxu0 %v2359
          %3139 = vmatpush.bf16.msra.mxu0 %v2355
          %3140 = vmatpush.bf16.msra.mxu0 %v2351
          %3141 = vmatpush.bf16.msra.mxu0 %v2347
          %3142 = vmatpush.bf16.msra.mxu0 %v2343
          %3143 = vmatmul.bf16.gmra.mxu0 %v1245
          %v3144 = vpop.f32.mrf.mxu0
          %v3145 = vadd.f32 %v3132, %v3144
          %v3146 = vpop.f32.mrf.mxu0
          %3147 = vdwg.mxu0
          %3148 = vmatpush.bf16.msra.mxu0 %v2403
          %3149 = vmatpush.bf16.msra.mxu0 %v2399
          %3150 = vmatpush.bf16.msra.mxu0 %v2395
          %3151 = vmatpush.bf16.msra.mxu0 %v2391
          %3152 = vmatpush.bf16.msra.mxu0 %v2387
          %3153 = vmatpush.bf16.msra.mxu0 %v2383
          %3154 = vmatpush.bf16.msra.mxu0 %v2379
          %3155 = vmatpush.bf16.msra.mxu0 %v2375
          %3156 = vmatmul.bf16.gmra.mxu0 %v1246
          %v3157 = vpop.f32.mrf.mxu0
          %v3158 = vadd.f32 %v3145, %v3157
          %v3159 = vpop.f32.mrf.mxu0
          %3160 = vdwg.mxu0
          %3161 = vmatpush.bf16.msra.mxu0 %v2435
          %3162 = vmatpush.bf16.msra.mxu0 %v2431
          %3163 = vmatpush.bf16.msra.mxu0 %v2427
          %3164 = vmatpush.bf16.msra.mxu0 %v2423
          %3165 = vmatpush.bf16.msra.mxu0 %v2419
          %3166 = vmatpush.bf16.msra.mxu0 %v2415
          %3167 = vmatpush.bf16.msra.mxu0 %v2411
          %3168 = vmatpush.bf16.msra.mxu0 %v2407
          %3169 = vmatmul.bf16.gmra.mxu0 %v1247
          %v3170 = vpop.f32.mrf.mxu0
          %v3171 = vadd.f32 %v3158, %v3170
          %v3172 = vpop.f32.mrf.mxu0
          %3173 = vdwg.mxu0
          %3174 = vmatpush.bf16.msra.mxu0 %v2467
          %3175 = vmatpush.bf16.msra.mxu0 %v2463
          %3176 = vmatpush.bf16.msra.mxu0 %v2459
          %3177 = vmatpush.bf16.msra.mxu0 %v2455
          %3178 = vmatpush.bf16.msra.mxu0 %v2451
          %3179 = vmatpush.bf16.msra.mxu0 %v2447
          %3180 = vmatpush.bf16.msra.mxu0 %v2443
          %3181 = vmatpush.bf16.msra.mxu0 %v2439
          %3182 = vmatmul.bf16.gmra.mxu0 %v1248
          %v3183 = vpop.f32.mrf.mxu0
          %v3184 = vadd.f32 %v3171, %v3183
          %v3185 = vpop.f32.mrf.mxu0
          %3186 = vdwg.mxu0
          %3187 = vmatpush.bf16.msra.mxu0 %v2499
          %3188 = vmatpush.bf16.msra.mxu0 %v2495
          %3189 = vmatpush.bf16.msra.mxu0 %v2491
          %3190 = vmatpush.bf16.msra.mxu0 %v2487
          %3191 = vmatpush.bf16.msra.mxu0 %v2483
          %3192 = vmatpush.bf16.msra.mxu0 %v2479
          %3193 = vmatpush.bf16.msra.mxu0 %v2475
          %3194 = vmatpush.bf16.msra.mxu0 %v2471
          %3195 = vmatmul.bf16.gmra.mxu0 %v1249
          %v3196 = vpop.f32.mrf.mxu0
          %v3197 = vadd.f32 %v3184, %v3196
          %v3198 = vpop.f32.mrf.mxu0
          %3199 = vdwg.mxu0
          %3200 = vmatpush.bf16.msra.mxu0 %v2531
          %3201 = vmatpush.bf16.msra.mxu0 %v2527
          %3202 = vmatpush.bf16.msra.mxu0 %v2523
          %3203 = vmatpush.bf16.msra.mxu0 %v2519
          %3204 = vmatpush.bf16.msra.mxu0 %v2515
          %3205 = vmatpush.bf16.msra.mxu0 %v2511
          %3206 = vmatpush.bf16.msra.mxu0 %v2507
          %3207 = vmatpush.bf16.msra.mxu0 %v2503
          %3208 = vmatmul.bf16.gmra.mxu0 %v1250
          %v3209 = vpop.f32.mrf.mxu0
          %v3210 = vadd.f32 %v3197, %v3209
          %v3211 = vpop.f32.mrf.mxu0
          %3212 = vdwg.mxu0
          %v3213 = vmax.f32 %v2898, 0.0
          %v3214 = vmax.f32 %v3002, 0.0
          %v3215 = vmax.f32 %v3106, 0.0
          %v3216 = vmax.f32 %v3210, 0.0
          %v3217 = vpack.c.bf16 %v3213, %v3213
          %v3218 = vpack.c.bf16 %v3214, %v3214
          %v3219 = vpack.c.bf16 %v3215, %v3215
          %v3220 = vpack.c.bf16 %v3216, %v3216
          %v3221 = vld [vmem:[#allocation8] sm:$0xff]
          %v3222 = vld [vmem:[#allocation8 + $0x8] sm:$0xff]
          %v3223 = vld [vmem:[#allocation8 + $0x10] sm:$0xff]
          %v3224 = vld [vmem:[#allocation8 + $0x18] sm:$0xff]
          %v3225 = vld [vmem:[#allocation8 + $0x20] sm:$0xff]
          %v3226 = vld [vmem:[#allocation8 + $0x28] sm:$0xff]
          %v3227 = vld [vmem:[#allocation8 + $0x30] sm:$0xff]
          %v3228 = vld [vmem:[#allocation8 + $0x38] sm:$0xff]
          %v3229 = vld [vmem:[#allocation8 + $0x40] sm:$0xff]
          %v3230 = vld [vmem:[#allocation8 + $0x48] sm:$0xff]
          %v3231 = vld [vmem:[#allocation8 + $0x50] sm:$0xff]
          %v3232 = vld [vmem:[#allocation8 + $0x58] sm:$0xff]
          %v3233 = vld [vmem:[#allocation8 + $0x60] sm:$0xff]
          %v3234 = vld [vmem:[#allocation8 + $0x68] sm:$0xff]
          %v3235 = vld [vmem:[#allocation8 + $0x70] sm:$0xff]
          %v3236 = vld [vmem:[#allocation8 + $0x78] sm:$0xff]
          %v3237 = vld [vmem:[#allocation8 + $0x80] sm:$0xff]
          %v3238 = vld [vmem:[#allocation8 + $0x88] sm:$0xff]
          %v3239 = vld [vmem:[#allocation8 + $0x90] sm:$0xff]
          %v3240 = vld [vmem:[#allocation8 + $0x98] sm:$0xff]
          %v3241 = vld [vmem:[#allocation8 + $0xa0] sm:$0xff]
          %v3242 = vld [vmem:[#allocation8 + $0xa8] sm:$0xff]
          %v3243 = vld [vmem:[#allocation8 + $0xb0] sm:$0xff]
          %v3244 = vld [vmem:[#allocation8 + $0xb8] sm:$0xff]
          %v3245 = vld [vmem:[#allocation8 + $0xc0] sm:$0xff]
          %v3246 = vld [vmem:[#allocation8 + $0xc8] sm:$0xff]
          %v3247 = vld [vmem:[#allocation8 + $0xd0] sm:$0xff]
          %v3248 = vld [vmem:[#allocation8 + $0xd8] sm:$0xff]
          %v3249 = vld [vmem:[#allocation8 + $0xe0] sm:$0xff]
          %v3250 = vld [vmem:[#allocation8 + $0xe8] sm:$0xff]
          %v3251 = vld [vmem:[#allocation8 + $0xf0] sm:$0xff]
          %v3252 = vld [vmem:[#allocation8 + $0xf8] sm:$0xff]
          %v3253 = vld [vmem:[#allocation8 + $0x100] sm:$0xff]
          %v3254 = vld [vmem:[#allocation8 + $0x108] sm:$0xff]
          %v3255 = vld [vmem:[#allocation8 + $0x110] sm:$0xff]
          %v3256 = vld [vmem:[#allocation8 + $0x118] sm:$0xff]
          %v3257 = vld [vmem:[#allocation8 + $0x120] sm:$0xff]
          %v3258 = vld [vmem:[#allocation8 + $0x128] sm:$0xff]
          %v3259 = vld [vmem:[#allocation8 + $0x130] sm:$0xff]
          %v3260 = vld [vmem:[#allocation8 + $0x138] sm:$0xff]
          %v3261 = vld [vmem:[#allocation8 + $0x140] sm:$0xff]
          %v3262 = vld [vmem:[#allocation8 + $0x148] sm:$0xff]
          %v3263 = vld [vmem:[#allocation8 + $0x150] sm:$0xff]
          %v3264 = vld [vmem:[#allocation8 + $0x158] sm:$0xff]
          %v3265 = vld [vmem:[#allocation8 + $0x160] sm:$0xff]
          %v3266 = vld [vmem:[#allocation8 + $0x168] sm:$0xff]
          %v3267 = vld [vmem:[#allocation8 + $0x170] sm:$0xff]
          %v3268 = vld [vmem:[#allocation8 + $0x178] sm:$0xff]
          %v3269 = vld [vmem:[#allocation8 + $0x180] sm:$0xff]
          %v3270 = vld [vmem:[#allocation8 + $0x188] sm:$0xff]
          %v3271 = vld [vmem:[#allocation8 + $0x190] sm:$0xff]
          %v3272 = vld [vmem:[#allocation8 + $0x198] sm:$0xff]
          %v3273 = vld [vmem:[#allocation8 + $0x1a0] sm:$0xff]
          %v3274 = vld [vmem:[#allocation8 + $0x1a8] sm:$0xff]
          %v3275 = vld [vmem:[#allocation8 + $0x1b0] sm:$0xff]
          %v3276 = vld [vmem:[#allocation8 + $0x1b8] sm:$0xff]
          %v3277 = vld [vmem:[#allocation8 + $0x1c0] sm:$0xff]
          %v3278 = vld [vmem:[#allocation8 + $0x1c8] sm:$0xff]
          %v3279 = vld [vmem:[#allocation8 + $0x1d0] sm:$0xff]
          %v3280 = vld [vmem:[#allocation8 + $0x1d8] sm:$0xff]
          %v3281 = vld [vmem:[#allocation8 + $0x1e0] sm:$0xff]
          %v3282 = vld [vmem:[#allocation8 + $0x1e8] sm:$0xff]
          %v3283 = vld [vmem:[#allocation8 + $0x1f0] sm:$0xff]
          %v3284 = vld [vmem:[#allocation8 + $0x1f8] sm:$0xff]
          %v3285 = vld [vmem:[%s10] sm:$0x3]
          %v3350 = vunpack.c.l.b16 %v3221
          %v3351 = vunpack.c.h.b16 %v3221
          %v3352 = vunpack.c.l.b16 %v3222
          %v3353 = vunpack.c.h.b16 %v3222
          %v3354 = vunpack.c.l.b16 %v3223
          %v3355 = vunpack.c.h.b16 %v3223
          %v3356 = vunpack.c.l.b16 %v3224
          %v3357 = vunpack.c.h.b16 %v3224
          %v3358 = vunpack.c.l.b16 %v3225
          %v3359 = vunpack.c.h.b16 %v3225
          %v3360 = vunpack.c.l.b16 %v3226
          %v3361 = vunpack.c.h.b16 %v3226
          %v3362 = vunpack.c.l.b16 %v3227
          %v3363 = vunpack.c.h.b16 %v3227
          %v3364 = vunpack.c.l.b16 %v3228
          %v3365 = vunpack.c.h.b16 %v3228
          %v3366 = vunpack.c.l.b16 %v3229
          %v3367 = vunpack.c.h.b16 %v3229
          %v3368 = vunpack.c.l.b16 %v3230
          %v3369 = vunpack.c.h.b16 %v3230
          %v3370 = vunpack.c.l.b16 %v3231
          %v3371 = vunpack.c.h.b16 %v3231
          %v3372 = vunpack.c.l.b16 %v3232
          %v3373 = vunpack.c.h.b16 %v3232
          %v3374 = vunpack.c.l.b16 %v3233
          %v3375 = vunpack.c.h.b16 %v3233
          %v3376 = vunpack.c.l.b16 %v3234
          %v3377 = vunpack.c.h.b16 %v3234
          %v3378 = vunpack.c.l.b16 %v3235
          %v3379 = vunpack.c.h.b16 %v3235
          %v3380 = vunpack.c.l.b16 %v3236
          %v3381 = vunpack.c.h.b16 %v3236
          %v3382 = vunpack.c.l.b16 %v3237
          %v3383 = vunpack.c.h.b16 %v3237
          %v3384 = vunpack.c.l.b16 %v3238
          %v3385 = vunpack.c.h.b16 %v3238
          %v3386 = vunpack.c.l.b16 %v3239
          %v3387 = vunpack.c.h.b16 %v3239
          %v3388 = vunpack.c.l.b16 %v3240
          %v3389 = vunpack.c.h.b16 %v3240
          %v3390 = vunpack.c.l.b16 %v3241
          %v3391 = vunpack.c.h.b16 %v3241
          %v3392 = vunpack.c.l.b16 %v3242
          %v3393 = vunpack.c.h.b16 %v3242
          %v3394 = vunpack.c.l.b16 %v3243
          %v3395 = vunpack.c.h.b16 %v3243
          %v3396 = vunpack.c.l.b16 %v3244
          %v3397 = vunpack.c.h.b16 %v3244
          %v3398 = vunpack.c.l.b16 %v3245
          %v3399 = vunpack.c.h.b16 %v3245
          %v3400 = vunpack.c.l.b16 %v3246
          %v3401 = vunpack.c.h.b16 %v3246
          %v3402 = vunpack.c.l.b16 %v3247
          %v3403 = vunpack.c.h.b16 %v3247
          %v3404 = vunpack.c.l.b16 %v3248
          %v3405 = vunpack.c.h.b16 %v3248
          %v3406 = vunpack.c.l.b16 %v3249
          %v3407 = vunpack.c.h.b16 %v3249
          %v3408 = vunpack.c.l.b16 %v3250
          %v3409 = vunpack.c.h.b16 %v3250
          %v3410 = vunpack.c.l.b16 %v3251
          %v3411 = vunpack.c.h.b16 %v3251
          %v3412 = vunpack.c.l.b16 %v3252
          %v3413 = vunpack.c.h.b16 %v3252
          %v3414 = vunpack.c.l.b16 %v3253
          %v3415 = vunpack.c.h.b16 %v3253
          %v3416 = vunpack.c.l.b16 %v3254
          %v3417 = vunpack.c.h.b16 %v3254
          %v3418 = vunpack.c.l.b16 %v3255
          %v3419 = vunpack.c.h.b16 %v3255
          %v3420 = vunpack.c.l.b16 %v3256
          %v3421 = vunpack.c.h.b16 %v3256
          %v3422 = vunpack.c.l.b16 %v3257
          %v3423 = vunpack.c.h.b16 %v3257
          %v3424 = vunpack.c.l.b16 %v3258
          %v3425 = vunpack.c.h.b16 %v3258
          %v3426 = vunpack.c.l.b16 %v3259
          %v3427 = vunpack.c.h.b16 %v3259
          %v3428 = vunpack.c.l.b16 %v3260
          %v3429 = vunpack.c.h.b16 %v3260
          %v3430 = vunpack.c.l.b16 %v3261
          %v3431 = vunpack.c.h.b16 %v3261
          %v3432 = vunpack.c.l.b16 %v3262
          %v3433 = vunpack.c.h.b16 %v3262
          %v3434 = vunpack.c.l.b16 %v3263
          %v3435 = vunpack.c.h.b16 %v3263
          %v3436 = vunpack.c.l.b16 %v3264
          %v3437 = vunpack.c.h.b16 %v3264
          %v3438 = vunpack.c.l.b16 %v3265
          %v3439 = vunpack.c.h.b16 %v3265
          %v3440 = vunpack.c.l.b16 %v3266
          %v3441 = vunpack.c.h.b16 %v3266
          %v3442 = vunpack.c.l.b16 %v3267
          %v3443 = vunpack.c.h.b16 %v3267
          %v3444 = vunpack.c.l.b16 %v3268
          %v3445 = vunpack.c.h.b16 %v3268
          %v3446 = vunpack.c.l.b16 %v3269
          %v3447 = vunpack.c.h.b16 %v3269
          %v3448 = vunpack.c.l.b16 %v3270
          %v3449 = vunpack.c.h.b16 %v3270
          %v3450 = vunpack.c.l.b16 %v3271
          %v3451 = vunpack.c.h.b16 %v3271
          %v3452 = vunpack.c.l.b16 %v3272
          %v3453 = vunpack.c.h.b16 %v3272
          %v3454 = vunpack.c.l.b16 %v3273
          %v3455 = vunpack.c.h.b16 %v3273
          %v3456 = vunpack.c.l.b16 %v3274
          %v3457 = vunpack.c.h.b16 %v3274
          %v3458 = vunpack.c.l.b16 %v3275
          %v3459 = vunpack.c.h.b16 %v3275
          %v3460 = vunpack.c.l.b16 %v3276
          %v3461 = vunpack.c.h.b16 %v3276
          %v3462 = vunpack.c.l.b16 %v3277
          %v3463 = vunpack.c.h.b16 %v3277
          %v3464 = vunpack.c.l.b16 %v3278
          %v3465 = vunpack.c.h.b16 %v3278
          %v3466 = vunpack.c.l.b16 %v3279
          %v3467 = vunpack.c.h.b16 %v3279
          %v3468 = vunpack.c.l.b16 %v3280
          %v3469 = vunpack.c.h.b16 %v3280
          %v3470 = vunpack.c.l.b16 %v3281
          %v3471 = vunpack.c.h.b16 %v3281
          %v3472 = vunpack.c.l.b16 %v3282
          %v3473 = vunpack.c.h.b16 %v3282
          %v3474 = vunpack.c.l.b16 %v3283
          %v3475 = vunpack.c.h.b16 %v3283
          %v3476 = vunpack.c.l.b16 %v3284
          %v3477 = vunpack.c.h.b16 %v3284
          %v3478 = vpack.c.b16 %v3352, %v3350
          %v3479 = vpack.c.b16 %v3353, %v3351
          %v3480 = vpack.c.b16 %v3356, %v3354
          %v3481 = vpack.c.b16 %v3357, %v3355
          %v3482 = vpack.c.b16 %v3360, %v3358
          %v3483 = vpack.c.b16 %v3361, %v3359
          %v3484 = vpack.c.b16 %v3364, %v3362
          %v3485 = vpack.c.b16 %v3365, %v3363
          %v3486 = vpack.c.b16 %v3368, %v3366
          %v3487 = vpack.c.b16 %v3369, %v3367
          %v3488 = vpack.c.b16 %v3372, %v3370
          %v3489 = vpack.c.b16 %v3373, %v3371
          %v3490 = vpack.c.b16 %v3376, %v3374
          %v3491 = vpack.c.b16 %v3377, %v3375
          %v3492 = vpack.c.b16 %v3380, %v3378
          %v3493 = vpack.c.b16 %v3381, %v3379
          %v3494 = vpack.c.b16 %v3384, %v3382
          %v3495 = vpack.c.b16 %v3385, %v3383
          %v3496 = vpack.c.b16 %v3388, %v3386
          %v3497 = vpack.c.b16 %v3389, %v3387
          %v3498 = vpack.c.b16 %v3392, %v3390
          %v3499 = vpack.c.b16 %v3393, %v3391
          %v3500 = vpack.c.b16 %v3396, %v3394
          %v3501 = vpack.c.b16 %v3397, %v3395
          %v3502 = vpack.c.b16 %v3400, %v3398
          %v3503 = vpack.c.b16 %v3401, %v3399
          %v3504 = vpack.c.b16 %v3404, %v3402
          %v3505 = vpack.c.b16 %v3405, %v3403
          %v3506 = vpack.c.b16 %v3408, %v3406
          %v3507 = vpack.c.b16 %v3409, %v3407
          %v3508 = vpack.c.b16 %v3412, %v3410
          %v3509 = vpack.c.b16 %v3413, %v3411
          %v3510 = vpack.c.b16 %v3416, %v3414
          %v3511 = vpack.c.b16 %v3417, %v3415
          %v3512 = vpack.c.b16 %v3420, %v3418
          %v3513 = vpack.c.b16 %v3421, %v3419
          %v3514 = vpack.c.b16 %v3424, %v3422
          %v3515 = vpack.c.b16 %v3425, %v3423
          %v3516 = vpack.c.b16 %v3428, %v3426
          %v3517 = vpack.c.b16 %v3429, %v3427
          %v3518 = vpack.c.b16 %v3432, %v3430
          %v3519 = vpack.c.b16 %v3433, %v3431
          %v3520 = vpack.c.b16 %v3436, %v3434
          %v3521 = vpack.c.b16 %v3437, %v3435
          %v3522 = vpack.c.b16 %v3440, %v3438
          %v3523 = vpack.c.b16 %v3441, %v3439
          %v3524 = vpack.c.b16 %v3444, %v3442
          %v3525 = vpack.c.b16 %v3445, %v3443
          %v3526 = vpack.c.b16 %v3448, %v3446
          %v3527 = vpack.c.b16 %v3449, %v3447
          %v3528 = vpack.c.b16 %v3452, %v3450
          %v3529 = vpack.c.b16 %v3453, %v3451
          %v3530 = vpack.c.b16 %v3456, %v3454
          %v3531 = vpack.c.b16 %v3457, %v3455
          %v3532 = vpack.c.b16 %v3460, %v3458
          %v3533 = vpack.c.b16 %v3461, %v3459
          %v3534 = vpack.c.b16 %v3464, %v3462
          %v3535 = vpack.c.b16 %v3465, %v3463
          %v3536 = vpack.c.b16 %v3468, %v3466
          %v3537 = vpack.c.b16 %v3469, %v3467
          %v3538 = vpack.c.b16 %v3472, %v3470
          %v3539 = vpack.c.b16 %v3473, %v3471
          %v3540 = vpack.c.b16 %v3476, %v3474
          %v3541 = vpack.c.b16 %v3477, %v3475
          %v3607 = vperm.slane %v3285, 0
          %v3608 = vperm.slane %v3285, 1
          %3611 = vmatpush.bf16.msra.mxu0 %v3492
          %3612 = vmatpush.bf16.msra.mxu0 %v3490
          %3613 = vmatpush.bf16.msra.mxu0 %v3488
          %3614 = vmatpush.bf16.msra.mxu0 %v3486
          %3615 = vmatpush.bf16.msra.mxu0 %v3484
          %3616 = vmatpush.bf16.msra.mxu0 %v3482
          %3617 = vmatpush.bf16.msra.mxu0 %v3480
          %3618 = vmatpush.bf16.msra.mxu0 %v3478
          %3619 = vmatmul.bf16.gmra.mxu0 %v3217
          %v3620 = vpop.f32.mrf.mxu0
          %v3621 = vadd.f32 %v3607, %v3620
          %v3622 = vpop.f32.mrf.mxu0
          %3623 = vdwg.mxu0
          %3624 = vmatpush.bf16.msra.mxu0 %v3508
          %3625 = vmatpush.bf16.msra.mxu0 %v3506
          %3626 = vmatpush.bf16.msra.mxu0 %v3504
          %3627 = vmatpush.bf16.msra.mxu0 %v3502
          %3628 = vmatpush.bf16.msra.mxu0 %v3500
          %3629 = vmatpush.bf16.msra.mxu0 %v3498
          %3630 = vmatpush.bf16.msra.mxu0 %v3496
          %3631 = vmatpush.bf16.msra.mxu0 %v3494
          %3632 = vmatmul.bf16.gmra.mxu0 %v3218
          %v3633 = vpop.f32.mrf.mxu0
          %v3634 = vadd.f32 %v3621, %v3633
          %v3635 = vpop.f32.mrf.mxu0
          %3636 = vdwg.mxu0
          %3637 = vmatpush.bf16.msra.mxu0 %v3524
          %3638 = vmatpush.bf16.msra.mxu0 %v3522
          %3639 = vmatpush.bf16.msra.mxu0 %v3520
          %3640 = vmatpush.bf16.msra.mxu0 %v3518
          %3641 = vmatpush.bf16.msra.mxu0 %v3516
          %3642 = vmatpush.bf16.msra.mxu0 %v3514
          %3643 = vmatpush.bf16.msra.mxu0 %v3512
          %3644 = vmatpush.bf16.msra.mxu0 %v3510
          %3645 = vmatmul.bf16.gmra.mxu0 %v3219
          %v3646 = vpop.f32.mrf.mxu0
          %v3647 = vadd.f32 %v3634, %v3646
          %v3648 = vpop.f32.mrf.mxu0
          %3649 = vdwg.mxu0
          %3650 = vmatpush.bf16.msra.mxu0 %v3540
          %3651 = vmatpush.bf16.msra.mxu0 %v3538
          %3652 = vmatpush.bf16.msra.mxu0 %v3536
          %3653 = vmatpush.bf16.msra.mxu0 %v3534
          %3654 = vmatpush.bf16.msra.mxu0 %v3532
          %3655 = vmatpush.bf16.msra.mxu0 %v3530
          %3656 = vmatpush.bf16.msra.mxu0 %v3528
          %3657 = vmatpush.bf16.msra.mxu0 %v3526
          %3658 = vmatmul.bf16.gmra.mxu0 %v3220
          %v3659 = vpop.f32.mrf.mxu0
          %v3660 = vadd.f32 %v3647, %v3659
          %v3661 = vpop.f32.mrf.mxu0
          %3662 = vdwg.mxu0
          %3663 = vmatpush.bf16.msra.mxu0 %v3493
          %3664 = vmatpush.bf16.msra.mxu0 %v3491
          %3665 = vmatpush.bf16.msra.mxu0 %v3489
          %3666 = vmatpush.bf16.msra.mxu0 %v3487
          %3667 = vmatpush.bf16.msra.mxu0 %v3485
          %3668 = vmatpush.bf16.msra.mxu0 %v3483
          %3669 = vmatpush.bf16.msra.mxu0 %v3481
          %3670 = vmatpush.bf16.msra.mxu0 %v3479
          %3671 = vmatmul.bf16.gmra.mxu0 %v3217
          %v3672 = vpop.f32.mrf.mxu0
          %v3673 = vadd.f32 %v3608, %v3672
          %v3674 = vpop.f32.mrf.mxu0
          %3675 = vdwg.mxu0
          %3676 = vmatpush.bf16.msra.mxu0 %v3509
          %3677 = vmatpush.bf16.msra.mxu0 %v3507
          %3678 = vmatpush.bf16.msra.mxu0 %v3505
          %3679 = vmatpush.bf16.msra.mxu0 %v3503
          %3680 = vmatpush.bf16.msra.mxu0 %v3501
          %3681 = vmatpush.bf16.msra.mxu0 %v3499
          %3682 = vmatpush.bf16.msra.mxu0 %v3497
          %3683 = vmatpush.bf16.msra.mxu0 %v3495
          %3684 = vmatmul.bf16.gmra.mxu0 %v3218
          %v3685 = vpop.f32.mrf.mxu0
          %v3686 = vadd.f32 %v3673, %v3685
          %v3687 = vpop.f32.mrf.mxu0
          %3688 = vdwg.mxu0
          %3689 = vmatpush.bf16.msra.mxu0 %v3525
          %3690 = vmatpush.bf16.msra.mxu0 %v3523
          %3691 = vmatpush.bf16.msra.mxu0 %v3521
          %3692 = vmatpush.bf16.msra.mxu0 %v3519
          %3693 = vmatpush.bf16.msra.mxu0 %v3517
          %3694 = vmatpush.bf16.msra.mxu0 %v3515
          %3695 = vmatpush.bf16.msra.mxu0 %v3513
          %3696 = vmatpush.bf16.msra.mxu0 %v3511
          %3697 = vmatmul.bf16.gmra.mxu0 %v3219
          %v3698 = vpop.f32.mrf.mxu0
          %v3699 = vadd.f32 %v3686, %v3698
          %v3700 = vpop.f32.mrf.mxu0
          %3701 = vdwg.mxu0
          %3702 = vmatpush.bf16.msra.mxu0 %v3541
          %3703 = vmatpush.bf16.msra.mxu0 %v3539
          %3704 = vmatpush.bf16.msra.mxu0 %v3537
          %3705 = vmatpush.bf16.msra.mxu0 %v3535
          %3706 = vmatpush.bf16.msra.mxu0 %v3533
          %3707 = vmatpush.bf16.msra.mxu0 %v3531
          %3708 = vmatpush.bf16.msra.mxu0 %v3529
          %3709 = vmatpush.bf16.msra.mxu0 %v3527
          %3710 = vmatmul.bf16.gmra.mxu0 %v3220
          %v3711 = vpop.f32.mrf.mxu0
          %v3712 = vadd.f32 %v3699, %v3711
          %v3713 = vpop.f32.mrf.mxu0
          %3714 = vdwg.mxu0
          %v3715 = vmax.f32 %v3660, 0.0
          %v3716 = vmax.f32 %v3712, 0.0
          %v3717 = vpack.c.bf16 %v3715, %v3715
          %v3718 = vpack.c.bf16 %v3716, %v3716
          %v3719 = vld [vmem:[%s11] sm:$0xf]
          %v3720 = vld [vmem:[%s11 + $0x4] sm:$0xf]
          %v3721 = vld [vmem:[%s11 + $0x8] sm:$0xf]
          %v3722 = vld [vmem:[%s11 + $0xc] sm:$0xf]
          %v3723 = vld [vmem:[%s11 + $0x10] sm:$0xf]
          %v3724 = vld [vmem:[%s11 + $0x14] sm:$0xf]
          %v3725 = vld [vmem:[%s11 + $0x18] sm:$0xf]
          %v3726 = vld [vmem:[%s11 + $0x1c] sm:$0xf]
          %v3727 = vld [vmem:[%s11 + $0x20] sm:$0xf]
          %v3728 = vld [vmem:[%s11 + $0x24] sm:$0xf]
          %v3729 = vld [vmem:[%s11 + $0x28] sm:$0xf]
          %v3730 = vld [vmem:[%s11 + $0x2c] sm:$0xf]
          %v3731 = vld [vmem:[%s11 + $0x30] sm:$0xf]
          %v3732 = vld [vmem:[%s11 + $0x34] sm:$0xf]
          %v3733 = vld [vmem:[%s11 + $0x38] sm:$0xf]
          %v3734 = vld [vmem:[%s11 + $0x3c] sm:$0xf]
          %v3735 = vld [vmem:[%s11 + $0x40] sm:$0xf]
          %v3736 = vld [vmem:[%s11 + $0x44] sm:$0xf]
          %v3737 = vld [vmem:[%s11 + $0x48] sm:$0xf]
          %v3738 = vld [vmem:[%s11 + $0x4c] sm:$0xf]
          %v3739 = vld [vmem:[%s11 + $0x50] sm:$0xf]
          %v3740 = vld [vmem:[%s11 + $0x54] sm:$0xf]
          %v3741 = vld [vmem:[%s11 + $0x58] sm:$0xf]
          %v3742 = vld [vmem:[%s11 + $0x5c] sm:$0xf]
          %v3743 = vld [vmem:[%s11 + $0x60] sm:$0xf]
          %v3744 = vld [vmem:[%s11 + $0x64] sm:$0xf]
          %v3745 = vld [vmem:[%s11 + $0x68] sm:$0xf]
          %v3746 = vld [vmem:[%s11 + $0x6c] sm:$0xf]
          %v3747 = vld [vmem:[%s11 + $0x70] sm:$0xf]
          %v3748 = vld [vmem:[%s11 + $0x74] sm:$0xf]
          %v3749 = vld [vmem:[%s11 + $0x78] sm:$0xf]
          %v3750 = vld [vmem:[%s11 + $0x7c] sm:$0xf]
          %v3751 = vld [vmem:[%s12] sm:$0x1]
          %v3784 = vunpack.c.l.b16 %v3719
          %v3785 = vunpack.c.l.b16 %v3720
          %v3786 = vunpack.c.l.b16 %v3721
          %v3787 = vunpack.c.l.b16 %v3722
          %v3788 = vunpack.c.l.b16 %v3723
          %v3789 = vunpack.c.l.b16 %v3724
          %v3790 = vunpack.c.l.b16 %v3725
          %v3791 = vunpack.c.l.b16 %v3726
          %v3792 = vunpack.c.l.b16 %v3727
          %v3793 = vunpack.c.l.b16 %v3728
          %v3794 = vunpack.c.l.b16 %v3729
          %v3795 = vunpack.c.l.b16 %v3730
          %v3796 = vunpack.c.l.b16 %v3731
          %v3797 = vunpack.c.l.b16 %v3732
          %v3798 = vunpack.c.l.b16 %v3733
          %v3799 = vunpack.c.l.b16 %v3734
          %v3800 = vunpack.c.l.b16 %v3735
          %v3801 = vunpack.c.l.b16 %v3736
          %v3802 = vunpack.c.l.b16 %v3737
          %v3803 = vunpack.c.l.b16 %v3738
          %v3804 = vunpack.c.l.b16 %v3739
          %v3805 = vunpack.c.l.b16 %v3740
          %v3806 = vunpack.c.l.b16 %v3741
          %v3807 = vunpack.c.l.b16 %v3742
          %v3808 = vunpack.c.l.b16 %v3743
          %v3809 = vunpack.c.l.b16 %v3744
          %v3810 = vunpack.c.l.b16 %v3745
          %v3811 = vunpack.c.l.b16 %v3746
          %v3812 = vunpack.c.l.b16 %v3747
          %v3813 = vunpack.c.l.b16 %v3748
          %v3814 = vunpack.c.l.b16 %v3749
          %v3815 = vunpack.c.l.b16 %v3750
          %v3816 = vpack.c.b16 %v3785, %v3784
          %v3817 = vpack.c.b16 %v3787, %v3786
          %v3818 = vpack.c.b16 %v3789, %v3788
          %v3819 = vpack.c.b16 %v3791, %v3790
          %v3820 = vpack.c.b16 %v3793, %v3792
          %v3821 = vpack.c.b16 %v3795, %v3794
          %v3822 = vpack.c.b16 %v3797, %v3796
          %v3823 = vpack.c.b16 %v3799, %v3798
          %v3824 = vpack.c.b16 %v3801, %v3800
          %v3825 = vpack.c.b16 %v3803, %v3802
          %v3826 = vpack.c.b16 %v3805, %v3804
          %v3827 = vpack.c.b16 %v3807, %v3806
          %v3828 = vpack.c.b16 %v3809, %v3808
          %v3829 = vpack.c.b16 %v3811, %v3810
          %v3830 = vpack.c.b16 %v3813, %v3812
          %v3831 = vpack.c.b16 %v3815, %v3814
          %3848 = vmatpush.bf16.msra.mxu0 %v3823
          %3849 = vmatpush.bf16.msra.mxu0 %v3822
          %3850 = vmatpush.bf16.msra.mxu0 %v3821
          %3851 = vmatpush.bf16.msra.mxu0 %v3820
          %3852 = vmatpush.bf16.msra.mxu0 %v3819
          %3853 = vmatpush.bf16.msra.mxu0 %v3818
          %3854 = vmatpush.bf16.msra.mxu0 %v3817
          %3855 = vmatpush.bf16.msra.mxu0 %v3816
          %3856 = vmatmul.bf16.gmra.mxu0 %v3717
          %v3857 = vpop.f32.mrf.mxu0
          %v3858 = vadd.f32 %v3751, %v3857
          %v3859 = vpop.f32.mrf.mxu0
          %3860 = vdwg.mxu0
          %3861 = vmatpush.bf16.msra.mxu0 %v3831
          %3862 = vmatpush.bf16.msra.mxu0 %v3830
          %3863 = vmatpush.bf16.msra.mxu0 %v3829
          %3864 = vmatpush.bf16.msra.mxu0 %v3828
          %3865 = vmatpush.bf16.msra.mxu0 %v3827
          %3866 = vmatpush.bf16.msra.mxu0 %v3826
          %3867 = vmatpush.bf16.msra.mxu0 %v3825
          %3868 = vmatpush.bf16.msra.mxu0 %v3824
          %3869 = vmatmul.bf16.gmra.mxu0 %v3718
          %v3870 = vpop.f32.mrf.mxu0
          %v3871 = vadd.f32 %v3858, %v3870
          %v3872 = vpop.f32.mrf.mxu0
          %3873 = vdwg.mxu0
          %vm3874 = vcmask 65536
          %3875 = vst.msk [vmem:[%s505] sm:$0x1] %vm3874, %v3871
        $region92: #{tpu_custom_call.1} parent=71 // pred_fallthru
          _
        %s3876 = sand.u32 %s329, 1
        %s3877 = scalar_lea.sflag [#allocation5], %s3876
        %s3878 = sand.u32 %s329, 1
        %s3879 = scalar_lea.vmem [#allocation9], %s3878
        // Predicated region
        $region93: #{tpu_custom_call.1} parent=71 // pred_check
          %p3880 = pneg %p339
        $region94: #{tpu_custom_call.1} parent=71 // pred_check_branch
          %3882 = sbr.rel (%p3880) target = $region96
        $region95: #{tpu_custom_call.1} parent=71 // pred_region
          %3884 = vsyncadd %s3877, 0
          %s3885 = scalar_lea.hbm %s13, %s33
          %s3887 = sshll.u32 %s3879, 4
          %s3888 = int_to_ptr.vmem [resolvable:$true] %s3887
          %s3889 = sshll.u32 %s3885, 4
          %s3890 = int_to_ptr.hbm [resolvable:$true] %s3889
          %3892 = dma.vmem_to_hbm [thread:$0]  %s3888, 16, %s3890, %s3877
        $region96: #{tpu_custom_call.1} parent=71 // pred_fallthru
          _
      $region72: #{tpu_custom_call.1} parent=5 // pred_fallthru
        _
      %p3893 = scmp.le.s32.totalorder 2, %s24
      // Predicated region
      $region97: #{tpu_custom_call.1} parent=5 // pred_check
        %p3894 = pneg %p3893
      $region98: #{tpu_custom_call.1} parent=5 // pred_check_branch
        %3896 = sbr.rel (%p3894) target = $region100
      $region99: #{tpu_custom_call.1} parent=5 // pred_region
        %s3897 = ssub.s32 %s24, 2
        // Predicated region
        $region101: #{tpu_custom_call.1} parent=99 // pred_check
          %p3898 = pneg %p345
        $region102: #{tpu_custom_call.1} parent=99 // pred_check_branch
          %3900 = sbr.rel (%p3898) target = $region104
        $region103: #{tpu_custom_call.1} parent=99 // pred_region
          %s3901 = sand.u32 %s330, 1
          %s3902 = scalar_lea.sflag [#allocation5], %s3901
          %s3903 = sand.u32 %s330, 1
          %s3904 = scalar_lea.vmem [#allocation9], %s3903
          %3906 = dma.done %s3902, 16
        $region104: #{tpu_custom_call.1} parent=99 // pred_fallthru
          _
      $region100: #{tpu_custom_call.1} parent=5 // pred_fallthru
        _
    $region6: #{tpu_custom_call.1} parent=1 // loop_footer
      %s28 = sadd.s32 1, %s24
    $region7: #{tpu_custom_call.1} parent=1 // loop_footer_branch
      %23 = sbr.rel target = $region3
    $region8: #{tpu_custom_call.1} parent=1 // loop_exit
      _
    %3907 = vsyncpa [#allocation4], 1
    %s3908 = scalar_lea.sflag [#allocation4], 1
    %3909 = vsyncpa %s3908, 1
    %3910 = vsyncpa [#allocation7], 1
    %3911 = vsyncpa [#allocation5], 1
    %s3912 = scalar_lea.sflag [#allocation5], 1
    %3913 = vsyncpa %s3912, 1

</llo_original>
